<compile_context>
chip_gen: v7x
topology: tpu7x:2x2x1
jax: 0.10.0
libtpu: 0.0.40
codegen_flags: <defaults>
</compile_context>

<pallas_src>
import math
from types import SimpleNamespace

import jax
import jax.numpy as jnp
from jax.experimental import pallas as pl
from jax.experimental.pallas import tpu as pltpu

# Full f32 matmul passes everywhere (kernel + pure-JAX reference) so the
# correctness check below is meaningful.
jax.config.update("jax_default_matmul_precision", "highest")


# -----------------------------------------------------------------------------
# Pallas kernel: batched agent forward for R mask replicas sharing one entity set
# -----------------------------------------------------------------------------
def attention_ff_forward(params, entities, bias, cfg, *, max_tile_b=64):
    """fc1 -> fused QKV -> multi-head masked attention -> out_trans -> fc2.

    entities: (B0, NE, ED) f32   -- shared by all mask replicas
    bias:     (R, B0, NA, NE) f32 additive attention-logit bias:
                 0.0  -> visible entity
                -1e9  -> entity masked for this agent (obs mask)
                -2e9  -> whole agent row inactive (agent mask)
    returns   q (R, B0, NA, NACT) f32, h (R, B0, NA, H) f32
    """
    w1, b1, wqkv, wout, bout, w2, b2 = params
    B0, NE, ED = entities.shape
    R = bias.shape[0]
    NA = cfg.n_agents
    H = cfg.attn_embed_dim
    NH = cfg.attn_n_heads
    HD = H // NH
    NACT = cfg.n_actions

    # Batch tile; pad B0 up to a multiple of TB (padded rows are unmasked junk
    # that is sliced away afterwards -- everything stays finite).
    TB = min(max_tile_b, B0)
    Bp = ((B0 + TB - 1) // TB) * TB
    if Bp != B0:
        entities = jnp.concatenate(
            [entities, jnp.zeros((Bp - B0, NE, ED), entities.dtype)], axis=0)
        bias = jnp.concatenate(
            [bias, jnp.zeros((R, Bp - B0, NA, NE), bias.dtype)], axis=1)
    ent2d = entities.reshape(Bp * NE, ED)   # folded (batch * entity) rows

    def kernel(ent_ref, bias_ref, w1_ref, b1_ref, wqkv_ref, wout_ref, bout_ref,
               w2_ref, b2_ref, q_ref, h_ref):
        # ---- fc1 + relu over all TB*NE entity rows (one folded-M matmul) ----
        x1 = jnp.maximum(
            jnp.dot(ent_ref[...], w1_ref[...],
                    preferred_element_type=jnp.float32) + b1_ref[...], 0.0)

        # ---- fused QKV projection (Q block pre-scaled by 1/sqrt(HD)) --------
        # NOTE: Q is projected for all NE rows and the agent rows are taken
        # afterwards (the module assumes the first NA entities are the agents;
        # with NE > NA one would slice the agent rows before projecting).
        qkv = jnp.dot(x1, wqkv_ref[...], preferred_element_type=jnp.float32)
        q3 = qkv[:, 0 * H:1 * H].reshape(TB, NE, H)[:, :NA, :]   # (TB, NA, H)
        k3 = qkv[:, 1 * H:2 * H].reshape(TB, NE, H)              # (TB, NE, H)
        v3 = qkv[:, 2 * H:3 * H].reshape(TB, NE, H)              # (TB, NE, H)

        bias_t = bias_ref[0]                                     # (TB, NA, NE)
        rowmax = jnp.max(bias_t, axis=-1, keepdims=True)         # (TB, NA, 1)
        valid = rowmax > -5e8      # agent sees at least one entity
        active = rowmax > -1.5e9   # agent row is active (not agent-masked)

        # ---- multi-head attention on the VPU (agents/entities/head_dim are
        #      all tiny, so no per-element MXU contractions) ------------------
        head_outs = []
        for hh in range(NH):
            lo = hh * HD
            qh = q3[:, :, lo:lo + HD]                            # (TB, NA, HD)
            kh = k3[:, :, lo:lo + HD]                            # (TB, NE, HD)
            vh = v3[:, :, lo:lo + HD]                            # (TB, NE, HD)
            # logits[b, i, j] = <qh[b, i, :], kh[b, j, :]>  (scale pre-folded)
            cols = []
            for j in range(NE):                                  # static unroll
                kj = kh[:, j:j + 1, :]                           # (TB, 1, HD)
                cols.append(jnp.sum(qh * kj, axis=-1, keepdims=True))
            logits = jnp.concatenate(cols, axis=-1) + bias_t     # (TB, NA, NE)
            m = jnp.max(logits, axis=-1, keepdims=True)
            e = jnp.exp(logits - m)
            s = jnp.sum(e, axis=-1, keepdims=True)
            w = e * pl.reciprocal(s, approx=True)
            w = jnp.where(valid, w, 0.0)   # fully-masked rows -> zero weights
            # head_out[b, i, :] = sum_j w[b, i, j] * vh[b, j, :]
            out_h = w[:, :, 0:1] * vh[:, 0:1, :]
            for j in range(1, NE):
                out_h = out_h + w[:, :, j:j + 1] * vh[:, j:j + 1, :]
            head_outs.append(out_h)                              # (TB, NA, HD)

        # ---- out_trans over all heads at once, post-mask, relu, fc2 ---------
        attn2 = jnp.concatenate(head_outs, axis=-1).reshape(TB * NA, H)
        o2 = jnp.dot(attn2, wout_ref[...],
                     preferred_element_type=jnp.float32) + bout_ref[...]
        x2 = jnp.where(active, jnp.maximum(o2.reshape(TB, NA, H), 0.0), 0.0)
        h_ref[0] = x2
        qv = jnp.dot(x2.reshape(TB * NA, H), w2_ref[...],
                     preferred_element_type=jnp.float32) + b2_ref[...]
        q_ref[0] = jnp.where(active, qv.reshape(TB, NA, NACT), 0.0)

    const2 = lambda b, r: (0, 0)
    q4, h4 = pl.pallas_call(
        kernel,
        out_shape=[jax.ShapeDtypeStruct((R, Bp, NA, NACT), jnp.float32),
                   jax.ShapeDtypeStruct((R, Bp, NA, H), jnp.float32)],
        grid=(Bp // TB, R),
        in_specs=[
            # entities: the index map ignores the replica axis, so the block
            # stays resident across the R replica iterations (no re-DMA, no
            # host-side 3x replication of entities).
            pl.BlockSpec((TB * NE, ED), lambda b, r: (b, 0)),
            pl.BlockSpec((1, TB, NA, NE), lambda b, r: (r, b, 0, 0)),
            pl.BlockSpec((ED, H), const2),
            pl.BlockSpec((1, H), const2),
            pl.BlockSpec((H, 3 * H), const2),
            pl.BlockSpec((H, H), const2),
            pl.BlockSpec((1, H), const2),
            pl.BlockSpec((H, NACT), const2),
            pl.BlockSpec((1, NACT), const2),
        ],
        out_specs=[
            pl.BlockSpec((1, TB, NA, NACT), lambda b, r: (r, b, 0, 0)),
            pl.BlockSpec((1, TB, NA, H), lambda b, r: (r, b, 0, 0)),
        ],
        compiler_params=pltpu.CompilerParams(
            dimension_semantics=("parallel", "arbitrary")),
    )(ent2d, bias, w1, b1, wqkv, wout, bout, w2, b2)
    return q4[:, :B0], h4[:, :B0]


# -----------------------------------------------------------------------------
# Plain-JAX glue reproducing the PyTorch module's mask / reshape logic
# -----------------------------------------------------------------------------
def logical_not(x):
    return 1 - x


def logical_or(a, b):
    return jnp.minimum(a + b, 1)


def entitymask2attnmask(entity_mask, n_agents):
    bs, ts, ne = entity_mask.shape
    agent_mask = entity_mask[:, :, :n_agents]
    in1 = (1 - agent_mask.astype(jnp.float32)).reshape(bs * ts, n_agents, 1)
    in2 = (1 - entity_mask.astype(jnp.float32)).reshape(bs * ts, 1, ne)
    attn_mask = 1 - jnp.einsum('bij,bjk->bik', in1, in2)
    return attn_mask.reshape(bs, ts, n_agents, ne).astype(jnp.int32)


def build_bias(pre_masks, agent_mask):
    """pre_masks: (R, B0, NA, NE) in {0,1}; agent_mask: (B0, NA) in {0,1}."""
    bias = pre_masks.astype(jnp.float32) * (-1e9)
    return jnp.where(agent_mask[None, :, :, None] > 0, -2e9, bias)


def base_forward(params, cfg, entities, obs_mask, entity_mask):
    """EntityAttentionFFAgent.forward (imagine=False)."""
    bs, ts, ne, ed = entities.shape
    na = cfg.n_agents
    B0 = bs * ts
    ent_flat = entities.reshape(B0, ne, ed).astype(jnp.float32)
    agent_mask = entity_mask.reshape(B0, ne)[:, :na]
    pre = obs_mask.reshape(B0, ne, ne)[:, :na, :][None]          # (1, B0, na, ne)
    bias = build_bias(pre, agent_mask)
    q4, h4 = attention_ff_forward(params, ent_flat, bias, cfg)
    q = q4[0].reshape(bs, ts, na, cfg.n_actions)
    return q, h4[0]


def imagine_forward(params, cfg, entities, obs_mask, entity_mask, hidden_state, key):
    """ImagineEntityAttentionFFAgent.forward(imagine=True), random-group path."""
    bs, ts, ne, ed = entities.shape
    na = cfg.n_agents
    del hidden_state  # FF agent: hidden state unused
    k1, k2 = jax.random.split(key)
    # NOTE: randomness mirrors th.rand / th.bernoulli semantics (not bit-exact).
    groupA_probs = jnp.tile(jax.random.uniform(k1, (bs, 1, 1)), (1, 1, ne))
    em0 = entity_mask[:, 0:1].astype(jnp.int32)
    activeattnmask = entitymask2attnmask(em0, na)
    groupA = jax.random.bernoulli(k2, groupA_probs).astype(jnp.int32)
    groupB = logical_not(groupA)
    groupA = logical_or(groupA, em0)
    groupB = logical_or(groupB, em0)
    groupAattn = entitymask2attnmask(groupA, na)
    groupBattn = entitymask2attnmask(groupB, na)
    interact = logical_or(logical_not(groupAattn), logical_not(groupBattn))
    within = logical_not(interact)
    W_noobs = logical_or(within, activeattnmask)
    I_noobs = logical_or(interact, activeattnmask)
    obs_i = obs_mask.astype(jnp.int32)
    within = logical_or(within, obs_i)       # broadcast requires n_agents == ne
    interact = logical_or(interact, obs_i)   # (same restriction as the torch module)

    B0 = bs * ts
    ent_flat = entities.reshape(B0, ne, ed).astype(jnp.float32)
    agent_mask = entity_mask.reshape(B0, ne)[:, :na]
    # Three mask replicas share the SAME entities: no 3x replication in HBM.
    pre = jnp.stack([
        obs_i.reshape(B0, ne, ne)[:, :na, :],
        within.reshape(B0, ne, ne)[:, :na, :],
        interact.reshape(B0, ne, ne)[:, :na, :],
    ], axis=0)                                                   # (3, B0, na, ne)
    bias = build_bias(pre, agent_mask)

    q4, h4 = attention_ff_forward(params, ent_flat, bias, cfg)
    q = q4.reshape(3 * bs, ts, na, cfg.n_actions)                # replica-major, as torch repeat
    h = h4.reshape(3 * B0, na, cfg.attn_embed_dim)
    return q, h, (jnp.tile(W_noobs, (1, ts, 1, 1)), jnp.tile(I_noobs, (1, ts, 1, 1)))


# -----------------------------------------------------------------------------
# Pure-JAX reference of the flat core (for correctness check of the kernel)
# -----------------------------------------------------------------------------
def reference_forward(raw_params, entities, pre_masks, agent_mask, cfg):
    w1, b1, win, wout, bout, w2, b2 = raw_params
    NA, H, NH = cfg.n_agents, cfg.attn_embed_dim, cfg.attn_n_heads
    HD = H // NH
    B0, NE, _ = entities.shape
    R = pre_masks.shape[0]
    x1 = jax.nn.relu(entities @ w1 + b1)                         # (B0, NE, H)
    qkv = x1 @ win                                               # (B0, NE, 3H)
    q = qkv[:, :NA, 0:H]
    k = qkv[:, :, H:2 * H]
    v = qkv[:, :, 2 * H:3 * H]
    qh = q.reshape(B0, NA, NH, HD).transpose(0, 2, 1, 3)
    kh = k.reshape(B0, NE, NH, HD).transpose(0, 2, 1, 3)
    vh = v.reshape(B0, NE, NH, HD).transpose(0, 2, 1, 3)
    logits = jnp.einsum('bhqd,bhkd->bhqk', qh, kh) / math.sqrt(HD)
    logits = jnp.where(pre_masks[:, :, None, :, :] > 0, -jnp.inf, logits[None])
    m = jnp.max(logits, axis=-1, keepdims=True)
    e = jnp.exp(logits - m)
    w = e / jnp.sum(e, axis=-1, keepdims=True)
    w = jnp.where(jnp.isnan(w), 0.0, w)                          # fully-masked rows
    out = jnp.einsum('rbhqk,bhkd->rbhqd', w, vh)
    out = out.transpose(0, 1, 3, 2, 4).reshape(R, B0, NA, H)
    out = out @ wout + bout
    out = jnp.where(agent_mask[None, :, :, None] > 0, 0.0, out)
    x2 = jax.nn.relu(out)
    qq = x2 @ w2 + b2
    qq = jnp.where(agent_mask[None, :, :, None] > 0, 0.0, qq)
    return qq, x2


# -----------------------------------------------------------------------------
# Deterministic parameter construction
# -----------------------------------------------------------------------------
def init_linear(key, fan_in, fan_out, bias=True):
    kw, kb = jax.random.split(key)
    bound = 1.0 / math.sqrt(fan_in)
    w = jax.random.uniform(kw, (fan_in, fan_out), jnp.float32, -bound, bound)
    b = jax.random.uniform(kb, (1, fan_out), jnp.float32, -bound, bound) if bias else None
    return w, b


def make_params(cfg, input_shape, key):
    H, NH = cfg.attn_embed_dim, cfg.attn_n_heads
    HD = H // NH
    k1, k2, k3, k4 = jax.random.split(key, 4)
    w1, b1 = init_linear(k1, input_shape, H)
    win, _ = init_linear(k2, H, 3 * H, bias=False)     # in_trans (no bias)
    wout, bout = init_linear(k3, H, H)                 # out_trans
    w2, b2 = init_linear(k4, H, cfg.n_actions)
    # Fused QKV weight with the 1/sqrt(head_dim) softmax scale folded into Q.
    wqkv = jnp.concatenate(
        [win[:, 0:H] / math.sqrt(HD), win[:, H:2 * H], win[:, 2 * H:3 * H]], axis=1)
    kernel_params = (w1, b1, wqkv, wout, bout, w2, b2)
    raw_params = (w1, b1, win, wout, bout, w2, b2)
    return kernel_params, raw_params


# -----------------------------------------------------------------------------
if __name__ == "__main__":
    # NOTE: the torch imagine-path broadcast (within | obs_mask) requires
    # n_agents == n_entities, as in the original module.
    cfg = SimpleNamespace(
        n_agents=8, n_actions=16, attn_embed_dim=32, attn_n_heads=4,
        rnn_hidden_dim=32, pooling_type=None, gt_obs_mask=False,
    )
    bs, ts, ne, ed = 2, 2, 8, 32   # entity feature dim = 32

    root = jax.random.PRNGKey(0)
    kp, ke, kom, kem, kimg = jax.random.split(root, 5)
    kernel_params, raw_params = make_params(cfg, ed, kp)

    entities = jax.random.normal(ke, (bs, ts, ne, ed), jnp.float32)
    obs_mask = jax.random.bernoulli(kom, 0.3, (bs, ts, ne, ne)).astype(jnp.int32)
    entity_mask = jax.random.bernoulli(kem, 0.2, (bs, ts, ne)).astype(jnp.int32)
    hidden_state = jnp.zeros((bs, cfg.n_agents, cfg.rnn_hidden_dim), jnp.float32)

    # Full imagine forward (Pallas kernel inside; 3 mask replicas, shared entities).
    q, h, (w_noobs, i_noobs) = imagine_forward(
        kernel_params, cfg, entities, obs_mask, entity_mask, hidden_state, kimg)
    jax.block_until_ready((q, h, w_noobs, i_noobs))
    assert q.shape == (3 * bs, ts, cfg.n_agents, cfg.n_actions)
    assert h.shape == (3 * bs * ts, cfg.n_agents, cfg.attn_embed_dim)

    # Correctness check of the Pallas core against a pure-JAX reference, on a
    # batch that exercises batch tiling + tail padding (B0=40 -> Bp=48, TB=16).
    B0, R = 40, 3
    kc1, kc2, kc3 = jax.random.split(jax.random.PRNGKey(7), 3)
    ent_chk = jax.random.normal(kc1, (B0, ne, ed), jnp.float32)
    pre_chk = jax.random.bernoulli(kc2, 0.4, (R, B0, cfg.n_agents, ne)).astype(jnp.float32)
    ag_chk = jax.random.bernoulli(kc3, 0.2, (B0, cfg.n_agents)).astype(jnp.float32)
    bias_chk = build_bias(pre_chk, ag_chk)
    q_k, h_k = attention_ff_forward(kernel_params, ent_chk, bias_chk, cfg, max_tile_b=16)
    q_r, h_r = reference_forward(raw_params, ent_chk, pre_chk, ag_chk, cfg)
    assert bool(jnp.allclose(q_k, q_r, atol=1e-2, rtol=1e-2)), "q mismatch"
    assert bool(jnp.allclose(h_k, h_r, atol=1e-2, rtol=1e-2)), "h mismatch"

    print("KERNEL_OK")
</pallas_src>

<mosaic_0001>
module attributes {stable_mosaic.version = 11 : i64} {
  func.func @kernel(%arg0: i32, %arg1: i32, %arg2: memref<32x32xf32, #tpu.memory_space<vmem>>, %arg3: memref<1x4x8x8xf32, #tpu.memory_space<vmem>>, %arg4: memref<32x32xf32, #tpu.memory_space<vmem>>, %arg5: memref<1x32xf32, #tpu.memory_space<vmem>>, %arg6: memref<32x96xf32, #tpu.memory_space<vmem>>, %arg7: memref<32x32xf32, #tpu.memory_space<vmem>>, %arg8: memref<1x32xf32, #tpu.memory_space<vmem>>, %arg9: memref<32x16xf32, #tpu.memory_space<vmem>>, %arg10: memref<1x16xf32, #tpu.memory_space<vmem>>, %arg11: memref<1x4x8x16xf32, #tpu.memory_space<vmem>>, %arg12: memref<1x4x8x32xf32, #tpu.memory_space<vmem>>) attributes {dimension_semantics = [#tpu.dimension_semantics<parallel>, #tpu.dimension_semantics<arbitrary>], iteration_bounds = array<i64: 1, 3>, scalar_prefetch = 0 : i64, scratch_operands = 0 : i64, tpu.core_type = #tpu.core_type<tc>, window_params = [{transform_indices = @transform_0, window_bounds = array<i64: 32, 32>}, {transform_indices = @transform_1, window_bounds = array<i64: 1, 4, 8, 8>}, {pipeline_mode = #tpu.pipeline_mode<synchronous>, transform_indices = @transform_2, window_bounds = array<i64: 32, 32>}, {pipeline_mode = #tpu.pipeline_mode<synchronous>, transform_indices = @transform_3, window_bounds = array<i64: 1, 32>}, {pipeline_mode = #tpu.pipeline_mode<synchronous>, transform_indices = @transform_4, window_bounds = array<i64: 32, 96>}, {pipeline_mode = #tpu.pipeline_mode<synchronous>, transform_indices = @transform_5, window_bounds = array<i64: 32, 32>}, {pipeline_mode = #tpu.pipeline_mode<synchronous>, transform_indices = @transform_6, window_bounds = array<i64: 1, 32>}, {pipeline_mode = #tpu.pipeline_mode<synchronous>, transform_indices = @transform_7, window_bounds = array<i64: 32, 16>}, {pipeline_mode = #tpu.pipeline_mode<synchronous>, transform_indices = @transform_8, window_bounds = array<i64: 1, 16>}, {transform_indices = @transform_9, window_bounds = array<i64: 1, 4, 8, 16>}, {transform_indices = @transform_10, window_bounds = array<i64: 1, 4, 8, 32>}]} {
    %c0 = arith.constant 0 : index
    %c0_0 = arith.constant 0 : index
    %0 = vector.load %arg2[%c0, %c0_0] : memref<32x32xf32, #tpu.memory_space<vmem>>, vector<32x32xf32>
    %c0_1 = arith.constant 0 : index
    %c0_2 = arith.constant 0 : index
    %1 = vector.load %arg4[%c0_1, %c0_2] : memref<32x32xf32, #tpu.memory_space<vmem>>, vector<32x32xf32>
    %cst = arith.constant dense<0.000000e+00> : vector<32x32xf32>
    %2 = tpu.matmul %0, %1, %cst {dimension_numbers = #tpu.dot_dimension_numbers<[1], [0], [0], [1], [0, 0, 1, 1], [], []>, precision = #tpu.contract_precision<fp32>} : vector<32x32xf32>, vector<32x32xf32>, vector<32x32xf32> -> vector<32x32xf32>
    %c0_3 = arith.constant 0 : index
    %c0_4 = arith.constant 0 : index
    %3 = vector.load %arg5[%c0_3, %c0_4] : memref<1x32xf32, #tpu.memory_space<vmem>>, vector<1x32xf32>
    %4 = vector.broadcast %3 : vector<1x32xf32> to vector<32x32xf32>
    %5 = arith.addf %2, %4 : vector<32x32xf32>
    %cst_5 = arith.constant 0.000000e+00 : f32
    %6 = vector.broadcast %cst_5 : f32 to vector<32x32xf32>
    %7 = arith.maximumf %5, %6 : vector<32x32xf32>
    %c0_6 = arith.constant 0 : index
    %c0_7 = arith.constant 0 : index
    %8 = vector.load %arg6[%c0_6, %c0_7] : memref<32x96xf32, #tpu.memory_space<vmem>>, vector<32x96xf32>
    %cst_8 = arith.constant dense<0.000000e+00> : vector<32x96xf32>
    %9 = tpu.matmul %7, %8, %cst_8 {dimension_numbers = #tpu.dot_dimension_numbers<[1], [0], [0], [1], [0, 0, 1, 1], [], []>, precision = #tpu.contract_precision<fp32>} : vector<32x32xf32>, vector<32x96xf32>, vector<32x96xf32> -> vector<32x96xf32>
    %10 = vector.extract_strided_slice %9 {offsets = [0, 0], sizes = [32, 32], strides = [1, 1]} : vector<32x96xf32> to vector<32x32xf32>
    %11 = vector.shape_cast %10 : vector<32x32xf32> to vector<4x8x32xf32>
    %12 = vector.extract_strided_slice %9 {offsets = [0, 32], sizes = [32, 32], strides = [1, 1]} : vector<32x96xf32> to vector<32x32xf32>
    %13 = vector.shape_cast %12 : vector<32x32xf32> to vector<4x8x32xf32>
    %14 = vector.extract_strided_slice %9 {offsets = [0, 64], sizes = [32, 32], strides = [1, 1]} : vector<32x96xf32> to vector<32x32xf32>
    %15 = vector.shape_cast %14 : vector<32x32xf32> to vector<4x8x32xf32>
    %c0_9 = arith.constant 0 : index
    %c0_10 = arith.constant 0 : index
    %c0_11 = arith.constant 0 : index
    %c0_12 = arith.constant 0 : index
    %16 = vector.load %arg3[%c0_9, %c0_10, %c0_11, %c0_12] : memref<1x4x8x8xf32, #tpu.memory_space<vmem>>, vector<1x4x8x8xf32>
    %17 = vector.shape_cast %16 : vector<1x4x8x8xf32> to vector<4x8x8xf32>
    %cst_13 = arith.constant dense<0xFF800000> : vector<4x8xf32>
    %18 = vector.multi_reduction <maximumf>, %17, %cst_13 [2] : vector<4x8x8xf32> to vector<4x8xf32>
    %19 = vector.shape_cast %18 : vector<4x8xf32> to vector<4x8x1xf32>
    %cst_14 = arith.constant -5.000000e+08 : f32
    %20 = vector.broadcast %cst_14 : f32 to vector<4x8x1xf32>
    %21 = arith.cmpf ogt, %19, %20 : vector<4x8x1xf32>
    %cst_15 = arith.constant -1.500000e+09 : f32
    %22 = vector.broadcast %cst_15 : f32 to vector<4x8x1xf32>
    %23 = arith.cmpf ogt, %19, %22 : vector<4x8x1xf32>
    %24 = vector.extract_strided_slice %11 {offsets = [0, 0, 0], sizes = [4, 8, 8], strides = [1, 1, 1]} : vector<4x8x32xf32> to vector<4x8x8xf32>
    %25 = vector.extract_strided_slice %13 {offsets = [0, 0, 0], sizes = [4, 8, 8], strides = [1, 1, 1]} : vector<4x8x32xf32> to vector<4x8x8xf32>
    %26 = vector.extract_strided_slice %15 {offsets = [0, 0, 0], sizes = [4, 8, 8], strides = [1, 1, 1]} : vector<4x8x32xf32> to vector<4x8x8xf32>
    %27 = vector.extract_strided_slice %25 {offsets = [0, 0, 0], sizes = [4, 1, 8], strides = [1, 1, 1]} : vector<4x8x8xf32> to vector<4x1x8xf32>
    %28 = vector.broadcast %27 : vector<4x1x8xf32> to vector<4x8x8xf32>
    %29 = arith.mulf %24, %28 : vector<4x8x8xf32>
    %cst_16 = arith.constant dense<0.000000e+00> : vector<4x8xf32>
    %30 = vector.multi_reduction <add>, %29, %cst_16 [2] : vector<4x8x8xf32> to vector<4x8xf32>
    %31 = vector.shape_cast %30 : vector<4x8xf32> to vector<4x8x1xf32>
    %32 = vector.extract_strided_slice %25 {offsets = [0, 1, 0], sizes = [4, 1, 8], strides = [1, 1, 1]} : vector<4x8x8xf32> to vector<4x1x8xf32>
    %33 = vector.broadcast %32 : vector<4x1x8xf32> to vector<4x8x8xf32>
    %34 = arith.mulf %24, %33 : vector<4x8x8xf32>
    %cst_17 = arith.constant dense<0.000000e+00> : vector<4x8xf32>
    %35 = vector.multi_reduction <add>, %34, %cst_17 [2] : vector<4x8x8xf32> to vector<4x8xf32>
    %36 = vector.shape_cast %35 : vector<4x8xf32> to vector<4x8x1xf32>
    %37 = vector.extract_strided_slice %25 {offsets = [0, 2, 0], sizes = [4, 1, 8], strides = [1, 1, 1]} : vector<4x8x8xf32> to vector<4x1x8xf32>
    %38 = vector.broadcast %37 : vector<4x1x8xf32> to vector<4x8x8xf32>
    %39 = arith.mulf %24, %38 : vector<4x8x8xf32>
    %cst_18 = arith.constant dense<0.000000e+00> : vector<4x8xf32>
    %40 = vector.multi_reduction <add>, %39, %cst_18 [2] : vector<4x8x8xf32> to vector<4x8xf32>
    %41 = vector.shape_cast %40 : vector<4x8xf32> to vector<4x8x1xf32>
    %42 = vector.extract_strided_slice %25 {offsets = [0, 3, 0], sizes = [4, 1, 8], strides = [1, 1, 1]} : vector<4x8x8xf32> to vector<4x1x8xf32>
    %43 = vector.broadcast %42 : vector<4x1x8xf32> to vector<4x8x8xf32>
    %44 = arith.mulf %24, %43 : vector<4x8x8xf32>
    %cst_19 = arith.constant dense<0.000000e+00> : vector<4x8xf32>
    %45 = vector.multi_reduction <add>, %44, %cst_19 [2] : vector<4x8x8xf32> to vector<4x8xf32>
    %46 = vector.shape_cast %45 : vector<4x8xf32> to vector<4x8x1xf32>
    %47 = vector.extract_strided_slice %25 {offsets = [0, 4, 0], sizes = [4, 1, 8], strides = [1, 1, 1]} : vector<4x8x8xf32> to vector<4x1x8xf32>
    %48 = vector.broadcast %47 : vector<4x1x8xf32> to vector<4x8x8xf32>
    %49 = arith.mulf %24, %48 : vector<4x8x8xf32>
    %cst_20 = arith.constant dense<0.000000e+00> : vector<4x8xf32>
    %50 = vector.multi_reduction <add>, %49, %cst_20 [2] : vector<4x8x8xf32> to vector<4x8xf32>
    %51 = vector.shape_cast %50 : vector<4x8xf32> to vector<4x8x1xf32>
    %52 = vector.extract_strided_slice %25 {offsets = [0, 5, 0], sizes = [4, 1, 8], strides = [1, 1, 1]} : vector<4x8x8xf32> to vector<4x1x8xf32>
    %53 = vector.broadcast %52 : vector<4x1x8xf32> to vector<4x8x8xf32>
    %54 = arith.mulf %24, %53 : vector<4x8x8xf32>
    %cst_21 = arith.constant dense<0.000000e+00> : vector<4x8xf32>
    %55 = vector.multi_reduction <add>, %54, %cst_21 [2] : vector<4x8x8xf32> to vector<4x8xf32>
    %56 = vector.shape_cast %55 : vector<4x8xf32> to vector<4x8x1xf32>
    %57 = vector.extract_strided_slice %25 {offsets = [0, 6, 0], sizes = [4, 1, 8], strides = [1, 1, 1]} : vector<4x8x8xf32> to vector<4x1x8xf32>
    %58 = vector.broadcast %57 : vector<4x1x8xf32> to vector<4x8x8xf32>
    %59 = arith.mulf %24, %58 : vector<4x8x8xf32>
    %cst_22 = arith.constant dense<0.000000e+00> : vector<4x8xf32>
    %60 = vector.multi_reduction <add>, %59, %cst_22 [2] : vector<4x8x8xf32> to vector<4x8xf32>
    %61 = vector.shape_cast %60 : vector<4x8xf32> to vector<4x8x1xf32>
    %62 = vector.extract_strided_slice %25 {offsets = [0, 7, 0], sizes = [4, 1, 8], strides = [1, 1, 1]} : vector<4x8x8xf32> to vector<4x1x8xf32>
    %63 = vector.broadcast %62 : vector<4x1x8xf32> to vector<4x8x8xf32>
    %64 = arith.mulf %24, %63 : vector<4x8x8xf32>
    %cst_23 = arith.constant dense<0.000000e+00> : vector<4x8xf32>
    %65 = vector.multi_reduction <add>, %64, %cst_23 [2] : vector<4x8x8xf32> to vector<4x8xf32>
    %66 = vector.shape_cast %65 : vector<4x8xf32> to vector<4x8x1xf32>
    %67 = tpu.concatenate %31, %36, %41, %46, %51, %56, %61, %66 in 2 : vector<4x8x1xf32>, vector<4x8x1xf32>, vector<4x8x1xf32>, vector<4x8x1xf32>, vector<4x8x1xf32>, vector<4x8x1xf32>, vector<4x8x1xf32>, vector<4x8x1xf32> -> vector<4x8x8xf32>
    %68 = arith.addf %67, %17 : vector<4x8x8xf32>
    %cst_24 = arith.constant dense<0xFF800000> : vector<4x8xf32>
    %69 = vector.multi_reduction <maximumf>, %68, %cst_24 [2] : vector<4x8x8xf32> to vector<4x8xf32>
    %70 = vector.shape_cast %69 : vector<4x8xf32> to vector<4x8x1xf32>
    %71 = vector.broadcast %70 : vector<4x8x1xf32> to vector<4x8x8xf32>
    %72 = arith.subf %68, %71 : vector<4x8x8xf32>
    %73 = math.exp %72 : vector<4x8x8xf32>
    %cst_25 = arith.constant dense<0.000000e+00> : vector<4x8xf32>
    %74 = vector.multi_reduction <add>, %73, %cst_25 [2] : vector<4x8x8xf32> to vector<4x8xf32>
    %75 = vector.shape_cast %74 : vector<4x8xf32> to vector<4x8x1xf32>
    %76 = tpu.reciprocal %75 {approx = true} : vector<4x8x1xf32> -> vector<4x8x1xf32>
    %77 = vector.broadcast %76 : vector<4x8x1xf32> to vector<4x8x8xf32>
    %78 = arith.mulf %73, %77 : vector<4x8x8xf32>
    %cst_26 = arith.constant 0.000000e+00 : f32
    %79 = vector.shape_cast %21 : vector<4x8x1xi1> to vector<4x8x1xi1>
    %80 = vector.broadcast %79 : vector<4x8x1xi1> to vector<4x8x8xi1>
    %81 = vector.broadcast %cst_26 : f32 to vector<4x8x8xf32>
    %82 = arith.select %80, %78, %81 : vector<4x8x8xi1>, vector<4x8x8xf32>
    %83 = vector.extract_strided_slice %82 {offsets = [0, 0, 0], sizes = [4, 8, 1], strides = [1, 1, 1]} : vector<4x8x8xf32> to vector<4x8x1xf32>
    %84 = vector.extract_strided_slice %26 {offsets = [0, 0, 0], sizes = [4, 1, 8], strides = [1, 1, 1]} : vector<4x8x8xf32> to vector<4x1x8xf32>
    %85 = vector.broadcast %83 : vector<4x8x1xf32> to vector<4x8x8xf32>
    %86 = vector.broadcast %84 : vector<4x1x8xf32> to vector<4x8x8xf32>
    %87 = arith.mulf %85, %86 : vector<4x8x8xf32>
    %88 = vector.extract_strided_slice %82 {offsets = [0, 0, 1], sizes = [4, 8, 1], strides = [1, 1, 1]} : vector<4x8x8xf32> to vector<4x8x1xf32>
    %89 = vector.extract_strided_slice %26 {offsets = [0, 1, 0], sizes = [4, 1, 8], strides = [1, 1, 1]} : vector<4x8x8xf32> to vector<4x1x8xf32>
    %90 = vector.broadcast %88 : vector<4x8x1xf32> to vector<4x8x8xf32>
    %91 = vector.broadcast %89 : vector<4x1x8xf32> to vector<4x8x8xf32>
    %92 = arith.mulf %90, %91 : vector<4x8x8xf32>
    %93 = arith.addf %87, %92 : vector<4x8x8xf32>
    %94 = vector.extract_strided_slice %82 {offsets = [0, 0, 2], sizes = [4, 8, 1], strides = [1, 1, 1]} : vector<4x8x8xf32> to vector<4x8x1xf32>
    %95 = vector.extract_strided_slice %26 {offsets = [0, 2, 0], sizes = [4, 1, 8], strides = [1, 1, 1]} : vector<4x8x8xf32> to vector<4x1x8xf32>
    %96 = vector.broadcast %94 : vector<4x8x1xf32> to vector<4x8x8xf32>
    %97 = vector.broadcast %95 : vector<4x1x8xf32> to vector<4x8x8xf32>
    %98 = arith.mulf %96, %97 : vector<4x8x8xf32>
    %99 = arith.addf %93, %98 : vector<4x8x8xf32>
    %100 = vector.extract_strided_slice %82 {offsets = [0, 0, 3], sizes = [4, 8, 1], strides = [1, 1, 1]} : vector<4x8x8xf32> to vector<4x8x1xf32>
    %101 = vector.extract_strided_slice %26 {offsets = [0, 3, 0], sizes = [4, 1, 8], strides = [1, 1, 1]} : vector<4x8x8xf32> to vector<4x1x8xf32>
    %102 = vector.broadcast %100 : vector<4x8x1xf32> to vector<4x8x8xf32>
    %103 = vector.broadcast %101 : vector<4x1x8xf32> to vector<4x8x8xf32>
    %104 = arith.mulf %102, %103 : vector<4x8x8xf32>
    %105 = arith.addf %99, %104 : vector<4x8x8xf32>
    %106 = vector.extract_strided_slice %82 {offsets = [0, 0, 4], sizes = [4, 8, 1], strides = [1, 1, 1]} : vector<4x8x8xf32> to vector<4x8x1xf32>
    %107 = vector.extract_strided_slice %26 {offsets = [0, 4, 0], sizes = [4, 1, 8], strides = [1, 1, 1]} : vector<4x8x8xf32> to vector<4x1x8xf32>
    %108 = vector.broadcast %106 : vector<4x8x1xf32> to vector<4x8x8xf32>
    %109 = vector.broadcast %107 : vector<4x1x8xf32> to vector<4x8x8xf32>
    %110 = arith.mulf %108, %109 : vector<4x8x8xf32>
    %111 = arith.addf %105, %110 : vector<4x8x8xf32>
    %112 = vector.extract_strided_slice %82 {offsets = [0, 0, 5], sizes = [4, 8, 1], strides = [1, 1, 1]} : vector<4x8x8xf32> to vector<4x8x1xf32>
    %113 = vector.extract_strided_slice %26 {offsets = [0, 5, 0], sizes = [4, 1, 8], strides = [1, 1, 1]} : vector<4x8x8xf32> to vector<4x1x8xf32>
    %114 = vector.broadcast %112 : vector<4x8x1xf32> to vector<4x8x8xf32>
    %115 = vector.broadcast %113 : vector<4x1x8xf32> to vector<4x8x8xf32>
    %116 = arith.mulf %114, %115 : vector<4x8x8xf32>
    %117 = arith.addf %111, %116 : vector<4x8x8xf32>
    %118 = vector.extract_strided_slice %82 {offsets = [0, 0, 6], sizes = [4, 8, 1], strides = [1, 1, 1]} : vector<4x8x8xf32> to vector<4x8x1xf32>
    %119 = vector.extract_strided_slice %26 {offsets = [0, 6, 0], sizes = [4, 1, 8], strides = [1, 1, 1]} : vector<4x8x8xf32> to vector<4x1x8xf32>
    %120 = vector.broadcast %118 : vector<4x8x1xf32> to vector<4x8x8xf32>
    %121 = vector.broadcast %119 : vector<4x1x8xf32> to vector<4x8x8xf32>
    %122 = arith.mulf %120, %121 : vector<4x8x8xf32>
    %123 = arith.addf %117, %122 : vector<4x8x8xf32>
    %124 = vector.extract_strided_slice %82 {offsets = [0, 0, 7], sizes = [4, 8, 1], strides = [1, 1, 1]} : vector<4x8x8xf32> to vector<4x8x1xf32>
    %125 = vector.extract_strided_slice %26 {offsets = [0, 7, 0], sizes = [4, 1, 8], strides = [1, 1, 1]} : vector<4x8x8xf32> to vector<4x1x8xf32>
    %126 = vector.broadcast %124 : vector<4x8x1xf32> to vector<4x8x8xf32>
    %127 = vector.broadcast %125 : vector<4x1x8xf32> to vector<4x8x8xf32>
    %128 = arith.mulf %126, %127 : vector<4x8x8xf32>
    %129 = arith.addf %123, %128 : vector<4x8x8xf32>
    %130 = vector.extract_strided_slice %11 {offsets = [0, 0, 8], sizes = [4, 8, 8], strides = [1, 1, 1]} : vector<4x8x32xf32> to vector<4x8x8xf32>
    %131 = vector.extract_strided_slice %13 {offsets = [0, 0, 8], sizes = [4, 8, 8], strides = [1, 1, 1]} : vector<4x8x32xf32> to vector<4x8x8xf32>
    %132 = vector.extract_strided_slice %15 {offsets = [0, 0, 8], sizes = [4, 8, 8], strides = [1, 1, 1]} : vector<4x8x32xf32> to vector<4x8x8xf32>
    %133 = vector.extract_strided_slice %131 {offsets = [0, 0, 0], sizes = [4, 1, 8], strides = [1, 1, 1]} : vector<4x8x8xf32> to vector<4x1x8xf32>
    %134 = vector.broadcast %133 : vector<4x1x8xf32> to vector<4x8x8xf32>
    %135 = arith.mulf %130, %134 : vector<4x8x8xf32>
    %cst_27 = arith.constant dense<0.000000e+00> : vector<4x8xf32>
    %136 = vector.multi_reduction <add>, %135, %cst_27 [2] : vector<4x8x8xf32> to vector<4x8xf32>
    %137 = vector.shape_cast %136 : vector<4x8xf32> to vector<4x8x1xf32>
    %138 = vector.extract_strided_slice %131 {offsets = [0, 1, 0], sizes = [4, 1, 8], strides = [1, 1, 1]} : vector<4x8x8xf32> to vector<4x1x8xf32>
    %139 = vector.broadcast %138 : vector<4x1x8xf32> to vector<4x8x8xf32>
    %140 = arith.mulf %130, %139 : vector<4x8x8xf32>
    %cst_28 = arith.constant dense<0.000000e+00> : vector<4x8xf32>
    %141 = vector.multi_reduction <add>, %140, %cst_28 [2] : vector<4x8x8xf32> to vector<4x8xf32>
    %142 = vector.shape_cast %141 : vector<4x8xf32> to vector<4x8x1xf32>
    %143 = vector.extract_strided_slice %131 {offsets = [0, 2, 0], sizes = [4, 1, 8], strides = [1, 1, 1]} : vector<4x8x8xf32> to vector<4x1x8xf32>
    %144 = vector.broadcast %143 : vector<4x1x8xf32> to vector<4x8x8xf32>
    %145 = arith.mulf %130, %144 : vector<4x8x8xf32>
    %cst_29 = arith.constant dense<0.000000e+00> : vector<4x8xf32>
    %146 = vector.multi_reduction <add>, %145, %cst_29 [2] : vector<4x8x8xf32> to vector<4x8xf32>
    %147 = vector.shape_cast %146 : vector<4x8xf32> to vector<4x8x1xf32>
    %148 = vector.extract_strided_slice %131 {offsets = [0, 3, 0], sizes = [4, 1, 8], strides = [1, 1, 1]} : vector<4x8x8xf32> to vector<4x1x8xf32>
    %149 = vector.broadcast %148 : vector<4x1x8xf32> to vector<4x8x8xf32>
    %150 = arith.mulf %130, %149 : vector<4x8x8xf32>
    %cst_30 = arith.constant dense<0.000000e+00> : vector<4x8xf32>
    %151 = vector.multi_reduction <add>, %150, %cst_30 [2] : vector<4x8x8xf32> to vector<4x8xf32>
    %152 = vector.shape_cast %151 : vector<4x8xf32> to vector<4x8x1xf32>
    %153 = vector.extract_strided_slice %131 {offsets = [0, 4, 0], sizes = [4, 1, 8], strides = [1, 1, 1]} : vector<4x8x8xf32> to vector<4x1x8xf32>
    %154 = vector.broadcast %153 : vector<4x1x8xf32> to vector<4x8x8xf32>
    %155 = arith.mulf %130, %154 : vector<4x8x8xf32>
    %cst_31 = arith.constant dense<0.000000e+00> : vector<4x8xf32>
    %156 = vector.multi_reduction <add>, %155, %cst_31 [2] : vector<4x8x8xf32> to vector<4x8xf32>
    %157 = vector.shape_cast %156 : vector<4x8xf32> to vector<4x8x1xf32>
    %158 = vector.extract_strided_slice %131 {offsets = [0, 5, 0], sizes = [4, 1, 8], strides = [1, 1, 1]} : vector<4x8x8xf32> to vector<4x1x8xf32>
    %159 = vector.broadcast %158 : vector<4x1x8xf32> to vector<4x8x8xf32>
    %160 = arith.mulf %130, %159 : vector<4x8x8xf32>
    %cst_32 = arith.constant dense<0.000000e+00> : vector<4x8xf32>
    %161 = vector.multi_reduction <add>, %160, %cst_32 [2] : vector<4x8x8xf32> to vector<4x8xf32>
    %162 = vector.shape_cast %161 : vector<4x8xf32> to vector<4x8x1xf32>
    %163 = vector.extract_strided_slice %131 {offsets = [0, 6, 0], sizes = [4, 1, 8], strides = [1, 1, 1]} : vector<4x8x8xf32> to vector<4x1x8xf32>
    %164 = vector.broadcast %163 : vector<4x1x8xf32> to vector<4x8x8xf32>
    %165 = arith.mulf %130, %164 : vector<4x8x8xf32>
    %cst_33 = arith.constant dense<0.000000e+00> : vector<4x8xf32>
    %166 = vector.multi_reduction <add>, %165, %cst_33 [2] : vector<4x8x8xf32> to vector<4x8xf32>
    %167 = vector.shape_cast %166 : vector<4x8xf32> to vector<4x8x1xf32>
    %168 = vector.extract_strided_slice %131 {offsets = [0, 7, 0], sizes = [4, 1, 8], strides = [1, 1, 1]} : vector<4x8x8xf32> to vector<4x1x8xf32>
    %169 = vector.broadcast %168 : vector<4x1x8xf32> to vector<4x8x8xf32>
    %170 = arith.mulf %130, %169 : vector<4x8x8xf32>
    %cst_34 = arith.constant dense<0.000000e+00> : vector<4x8xf32>
    %171 = vector.multi_reduction <add>, %170, %cst_34 [2] : vector<4x8x8xf32> to vector<4x8xf32>
    %172 = vector.shape_cast %171 : vector<4x8xf32> to vector<4x8x1xf32>
    %173 = tpu.concatenate %137, %142, %147, %152, %157, %162, %167, %172 in 2 : vector<4x8x1xf32>, vector<4x8x1xf32>, vector<4x8x1xf32>, vector<4x8x1xf32>, vector<4x8x1xf32>, vector<4x8x1xf32>, vector<4x8x1xf32>, vector<4x8x1xf32> -> vector<4x8x8xf32>
    %174 = arith.addf %173, %17 : vector<4x8x8xf32>
    %cst_35 = arith.constant dense<0xFF800000> : vector<4x8xf32>
    %175 = vector.multi_reduction <maximumf>, %174, %cst_35 [2] : vector<4x8x8xf32> to vector<4x8xf32>
    %176 = vector.shape_cast %175 : vector<4x8xf32> to vector<4x8x1xf32>
    %177 = vector.broadcast %176 : vector<4x8x1xf32> to vector<4x8x8xf32>
    %178 = arith.subf %174, %177 : vector<4x8x8xf32>
    %179 = math.exp %178 : vector<4x8x8xf32>
    %cst_36 = arith.constant dense<0.000000e+00> : vector<4x8xf32>
    %180 = vector.multi_reduction <add>, %179, %cst_36 [2] : vector<4x8x8xf32> to vector<4x8xf32>
    %181 = vector.shape_cast %180 : vector<4x8xf32> to vector<4x8x1xf32>
    %182 = tpu.reciprocal %181 {approx = true} : vector<4x8x1xf32> -> vector<4x8x1xf32>
    %183 = vector.broadcast %182 : vector<4x8x1xf32> to vector<4x8x8xf32>
    %184 = arith.mulf %179, %183 : vector<4x8x8xf32>
    %cst_37 = arith.constant 0.000000e+00 : f32
    %185 = vector.shape_cast %21 : vector<4x8x1xi1> to vector<4x8x1xi1>
    %186 = vector.broadcast %185 : vector<4x8x1xi1> to vector<4x8x8xi1>
    %187 = vector.broadcast %cst_37 : f32 to vector<4x8x8xf32>
    %188 = arith.select %186, %184, %187 : vector<4x8x8xi1>, vector<4x8x8xf32>
    %189 = vector.extract_strided_slice %188 {offsets = [0, 0, 0], sizes = [4, 8, 1], strides = [1, 1, 1]} : vector<4x8x8xf32> to vector<4x8x1xf32>
    %190 = vector.extract_strided_slice %132 {offsets = [0, 0, 0], sizes = [4, 1, 8], strides = [1, 1, 1]} : vector<4x8x8xf32> to vector<4x1x8xf32>
    %191 = vector.broadcast %189 : vector<4x8x1xf32> to vector<4x8x8xf32>
    %192 = vector.broadcast %190 : vector<4x1x8xf32> to vector<4x8x8xf32>
    %193 = arith.mulf %191, %192 : vector<4x8x8xf32>
    %194 = vector.extract_strided_slice %188 {offsets = [0, 0, 1], sizes = [4, 8, 1], strides = [1, 1, 1]} : vector<4x8x8xf32> to vector<4x8x1xf32>
    %195 = vector.extract_strided_slice %132 {offsets = [0, 1, 0], sizes = [4, 1, 8], strides = [1, 1, 1]} : vector<4x8x8xf32> to vector<4x1x8xf32>
    %196 = vector.broadcast %194 : vector<4x8x1xf32> to vector<4x8x8xf32>
    %197 = vector.broadcast %195 : vector<4x1x8xf32> to vector<4x8x8xf32>
    %198 = arith.mulf %196, %197 : vector<4x8x8xf32>
    %199 = arith.addf %193, %198 : vector<4x8x8xf32>
    %200 = vector.extract_strided_slice %188 {offsets = [0, 0, 2], sizes = [4, 8, 1], strides = [1, 1, 1]} : vector<4x8x8xf32> to vector<4x8x1xf32>
    %201 = vector.extract_strided_slice %132 {offsets = [0, 2, 0], sizes = [4, 1, 8], strides = [1, 1, 1]} : vector<4x8x8xf32> to vector<4x1x8xf32>
    %202 = vector.broadcast %200 : vector<4x8x1xf32> to vector<4x8x8xf32>
    %203 = vector.broadcast %201 : vector<4x1x8xf32> to vector<4x8x8xf32>
    %204 = arith.mulf %202, %203 : vector<4x8x8xf32>
    %205 = arith.addf %199, %204 : vector<4x8x8xf32>
    %206 = vector.extract_strided_slice %188 {offsets = [0, 0, 3], sizes = [4, 8, 1], strides = [1, 1, 1]} : vector<4x8x8xf32> to vector<4x8x1xf32>
    %207 = vector.extract_strided_slice %132 {offsets = [0, 3, 0], sizes = [4, 1, 8], strides = [1, 1, 1]} : vector<4x8x8xf32> to vector<4x1x8xf32>
    %208 = vector.broadcast %206 : vector<4x8x1xf32> to vector<4x8x8xf32>
    %209 = vector.broadcast %207 : vector<4x1x8xf32> to vector<4x8x8xf32>
    %210 = arith.mulf %208, %209 : vector<4x8x8xf32>
    %211 = arith.addf %205, %210 : vector<4x8x8xf32>
    %212 = vector.extract_strided_slice %188 {offsets = [0, 0, 4], sizes = [4, 8, 1], strides = [1, 1, 1]} : vector<4x8x8xf32> to vector<4x8x1xf32>
    %213 = vector.extract_strided_slice %132 {offsets = [0, 4, 0], sizes = [4, 1, 8], strides = [1, 1, 1]} : vector<4x8x8xf32> to vector<4x1x8xf32>
    %214 = vector.broadcast %212 : vector<4x8x1xf32> to vector<4x8x8xf32>
    %215 = vector.broadcast %213 : vector<4x1x8xf32> to vector<4x8x8xf32>
    %216 = arith.mulf %214, %215 : vector<4x8x8xf32>
    %217 = arith.addf %211, %216 : vector<4x8x8xf32>
    %218 = vector.extract_strided_slice %188 {offsets = [0, 0, 5], sizes = [4, 8, 1], strides = [1, 1, 1]} : vector<4x8x8xf32> to vector<4x8x1xf32>
    %219 = vector.extract_strided_slice %132 {offsets = [0, 5, 0], sizes = [4, 1, 8], strides = [1, 1, 1]} : vector<4x8x8xf32> to vector<4x1x8xf32>
    %220 = vector.broadcast %218 : vector<4x8x1xf32> to vector<4x8x8xf32>
    %221 = vector.broadcast %219 : vector<4x1x8xf32> to vector<4x8x8xf32>
    %222 = arith.mulf %220, %221 : vector<4x8x8xf32>
    %223 = arith.addf %217, %222 : vector<4x8x8xf32>
    %224 = vector.extract_strided_slice %188 {offsets = [0, 0, 6], sizes = [4, 8, 1], strides = [1, 1, 1]} : vector<4x8x8xf32> to vector<4x8x1xf32>
    %225 = vector.extract_strided_slice %132 {offsets = [0, 6, 0], sizes = [4, 1, 8], strides = [1, 1, 1]} : vector<4x8x8xf32> to vector<4x1x8xf32>
    %226 = vector.broadcast %224 : vector<4x8x1xf32> to vector<4x8x8xf32>
    %227 = vector.broadcast %225 : vector<4x1x8xf32> to vector<4x8x8xf32>
    %228 = arith.mulf %226, %227 : vector<4x8x8xf32>
    %229 = arith.addf %223, %228 : vector<4x8x8xf32>
    %230 = vector.extract_strided_slice %188 {offsets = [0, 0, 7], sizes = [4, 8, 1], strides = [1, 1, 1]} : vector<4x8x8xf32> to vector<4x8x1xf32>
    %231 = vector.extract_strided_slice %132 {offsets = [0, 7, 0], sizes = [4, 1, 8], strides = [1, 1, 1]} : vector<4x8x8xf32> to vector<4x1x8xf32>
    %232 = vector.broadcast %230 : vector<4x8x1xf32> to vector<4x8x8xf32>
    %233 = vector.broadcast %231 : vector<4x1x8xf32> to vector<4x8x8xf32>
    %234 = arith.mulf %232, %233 : vector<4x8x8xf32>
    %235 = arith.addf %229, %234 : vector<4x8x8xf32>
    %236 = vector.extract_strided_slice %11 {offsets = [0, 0, 16], sizes = [4, 8, 8], strides = [1, 1, 1]} : vector<4x8x32xf32> to vector<4x8x8xf32>
    %237 = vector.extract_strided_slice %13 {offsets = [0, 0, 16], sizes = [4, 8, 8], strides = [1, 1, 1]} : vector<4x8x32xf32> to vector<4x8x8xf32>
    %238 = vector.extract_strided_slice %15 {offsets = [0, 0, 16], sizes = [4, 8, 8], strides = [1, 1, 1]} : vector<4x8x32xf32> to vector<4x8x8xf32>
    %239 = vector.extract_strided_slice %237 {offsets = [0, 0, 0], sizes = [4, 1, 8], strides = [1, 1, 1]} : vector<4x8x8xf32> to vector<4x1x8xf32>
    %240 = vector.broadcast %239 : vector<4x1x8xf32> to vector<4x8x8xf32>
    %241 = arith.mulf %236, %240 : vector<4x8x8xf32>
    %cst_38 = arith.constant dense<0.000000e+00> : vector<4x8xf32>
    %242 = vector.multi_reduction <add>, %241, %cst_38 [2] : vector<4x8x8xf32> to vector<4x8xf32>
    %243 = vector.shape_cast %242 : vector<4x8xf32> to vector<4x8x1xf32>
    %244 = vector.extract_strided_slice %237 {offsets = [0, 1, 0], sizes = [4, 1, 8], strides = [1, 1, 1]} : vector<4x8x8xf32> to vector<4x1x8xf32>
    %245 = vector.broadcast %244 : vector<4x1x8xf32> to vector<4x8x8xf32>
    %246 = arith.mulf %236, %245 : vector<4x8x8xf32>
    %cst_39 = arith.constant dense<0.000000e+00> : vector<4x8xf32>
    %247 = vector.multi_reduction <add>, %246, %cst_39 [2] : vector<4x8x8xf32> to vector<4x8xf32>
    %248 = vector.shape_cast %247 : vector<4x8xf32> to vector<4x8x1xf32>
    %249 = vector.extract_strided_slice %237 {offsets = [0, 2, 0], sizes = [4, 1, 8], strides = [1, 1, 1]} : vector<4x8x8xf32> to vector<4x1x8xf32>
    %250 = vector.broadcast %249 : vector<4x1x8xf32> to vector<4x8x8xf32>
    %251 = arith.mulf %236, %250 : vector<4x8x8xf32>
    %cst_40 = arith.constant dense<0.000000e+00> : vector<4x8xf32>
    %252 = vector.multi_reduction <add>, %251, %cst_40 [2] : vector<4x8x8xf32> to vector<4x8xf32>
    %253 = vector.shape_cast %252 : vector<4x8xf32> to vector<4x8x1xf32>
    %254 = vector.extract_strided_slice %237 {offsets = [0, 3, 0], sizes = [4, 1, 8], strides = [1, 1, 1]} : vector<4x8x8xf32> to vector<4x1x8xf32>
    %255 = vector.broadcast %254 : vector<4x1x8xf32> to vector<4x8x8xf32>
    %256 = arith.mulf %236, %255 : vector<4x8x8xf32>
    %cst_41 = arith.constant dense<0.000000e+00> : vector<4x8xf32>
    %257 = vector.multi_reduction <add>, %256, %cst_41 [2] : vector<4x8x8xf32> to vector<4x8xf32>
    %258 = vector.shape_cast %257 : vector<4x8xf32> to vector<4x8x1xf32>
    %259 = vector.extract_strided_slice %237 {offsets = [0, 4, 0], sizes = [4, 1, 8], strides = [1, 1, 1]} : vector<4x8x8xf32> to vector<4x1x8xf32>
    %260 = vector.broadcast %259 : vector<4x1x8xf32> to vector<4x8x8xf32>
    %261 = arith.mulf %236, %260 : vector<4x8x8xf32>
    %cst_42 = arith.constant dense<0.000000e+00> : vector<4x8xf32>
    %262 = vector.multi_reduction <add>, %261, %cst_42 [2] : vector<4x8x8xf32> to vector<4x8xf32>
    %263 = vector.shape_cast %262 : vector<4x8xf32> to vector<4x8x1xf32>
    %264 = vector.extract_strided_slice %237 {offsets = [0, 5, 0], sizes = [4, 1, 8], strides = [1, 1, 1]} : vector<4x8x8xf32> to vector<4x1x8xf32>
    %265 = vector.broadcast %264 : vector<4x1x8xf32> to vector<4x8x8xf32>
    %266 = arith.mulf %236, %265 : vector<4x8x8xf32>
    %cst_43 = arith.constant dense<0.000000e+00> : vector<4x8xf32>
    %267 = vector.multi_reduction <add>, %266, %cst_43 [2] : vector<4x8x8xf32> to vector<4x8xf32>
    %268 = vector.shape_cast %267 : vector<4x8xf32> to vector<4x8x1xf32>
    %269 = vector.extract_strided_slice %237 {offsets = [0, 6, 0], sizes = [4, 1, 8], strides = [1, 1, 1]} : vector<4x8x8xf32> to vector<4x1x8xf32>
    %270 = vector.broadcast %269 : vector<4x1x8xf32> to vector<4x8x8xf32>
    %271 = arith.mulf %236, %270 : vector<4x8x8xf32>
    %cst_44 = arith.constant dense<0.000000e+00> : vector<4x8xf32>
    %272 = vector.multi_reduction <add>, %271, %cst_44 [2] : vector<4x8x8xf32> to vector<4x8xf32>
    %273 = vector.shape_cast %272 : vector<4x8xf32> to vector<4x8x1xf32>
    %274 = vector.extract_strided_slice %237 {offsets = [0, 7, 0], sizes = [4, 1, 8], strides = [1, 1, 1]} : vector<4x8x8xf32> to vector<4x1x8xf32>
    %275 = vector.broadcast %274 : vector<4x1x8xf32> to vector<4x8x8xf32>
    %276 = arith.mulf %236, %275 : vector<4x8x8xf32>
    %cst_45 = arith.constant dense<0.000000e+00> : vector<4x8xf32>
    %277 = vector.multi_reduction <add>, %276, %cst_45 [2] : vector<4x8x8xf32> to vector<4x8xf32>
    %278 = vector.shape_cast %277 : vector<4x8xf32> to vector<4x8x1xf32>
    %279 = tpu.concatenate %243, %248, %253, %258, %263, %268, %273, %278 in 2 : vector<4x8x1xf32>, vector<4x8x1xf32>, vector<4x8x1xf32>, vector<4x8x1xf32>, vector<4x8x1xf32>, vector<4x8x1xf32>, vector<4x8x1xf32>, vector<4x8x1xf32> -> vector<4x8x8xf32>
    %280 = arith.addf %279, %17 : vector<4x8x8xf32>
    %cst_46 = arith.constant dense<0xFF800000> : vector<4x8xf32>
    %281 = vector.multi_reduction <maximumf>, %280, %cst_46 [2] : vector<4x8x8xf32> to vector<4x8xf32>
    %282 = vector.shape_cast %281 : vector<4x8xf32> to vector<4x8x1xf32>
    %283 = vector.broadcast %282 : vector<4x8x1xf32> to vector<4x8x8xf32>
    %284 = arith.subf %280, %283 : vector<4x8x8xf32>
    %285 = math.exp %284 : vector<4x8x8xf32>
    %cst_47 = arith.constant dense<0.000000e+00> : vector<4x8xf32>
    %286 = vector.multi_reduction <add>, %285, %cst_47 [2] : vector<4x8x8xf32> to vector<4x8xf32>
    %287 = vector.shape_cast %286 : vector<4x8xf32> to vector<4x8x1xf32>
    %288 = tpu.reciprocal %287 {approx = true} : vector<4x8x1xf32> -> vector<4x8x1xf32>
    %289 = vector.broadcast %288 : vector<4x8x1xf32> to vector<4x8x8xf32>
    %290 = arith.mulf %285, %289 : vector<4x8x8xf32>
    %cst_48 = arith.constant 0.000000e+00 : f32
    %291 = vector.shape_cast %21 : vector<4x8x1xi1> to vector<4x8x1xi1>
    %292 = vector.broadcast %291 : vector<4x8x1xi1> to vector<4x8x8xi1>
    %293 = vector.broadcast %cst_48 : f32 to vector<4x8x8xf32>
    %294 = arith.select %292, %290, %293 : vector<4x8x8xi1>, vector<4x8x8xf32>
    %295 = vector.extract_strided_slice %294 {offsets = [0, 0, 0], sizes = [4, 8, 1], strides = [1, 1, 1]} : vector<4x8x8xf32> to vector<4x8x1xf32>
    %296 = vector.extract_strided_slice %238 {offsets = [0, 0, 0], sizes = [4, 1, 8], strides = [1, 1, 1]} : vector<4x8x8xf32> to vector<4x1x8xf32>
    %297 = vector.broadcast %295 : vector<4x8x1xf32> to vector<4x8x8xf32>
    %298 = vector.broadcast %296 : vector<4x1x8xf32> to vector<4x8x8xf32>
    %299 = arith.mulf %297, %298 : vector<4x8x8xf32>
    %300 = vector.extract_strided_slice %294 {offsets = [0, 0, 1], sizes = [4, 8, 1], strides = [1, 1, 1]} : vector<4x8x8xf32> to vector<4x8x1xf32>
    %301 = vector.extract_strided_slice %238 {offsets = [0, 1, 0], sizes = [4, 1, 8], strides = [1, 1, 1]} : vector<4x8x8xf32> to vector<4x1x8xf32>
    %302 = vector.broadcast %300 : vector<4x8x1xf32> to vector<4x8x8xf32>
    %303 = vector.broadcast %301 : vector<4x1x8xf32> to vector<4x8x8xf32>
    %304 = arith.mulf %302, %303 : vector<4x8x8xf32>
    %305 = arith.addf %299, %304 : vector<4x8x8xf32>
    %306 = vector.extract_strided_slice %294 {offsets = [0, 0, 2], sizes = [4, 8, 1], strides = [1, 1, 1]} : vector<4x8x8xf32> to vector<4x8x1xf32>
    %307 = vector.extract_strided_slice %238 {offsets = [0, 2, 0], sizes = [4, 1, 8], strides = [1, 1, 1]} : vector<4x8x8xf32> to vector<4x1x8xf32>
    %308 = vector.broadcast %306 : vector<4x8x1xf32> to vector<4x8x8xf32>
    %309 = vector.broadcast %307 : vector<4x1x8xf32> to vector<4x8x8xf32>
    %310 = arith.mulf %308, %309 : vector<4x8x8xf32>
    %311 = arith.addf %305, %310 : vector<4x8x8xf32>
    %312 = vector.extract_strided_slice %294 {offsets = [0, 0, 3], sizes = [4, 8, 1], strides = [1, 1, 1]} : vector<4x8x8xf32> to vector<4x8x1xf32>
    %313 = vector.extract_strided_slice %238 {offsets = [0, 3, 0], sizes = [4, 1, 8], strides = [1, 1, 1]} : vector<4x8x8xf32> to vector<4x1x8xf32>
    %314 = vector.broadcast %312 : vector<4x8x1xf32> to vector<4x8x8xf32>
    %315 = vector.broadcast %313 : vector<4x1x8xf32> to vector<4x8x8xf32>
    %316 = arith.mulf %314, %315 : vector<4x8x8xf32>
    %317 = arith.addf %311, %316 : vector<4x8x8xf32>
    %318 = vector.extract_strided_slice %294 {offsets = [0, 0, 4], sizes = [4, 8, 1], strides = [1, 1, 1]} : vector<4x8x8xf32> to vector<4x8x1xf32>
    %319 = vector.extract_strided_slice %238 {offsets = [0, 4, 0], sizes = [4, 1, 8], strides = [1, 1, 1]} : vector<4x8x8xf32> to vector<4x1x8xf32>
    %320 = vector.broadcast %318 : vector<4x8x1xf32> to vector<4x8x8xf32>
    %321 = vector.broadcast %319 : vector<4x1x8xf32> to vector<4x8x8xf32>
    %322 = arith.mulf %320, %321 : vector<4x8x8xf32>
    %323 = arith.addf %317, %322 : vector<4x8x8xf32>
    %324 = vector.extract_strided_slice %294 {offsets = [0, 0, 5], sizes = [4, 8, 1], strides = [1, 1, 1]} : vector<4x8x8xf32> to vector<4x8x1xf32>
    %325 = vector.extract_strided_slice %238 {offsets = [0, 5, 0], sizes = [4, 1, 8], strides = [1, 1, 1]} : vector<4x8x8xf32> to vector<4x1x8xf32>
    %326 = vector.broadcast %324 : vector<4x8x1xf32> to vector<4x8x8xf32>
    %327 = vector.broadcast %325 : vector<4x1x8xf32> to vector<4x8x8xf32>
    %328 = arith.mulf %326, %327 : vector<4x8x8xf32>
    %329 = arith.addf %323, %328 : vector<4x8x8xf32>
    %330 = vector.extract_strided_slice %294 {offsets = [0, 0, 6], sizes = [4, 8, 1], strides = [1, 1, 1]} : vector<4x8x8xf32> to vector<4x8x1xf32>
    %331 = vector.extract_strided_slice %238 {offsets = [0, 6, 0], sizes = [4, 1, 8], strides = [1, 1, 1]} : vector<4x8x8xf32> to vector<4x1x8xf32>
    %332 = vector.broadcast %330 : vector<4x8x1xf32> to vector<4x8x8xf32>
    %333 = vector.broadcast %331 : vector<4x1x8xf32> to vector<4x8x8xf32>
    %334 = arith.mulf %332, %333 : vector<4x8x8xf32>
    %335 = arith.addf %329, %334 : vector<4x8x8xf32>
    %336 = vector.extract_strided_slice %294 {offsets = [0, 0, 7], sizes = [4, 8, 1], strides = [1, 1, 1]} : vector<4x8x8xf32> to vector<4x8x1xf32>
    %337 = vector.extract_strided_slice %238 {offsets = [0, 7, 0], sizes = [4, 1, 8], strides = [1, 1, 1]} : vector<4x8x8xf32> to vector<4x1x8xf32>
    %338 = vector.broadcast %336 : vector<4x8x1xf32> to vector<4x8x8xf32>
    %339 = vector.broadcast %337 : vector<4x1x8xf32> to vector<4x8x8xf32>
    %340 = arith.mulf %338, %339 : vector<4x8x8xf32>
    %341 = arith.addf %335, %340 : vector<4x8x8xf32>
    %342 = vector.extract_strided_slice %11 {offsets = [0, 0, 24], sizes = [4, 8, 8], strides = [1, 1, 1]} : vector<4x8x32xf32> to vector<4x8x8xf32>
    %343 = vector.extract_strided_slice %13 {offsets = [0, 0, 24], sizes = [4, 8, 8], strides = [1, 1, 1]} : vector<4x8x32xf32> to vector<4x8x8xf32>
    %344 = vector.extract_strided_slice %15 {offsets = [0, 0, 24], sizes = [4, 8, 8], strides = [1, 1, 1]} : vector<4x8x32xf32> to vector<4x8x8xf32>
    %345 = vector.extract_strided_slice %343 {offsets = [0, 0, 0], sizes = [4, 1, 8], strides = [1, 1, 1]} : vector<4x8x8xf32> to vector<4x1x8xf32>
    %346 = vector.broadcast %345 : vector<4x1x8xf32> to vector<4x8x8xf32>
    %347 = arith.mulf %342, %346 : vector<4x8x8xf32>
    %cst_49 = arith.constant dense<0.000000e+00> : vector<4x8xf32>
    %348 = vector.multi_reduction <add>, %347, %cst_49 [2] : vector<4x8x8xf32> to vector<4x8xf32>
    %349 = vector.shape_cast %348 : vector<4x8xf32> to vector<4x8x1xf32>
    %350 = vector.extract_strided_slice %343 {offsets = [0, 1, 0], sizes = [4, 1, 8], strides = [1, 1, 1]} : vector<4x8x8xf32> to vector<4x1x8xf32>
    %351 = vector.broadcast %350 : vector<4x1x8xf32> to vector<4x8x8xf32>
    %352 = arith.mulf %342, %351 : vector<4x8x8xf32>
    %cst_50 = arith.constant dense<0.000000e+00> : vector<4x8xf32>
    %353 = vector.multi_reduction <add>, %352, %cst_50 [2] : vector<4x8x8xf32> to vector<4x8xf32>
    %354 = vector.shape_cast %353 : vector<4x8xf32> to vector<4x8x1xf32>
    %355 = vector.extract_strided_slice %343 {offsets = [0, 2, 0], sizes = [4, 1, 8], strides = [1, 1, 1]} : vector<4x8x8xf32> to vector<4x1x8xf32>
    %356 = vector.broadcast %355 : vector<4x1x8xf32> to vector<4x8x8xf32>
    %357 = arith.mulf %342, %356 : vector<4x8x8xf32>
    %cst_51 = arith.constant dense<0.000000e+00> : vector<4x8xf32>
    %358 = vector.multi_reduction <add>, %357, %cst_51 [2] : vector<4x8x8xf32> to vector<4x8xf32>
    %359 = vector.shape_cast %358 : vector<4x8xf32> to vector<4x8x1xf32>
    %360 = vector.extract_strided_slice %343 {offsets = [0, 3, 0], sizes = [4, 1, 8], strides = [1, 1, 1]} : vector<4x8x8xf32> to vector<4x1x8xf32>
    %361 = vector.broadcast %360 : vector<4x1x8xf32> to vector<4x8x8xf32>
    %362 = arith.mulf %342, %361 : vector<4x8x8xf32>
    %cst_52 = arith.constant dense<0.000000e+00> : vector<4x8xf32>
    %363 = vector.multi_reduction <add>, %362, %cst_52 [2] : vector<4x8x8xf32> to vector<4x8xf32>
    %364 = vector.shape_cast %363 : vector<4x8xf32> to vector<4x8x1xf32>
    %365 = vector.extract_strided_slice %343 {offsets = [0, 4, 0], sizes = [4, 1, 8], strides = [1, 1, 1]} : vector<4x8x8xf32> to vector<4x1x8xf32>
    %366 = vector.broadcast %365 : vector<4x1x8xf32> to vector<4x8x8xf32>
    %367 = arith.mulf %342, %366 : vector<4x8x8xf32>
    %cst_53 = arith.constant dense<0.000000e+00> : vector<4x8xf32>
    %368 = vector.multi_reduction <add>, %367, %cst_53 [2] : vector<4x8x8xf32> to vector<4x8xf32>
    %369 = vector.shape_cast %368 : vector<4x8xf32> to vector<4x8x1xf32>
    %370 = vector.extract_strided_slice %343 {offsets = [0, 5, 0], sizes = [4, 1, 8], strides = [1, 1, 1]} : vector<4x8x8xf32> to vector<4x1x8xf32>
    %371 = vector.broadcast %370 : vector<4x1x8xf32> to vector<4x8x8xf32>
    %372 = arith.mulf %342, %371 : vector<4x8x8xf32>
    %cst_54 = arith.constant dense<0.000000e+00> : vector<4x8xf32>
    %373 = vector.multi_reduction <add>, %372, %cst_54 [2] : vector<4x8x8xf32> to vector<4x8xf32>
    %374 = vector.shape_cast %373 : vector<4x8xf32> to vector<4x8x1xf32>
    %375 = vector.extract_strided_slice %343 {offsets = [0, 6, 0], sizes = [4, 1, 8], strides = [1, 1, 1]} : vector<4x8x8xf32> to vector<4x1x8xf32>
    %376 = vector.broadcast %375 : vector<4x1x8xf32> to vector<4x8x8xf32>
    %377 = arith.mulf %342, %376 : vector<4x8x8xf32>
    %cst_55 = arith.constant dense<0.000000e+00> : vector<4x8xf32>
    %378 = vector.multi_reduction <add>, %377, %cst_55 [2] : vector<4x8x8xf32> to vector<4x8xf32>
    %379 = vector.shape_cast %378 : vector<4x8xf32> to vector<4x8x1xf32>
    %380 = vector.extract_strided_slice %343 {offsets = [0, 7, 0], sizes = [4, 1, 8], strides = [1, 1, 1]} : vector<4x8x8xf32> to vector<4x1x8xf32>
    %381 = vector.broadcast %380 : vector<4x1x8xf32> to vector<4x8x8xf32>
    %382 = arith.mulf %342, %381 : vector<4x8x8xf32>
    %cst_56 = arith.constant dense<0.000000e+00> : vector<4x8xf32>
    %383 = vector.multi_reduction <add>, %382, %cst_56 [2] : vector<4x8x8xf32> to vector<4x8xf32>
    %384 = vector.shape_cast %383 : vector<4x8xf32> to vector<4x8x1xf32>
    %385 = tpu.concatenate %349, %354, %359, %364, %369, %374, %379, %384 in 2 : vector<4x8x1xf32>, vector<4x8x1xf32>, vector<4x8x1xf32>, vector<4x8x1xf32>, vector<4x8x1xf32>, vector<4x8x1xf32>, vector<4x8x1xf32>, vector<4x8x1xf32> -> vector<4x8x8xf32>
    %386 = arith.addf %385, %17 : vector<4x8x8xf32>
    %cst_57 = arith.constant dense<0xFF800000> : vector<4x8xf32>
    %387 = vector.multi_reduction <maximumf>, %386, %cst_57 [2] : vector<4x8x8xf32> to vector<4x8xf32>
    %388 = vector.shape_cast %387 : vector<4x8xf32> to vector<4x8x1xf32>
    %389 = vector.broadcast %388 : vector<4x8x1xf32> to vector<4x8x8xf32>
    %390 = arith.subf %386, %389 : vector<4x8x8xf32>
    %391 = math.exp %390 : vector<4x8x8xf32>
    %cst_58 = arith.constant dense<0.000000e+00> : vector<4x8xf32>
    %392 = vector.multi_reduction <add>, %391, %cst_58 [2] : vector<4x8x8xf32> to vector<4x8xf32>
    %393 = vector.shape_cast %392 : vector<4x8xf32> to vector<4x8x1xf32>
    %394 = tpu.reciprocal %393 {approx = true} : vector<4x8x1xf32> -> vector<4x8x1xf32>
    %395 = vector.broadcast %394 : vector<4x8x1xf32> to vector<4x8x8xf32>
    %396 = arith.mulf %391, %395 : vector<4x8x8xf32>
    %cst_59 = arith.constant 0.000000e+00 : f32
    %397 = vector.shape_cast %21 : vector<4x8x1xi1> to vector<4x8x1xi1>
    %398 = vector.broadcast %397 : vector<4x8x1xi1> to vector<4x8x8xi1>
    %399 = vector.broadcast %cst_59 : f32 to vector<4x8x8xf32>
    %400 = arith.select %398, %396, %399 : vector<4x8x8xi1>, vector<4x8x8xf32>
    %401 = vector.extract_strided_slice %400 {offsets = [0, 0, 0], sizes = [4, 8, 1], strides = [1, 1, 1]} : vector<4x8x8xf32> to vector<4x8x1xf32>
    %402 = vector.extract_strided_slice %344 {offsets = [0, 0, 0], sizes = [4, 1, 8], strides = [1, 1, 1]} : vector<4x8x8xf32> to vector<4x1x8xf32>
    %403 = vector.broadcast %401 : vector<4x8x1xf32> to vector<4x8x8xf32>
    %404 = vector.broadcast %402 : vector<4x1x8xf32> to vector<4x8x8xf32>
    %405 = arith.mulf %403, %404 : vector<4x8x8xf32>
    %406 = vector.extract_strided_slice %400 {offsets = [0, 0, 1], sizes = [4, 8, 1], strides = [1, 1, 1]} : vector<4x8x8xf32> to vector<4x8x1xf32>
    %407 = vector.extract_strided_slice %344 {offsets = [0, 1, 0], sizes = [4, 1, 8], strides = [1, 1, 1]} : vector<4x8x8xf32> to vector<4x1x8xf32>
    %408 = vector.broadcast %406 : vector<4x8x1xf32> to vector<4x8x8xf32>
    %409 = vector.broadcast %407 : vector<4x1x8xf32> to vector<4x8x8xf32>
    %410 = arith.mulf %408, %409 : vector<4x8x8xf32>
    %411 = arith.addf %405, %410 : vector<4x8x8xf32>
    %412 = vector.extract_strided_slice %400 {offsets = [0, 0, 2], sizes = [4, 8, 1], strides = [1, 1, 1]} : vector<4x8x8xf32> to vector<4x8x1xf32>
    %413 = vector.extract_strided_slice %344 {offsets = [0, 2, 0], sizes = [4, 1, 8], strides = [1, 1, 1]} : vector<4x8x8xf32> to vector<4x1x8xf32>
    %414 = vector.broadcast %412 : vector<4x8x1xf32> to vector<4x8x8xf32>
    %415 = vector.broadcast %413 : vector<4x1x8xf32> to vector<4x8x8xf32>
    %416 = arith.mulf %414, %415 : vector<4x8x8xf32>
    %417 = arith.addf %411, %416 : vector<4x8x8xf32>
    %418 = vector.extract_strided_slice %400 {offsets = [0, 0, 3], sizes = [4, 8, 1], strides = [1, 1, 1]} : vector<4x8x8xf32> to vector<4x8x1xf32>
    %419 = vector.extract_strided_slice %344 {offsets = [0, 3, 0], sizes = [4, 1, 8], strides = [1, 1, 1]} : vector<4x8x8xf32> to vector<4x1x8xf32>
    %420 = vector.broadcast %418 : vector<4x8x1xf32> to vector<4x8x8xf32>
    %421 = vector.broadcast %419 : vector<4x1x8xf32> to vector<4x8x8xf32>
    %422 = arith.mulf %420, %421 : vector<4x8x8xf32>
    %423 = arith.addf %417, %422 : vector<4x8x8xf32>
    %424 = vector.extract_strided_slice %400 {offsets = [0, 0, 4], sizes = [4, 8, 1], strides = [1, 1, 1]} : vector<4x8x8xf32> to vector<4x8x1xf32>
    %425 = vector.extract_strided_slice %344 {offsets = [0, 4, 0], sizes = [4, 1, 8], strides = [1, 1, 1]} : vector<4x8x8xf32> to vector<4x1x8xf32>
    %426 = vector.broadcast %424 : vector<4x8x1xf32> to vector<4x8x8xf32>
    %427 = vector.broadcast %425 : vector<4x1x8xf32> to vector<4x8x8xf32>
    %428 = arith.mulf %426, %427 : vector<4x8x8xf32>
    %429 = arith.addf %423, %428 : vector<4x8x8xf32>
    %430 = vector.extract_strided_slice %400 {offsets = [0, 0, 5], sizes = [4, 8, 1], strides = [1, 1, 1]} : vector<4x8x8xf32> to vector<4x8x1xf32>
    %431 = vector.extract_strided_slice %344 {offsets = [0, 5, 0], sizes = [4, 1, 8], strides = [1, 1, 1]} : vector<4x8x8xf32> to vector<4x1x8xf32>
    %432 = vector.broadcast %430 : vector<4x8x1xf32> to vector<4x8x8xf32>
    %433 = vector.broadcast %431 : vector<4x1x8xf32> to vector<4x8x8xf32>
    %434 = arith.mulf %432, %433 : vector<4x8x8xf32>
    %435 = arith.addf %429, %434 : vector<4x8x8xf32>
    %436 = vector.extract_strided_slice %400 {offsets = [0, 0, 6], sizes = [4, 8, 1], strides = [1, 1, 1]} : vector<4x8x8xf32> to vector<4x8x1xf32>
    %437 = vector.extract_strided_slice %344 {offsets = [0, 6, 0], sizes = [4, 1, 8], strides = [1, 1, 1]} : vector<4x8x8xf32> to vector<4x1x8xf32>
    %438 = vector.broadcast %436 : vector<4x8x1xf32> to vector<4x8x8xf32>
    %439 = vector.broadcast %437 : vector<4x1x8xf32> to vector<4x8x8xf32>
    %440 = arith.mulf %438, %439 : vector<4x8x8xf32>
    %441 = arith.addf %435, %440 : vector<4x8x8xf32>
    %442 = vector.extract_strided_slice %400 {offsets = [0, 0, 7], sizes = [4, 8, 1], strides = [1, 1, 1]} : vector<4x8x8xf32> to vector<4x8x1xf32>
    %443 = vector.extract_strided_slice %344 {offsets = [0, 7, 0], sizes = [4, 1, 8], strides = [1, 1, 1]} : vector<4x8x8xf32> to vector<4x1x8xf32>
    %444 = vector.broadcast %442 : vector<4x8x1xf32> to vector<4x8x8xf32>
    %445 = vector.broadcast %443 : vector<4x1x8xf32> to vector<4x8x8xf32>
    %446 = arith.mulf %444, %445 : vector<4x8x8xf32>
    %447 = arith.addf %441, %446 : vector<4x8x8xf32>
    %448 = tpu.concatenate %129, %235, %341, %447 in 2 : vector<4x8x8xf32>, vector<4x8x8xf32>, vector<4x8x8xf32>, vector<4x8x8xf32> -> vector<4x8x32xf32>
    %449 = vector.shape_cast %448 : vector<4x8x32xf32> to vector<32x32xf32>
    %c0_60 = arith.constant 0 : index
    %c0_61 = arith.constant 0 : index
    %450 = vector.load %arg7[%c0_60, %c0_61] : memref<32x32xf32, #tpu.memory_space<vmem>>, vector<32x32xf32>
    %cst_62 = arith.constant dense<0.000000e+00> : vector<32x32xf32>
    %451 = tpu.matmul %449, %450, %cst_62 {dimension_numbers = #tpu.dot_dimension_numbers<[1], [0], [0], [1], [0, 0, 1, 1], [], []>, precision = #tpu.contract_precision<fp32>} : vector<32x32xf32>, vector<32x32xf32>, vector<32x32xf32> -> vector<32x32xf32>
    %c0_63 = arith.constant 0 : index
    %c0_64 = arith.constant 0 : index
    %452 = vector.load %arg8[%c0_63, %c0_64] : memref<1x32xf32, #tpu.memory_space<vmem>>, vector<1x32xf32>
    %453 = vector.broadcast %452 : vector<1x32xf32> to vector<32x32xf32>
    %454 = arith.addf %451, %453 : vector<32x32xf32>
    %455 = vector.shape_cast %454 : vector<32x32xf32> to vector<4x8x32xf32>
    %cst_65 = arith.constant 0.000000e+00 : f32
    %456 = vector.broadcast %cst_65 : f32 to vector<4x8x32xf32>
    %457 = arith.maximumf %455, %456 : vector<4x8x32xf32>
    %cst_66 = arith.constant 0.000000e+00 : f32
    %458 = vector.shape_cast %23 : vector<4x8x1xi1> to vector<4x8x1xi1>
    %459 = vector.broadcast %458 : vector<4x8x1xi1> to vector<4x8x32xi1>
    %460 = vector.broadcast %cst_66 : f32 to vector<4x8x32xf32>
    %461 = arith.select %459, %457, %460 : vector<4x8x32xi1>, vector<4x8x32xf32>
    %c0_67 = arith.constant 0 : index
    %c0_68 = arith.constant 0 : index
    %c0_69 = arith.constant 0 : index
    %c0_70 = arith.constant 0 : index
    %462 = vector.load %arg12[%c0_67, %c0_68, %c0_69, %c0_70] : memref<1x4x8x32xf32, #tpu.memory_space<vmem>>, vector<1x4x8x32xf32>
    %463 = vector.shape_cast %462 : vector<1x4x8x32xf32> to vector<4x8x32xf32>
    %464 = vector.shape_cast %461 : vector<4x8x32xf32> to vector<1x4x8x32xf32>
    tpu.vector_store %arg12[%c0_67, %c0_68, %c0_69, %c0_70], %464 {strides = array<i32>} : memref<1x4x8x32xf32, #tpu.memory_space<vmem>>, vector<1x4x8x32xf32>,
    %465 = vector.shape_cast %461 : vector<4x8x32xf32> to vector<32x32xf32>
    %c0_71 = arith.constant 0 : index
    %c0_72 = arith.constant 0 : index
    %466 = vector.load %arg9[%c0_71, %c0_72] : memref<32x16xf32, #tpu.memory_space<vmem>>, vector<32x16xf32>
    %cst_73 = arith.constant dense<0.000000e+00> : vector<32x16xf32>
    %467 = tpu.matmul %465, %466, %cst_73 {dimension_numbers = #tpu.dot_dimension_numbers<[1], [0], [0], [1], [0, 0, 1, 1], [], []>, precision = #tpu.contract_precision<fp32>} : vector<32x32xf32>, vector<32x16xf32>, vector<32x16xf32> -> vector<32x16xf32>
    %c0_74 = arith.constant 0 : index
    %c0_75 = arith.constant 0 : index
    %468 = vector.load %arg10[%c0_74, %c0_75] : memref<1x16xf32, #tpu.memory_space<vmem>>, vector<1x16xf32>
    %469 = vector.broadcast %468 : vector<1x16xf32> to vector<32x16xf32>
    %470 = arith.addf %467, %469 : vector<32x16xf32>
    %471 = vector.shape_cast %470 : vector<32x16xf32> to vector<4x8x16xf32>
    %cst_76 = arith.constant 0.000000e+00 : f32
    %472 = vector.shape_cast %23 : vector<4x8x1xi1> to vector<4x8x1xi1>
    %473 = vector.broadcast %472 : vector<4x8x1xi1> to vector<4x8x16xi1>
    %474 = vector.broadcast %cst_76 : f32 to vector<4x8x16xf32>
    %475 = arith.select %473, %471, %474 : vector<4x8x16xi1>, vector<4x8x16xf32>
    %c0_77 = arith.constant 0 : index
    %c0_78 = arith.constant 0 : index
    %c0_79 = arith.constant 0 : index
    %c0_80 = arith.constant 0 : index
    %476 = vector.load %arg11[%c0_77, %c0_78, %c0_79, %c0_80] : memref<1x4x8x16xf32, #tpu.memory_space<vmem>>, vector<1x4x8x16xf32>
    %477 = vector.shape_cast %476 : vector<1x4x8x16xf32> to vector<4x8x16xf32>
    %478 = vector.shape_cast %475 : vector<4x8x16xf32> to vector<1x4x8x16xf32>
    tpu.vector_store %arg11[%c0_77, %c0_78, %c0_79, %c0_80], %478 {strides = array<i32>} : memref<1x4x8x16xf32, #tpu.memory_space<vmem>>, vector<1x4x8x16xf32>,
    return
  }
  func.func @transform_0(%arg0: i32, %arg1: i32) -> (i32, i32) {
    %c0_i32 = arith.constant 0 : i32
    %c0_i32_0 = arith.constant 0 : i32
    return %arg0, %c0_i32 : i32, i32
  }
  func.func @transform_1(%arg0: i32, %arg1: i32) -> (i32, i32, i32, i32) {
    %c0_i32 = arith.constant 0 : i32
    %c0_i32_0 = arith.constant 0 : i32
    %c0_i32_1 = arith.constant 0 : i32
    return %arg1, %arg0, %c0_i32, %c0_i32_0 : i32, i32, i32, i32
  }
  func.func @transform_2(%arg0: i32, %arg1: i32) -> (i32, i32) {
    %c0_i32 = arith.constant 0 : i32
    %c0_i32_0 = arith.constant 0 : i32
    %c0_i32_1 = arith.constant 0 : i32
    return %c0_i32, %c0_i32_0 : i32, i32
  }
  func.func @transform_3(%arg0: i32, %arg1: i32) -> (i32, i32) {
    %c0_i32 = arith.constant 0 : i32
    %c0_i32_0 = arith.constant 0 : i32
    %c0_i32_1 = arith.constant 0 : i32
    return %c0_i32, %c0_i32_0 : i32, i32
  }
  func.func @transform_4(%arg0: i32, %arg1: i32) -> (i32, i32) {
    %c0_i32 = arith.constant 0 : i32
    %c0_i32_0 = arith.constant 0 : i32
    %c0_i32_1 = arith.constant 0 : i32
    return %c0_i32, %c0_i32_0 : i32, i32
  }
  func.func @transform_5(%arg0: i32, %arg1: i32) -> (i32, i32) {
    %c0_i32 = arith.constant 0 : i32
    %c0_i32_0 = arith.constant 0 : i32
    %c0_i32_1 = arith.constant 0 : i32
    return %c0_i32, %c0_i32_0 : i32, i32
  }
  func.func @transform_6(%arg0: i32, %arg1: i32) -> (i32, i32) {
    %c0_i32 = arith.constant 0 : i32
    %c0_i32_0 = arith.constant 0 : i32
    %c0_i32_1 = arith.constant 0 : i32
    return %c0_i32, %c0_i32_0 : i32, i32
  }
  func.func @transform_7(%arg0: i32, %arg1: i32) -> (i32, i32) {
    %c0_i32 = arith.constant 0 : i32
    %c0_i32_0 = arith.constant 0 : i32
    %c0_i32_1 = arith.constant 0 : i32
    return %c0_i32, %c0_i32_0 : i32, i32
  }
  func.func @transform_8(%arg0: i32, %arg1: i32) -> (i32, i32) {
    %c0_i32 = arith.constant 0 : i32
    %c0_i32_0 = arith.constant 0 : i32
    %c0_i32_1 = arith.constant 0 : i32
    return %c0_i32, %c0_i32_0 : i32, i32
  }
  func.func @transform_9(%arg0: i32, %arg1: i32) -> (i32, i32, i32, i32) {
    %c0_i32 = arith.constant 0 : i32
    %c0_i32_0 = arith.constant 0 : i32
    %c0_i32_1 = arith.constant 0 : i32
    return %arg1, %arg0, %c0_i32, %c0_i32_0 : i32, i32, i32, i32
  }
  func.func @transform_10(%arg0: i32, %arg1: i32) -> (i32, i32, i32, i32) {
    %c0_i32 = arith.constant 0 : i32
    %c0_i32_0 = arith.constant 0 : i32
    %c0_i32_1 = arith.constant 0 : i32
    return %arg1, %arg0, %c0_i32, %c0_i32_0 : i32, i32, i32, i32
  }
}

</mosaic_0001>

<llo_original>
// kernel: tpu_custom_call.1
$region0: #{tpu_custom_call.1}
  #allocation0 [shape = 'u32[]', space=smem, size = 0x4, offset = 0x4, fixed_abs, tag = 'smem constant byte address 0x4 - core index']
  #allocation1 [shape = 'u32[144,128]{1,0:T(1,128)}', space=vmem, size = 0x12000, scoped, tag = 'internal scratch']
  %s0 = inlined_call_operand.vmem [shape: f32[32,32], index: 0, kind: input, shape index: {}]
  %s1 = inlined_call_operand.hbm [shape: f32[3,4,8,8], index: 1, kind: input, shape index: {}]
  %s2 = inlined_call_operand.hbm [shape: f32[32,32], index: 2, kind: input, shape index: {}]
  %s3 = inlined_call_operand.vmem [shape: f32[1,32], index: 3, kind: input, shape index: {}]
  %s4 = inlined_call_operand.hbm [shape: f32[32,96], index: 4, kind: input, shape index: {}]
  %s5 = inlined_call_operand.vmem [shape: f32[32,32], index: 5, kind: input, shape index: {}]
  %s6 = inlined_call_operand.vmem [shape: f32[1,32], index: 6, kind: input, shape index: {}]
  %s7 = inlined_call_operand.vmem [shape: f32[32,16], index: 7, kind: input, shape index: {}]
  %s8 = inlined_call_operand.vmem [shape: f32[1,16], index: 8, kind: input, shape index: {}]
  %s9 = inlined_call_operand.hbm [shape: f32[3,4,8,16], index: 9, kind: output, shape index: {0}]
  %s10 = inlined_call_operand.hbm [shape: f32[3,4,8,32], index: 10, kind: output, shape index: {1}]
  %11 = xla_tuple %s9, %s10
  %s12 = sld [smem:[#allocation0]]
  $region89: #{tpu_custom_call.1} parent=0
    _
  %s14 = ssub.s32 1, %s12
  %s15 = scalar_select 0, %s14, %s12
  $region1: #{tpu_custom_call.1} parent=0
    #allocation2 [shape = 'u8[32768]{0}', space=vmem, size = 0x8000, scoped, tag = 'input window, operand 1']
    #allocation3 [shape = 's32[2]{0}', space=sflag, size = 0x8, scoped, tag = 'scoped memory for tpu_custom_call.1']
    #allocation4 [shape = 's32[2]{0}', space=sflag, size = 0x8, scoped, tag = 'scoped memory for tpu_custom_call.1']
    #allocation5 [shape = 'u8[16384]{0}', space=vmem, size = 0x4000, scoped, tag = 'input window, operand 2, single buffered']
    #allocation6 [shape = 's32[1]{0}', space=sflag, size = 0x4, scoped, tag = 'scoped memory for tpu_custom_call.1']
    #allocation7 [shape = 'u8[16384]{0}', space=vmem, size = 0x4000, scoped, tag = 'input window, operand 4, single buffered']
    #allocation8 [shape = 'u8[32768]{0}', space=vmem, size = 0x8000, scoped, tag = 'output window, operand 0']
    #allocation9 [shape = 'u8[32768]{0}', space=vmem, size = 0x8000, scoped, tag = 'output window, operand 1']
    #allocation10 [shape = 's32[2]{0}', space=sflag, size = 0x8, scoped, tag = 'scoped memory for tpu_custom_call.1']
    %16 = vsyncpa [#allocation3], 0
    %s17 = scalar_lea.sflag [#allocation3], 1
    %18 = vsyncpa %s17, 0
    %19 = vsyncpa [#allocation6], 0
    %20 = vsyncpa [#allocation4], 0
    %s21 = scalar_lea.sflag [#allocation4], 1
    %22 = vsyncpa %s21, 0
    %23 = vsyncpa [#allocation10], 0
    %s24 = scalar_lea.sflag [#allocation10], 1
    %25 = vsyncpa %s24, 0
    loop: start=0, step=1, limit=5
    $region2: #{tpu_custom_call.1} parent=1 // loop_pre_header
      _
    $region3: #{tpu_custom_call.1} parent=1 // loop_header
      %s27 = sphi 0, %s31
      %p28 = scmp.ge.s32.totalorder %s27, 5
      %s34 = sphi 0, %s46
      %s35 = sphi 0, %s42
      %s36 = sphi 0, %s34
      %s37 = sphi 0, %s35
      %s38 = sphi 0, %s36
      %s39 = sphi 0, %s37
      %s49 = sphi 0, %s51
      %s52 = sphi 0, %s49
      %s53 = sphi 0, %s52
      %s69 = sphi 0, %s53
      %s77 = sphi 0, %s79
      %s80 = sphi 0, %s77
      %s81 = sphi 0, %s80
      %s97 = sphi 0, %s81
      %s101 = sphi 0, %s101
      %s103 = sphi 0, %s101
      %s104 = sphi 0, %s103
      %s118 = sphi 0, %s104
      %s122 = sphi 0, %s122
      %s124 = sphi 0, %s122
      %s125 = sphi 0, %s124
      %s139 = sphi 0, %s125
      %s143 = sphi 0, %s143
      %s145 = sphi 0, %s143
      %s146 = sphi 0, %s145
      %s160 = sphi 0, %s146
      %s164 = sphi 0, %s164
      %s166 = sphi 0, %s164
      %s167 = sphi 0, %s166
      %s181 = sphi 0, %s167
      %s185 = sphi 0, %s185
      %s187 = sphi 0, %s185
      %s188 = sphi 0, %s187
      %s202 = sphi 0, %s188
      %s206 = sphi 0, %s206
      %s208 = sphi 0, %s206
      %s209 = sphi 0, %s208
      %s223 = sphi 0, %s209
      %s227 = sphi 0, %s227
      %s229 = sphi 0, %s227
      %s230 = sphi 0, %s229
      %s244 = sphi 0, %s230
      %s252 = sphi 0, %s254
      %s255 = sphi 0, %s252
      %s256 = sphi 0, %s255
      %s272 = sphi 0, %s256
      %s280 = sphi 0, %s282
      %s283 = sphi 0, %s280
      %s284 = sphi 0, %s283
      %s300 = sphi 0, %s284
    $region4: #{tpu_custom_call.1} parent=1 // loop_header_branch
      %30 = sbr.rel (%p28) target = $region8
    $region5: #{tpu_custom_call.1} parent=1 // loop_body
      %s32 = ssub.s32 %s27, 1
      %s33 = ssub.s32 %s27, 2
      %s40 = sadd.s32 1, %s35
      %p41 = scmp.ge.s32.totalorder %s40, 3
      %s42 = scalar_select %p41, 0, %s40
      %s43 = sadd.s32 1, %s34
      %s44 = scalar_select %p41, %s43, %s34
      %p45 = scmp.ge.s32.totalorder %s44, 1
      %s46 = scalar_select %p45, 0, %s44
      %s47 = ssub.s32 %s34, %s46
      %p48 = scmp.eq.s32.totalorder %s47, 0
      %s50 = sadd.s32 %s49, 1
      %s51 = scalar_select %p48, %s49, %s50
      %p54 = pneg %p48
      %p55 = scmp.eq.s32.totalorder %s27, 2
      %p56 = por %p54, %p55
      %p57 = scmp.ne.s32.totalorder %s49, %s52
      %p58 = scmp.eq.s32.totalorder %s27, 0
      %p59 = por %p57, %p58
      %p60 = scmp.ne.s32.totalorder %s49, %s52
      %p61 = scmp.eq.s32.totalorder %s32, 2
      %p62 = por %p60, %p61
      %p63 = scmp.ne.s32.totalorder %s52, %s53
      %p64 = scmp.eq.s32.totalorder %s32, 0
      %p65 = por %p63, %p64
      %p66 = scmp.ne.s32.totalorder %s52, %s53
      %p67 = scmp.eq.s32.totalorder %s33, 2
      %p68 = por %p66, %p67
      %p70 = scmp.ne.s32.totalorder %s53, %s69
      %p71 = scmp.eq.s32.totalorder %s33, 0
      %p72 = por %p70, %p71
      %s73 = ssub.s32 %s35, %s42
      %s74 = ssub.s32 %s34, %s46
      %s75 = sor.u32 %s73, %s74
      %p76 = scmp.eq.s32.totalorder %s75, 0
      %s78 = sadd.s32 %s77, 1
      %s79 = scalar_select %p76, %s77, %s78
      %p82 = pneg %p76
      %p83 = scmp.eq.s32.totalorder %s27, 2
      %p84 = por %p82, %p83
      %p85 = scmp.ne.s32.totalorder %s77, %s80
      %p86 = scmp.eq.s32.totalorder %s27, 0
      %p87 = por %p85, %p86
      %p88 = scmp.ne.s32.totalorder %s77, %s80
      %p89 = scmp.eq.s32.totalorder %s32, 2
      %p90 = por %p88, %p89
      %p91 = scmp.ne.s32.totalorder %s80, %s81
      %p92 = scmp.eq.s32.totalorder %s32, 0
      %p93 = por %p91, %p92
      %p94 = scmp.ne.s32.totalorder %s80, %s81
      %p95 = scmp.eq.s32.totalorder %s33, 2
      %p96 = por %p94, %p95
      %p98 = scmp.ne.s32.totalorder %s81, %s97
      %p99 = scmp.eq.s32.totalorder %s33, 0
      %p100 = por %p98, %p99
      %s102 = sadd.s32 %s101, 1
      %p105 = scmp.eq.s32.totalorder %s27, 2
      %p106 = scmp.ne.s32.totalorder %s101, %s103
      %p107 = scmp.eq.s32.totalorder %s27, 0
      %p108 = por %p106, %p107
      %p109 = scmp.ne.s32.totalorder %s101, %s103
      %p110 = scmp.eq.s32.totalorder %s32, 2
      %p111 = por %p109, %p110
      %p112 = scmp.ne.s32.totalorder %s103, %s104
      %p113 = scmp.eq.s32.totalorder %s32, 0
      %p114 = por %p112, %p113
      %p115 = scmp.ne.s32.totalorder %s103, %s104
      %p116 = scmp.eq.s32.totalorder %s33, 2
      %p117 = por %p115, %p116
      %p119 = scmp.ne.s32.totalorder %s104, %s118
      %p120 = scmp.eq.s32.totalorder %s33, 0
      %p121 = por %p119, %p120
      %s123 = sadd.s32 %s122, 1
      %p126 = scmp.eq.s32.totalorder %s27, 2
      %p127 = scmp.ne.s32.totalorder %s122, %s124
      %p128 = scmp.eq.s32.totalorder %s27, 0
      %p129 = por %p127, %p128
      %p130 = scmp.ne.s32.totalorder %s122, %s124
      %p131 = scmp.eq.s32.totalorder %s32, 2
      %p132 = por %p130, %p131
      %p133 = scmp.ne.s32.totalorder %s124, %s125
      %p134 = scmp.eq.s32.totalorder %s32, 0
      %p135 = por %p133, %p134
      %p136 = scmp.ne.s32.totalorder %s124, %s125
      %p137 = scmp.eq.s32.totalorder %s33, 2
      %p138 = por %p136, %p137
      %p140 = scmp.ne.s32.totalorder %s125, %s139
      %p141 = scmp.eq.s32.totalorder %s33, 0
      %p142 = por %p140, %p141
      %s144 = sadd.s32 %s143, 1
      %p147 = scmp.eq.s32.totalorder %s27, 2
      %p148 = scmp.ne.s32.totalorder %s143, %s145
      %p149 = scmp.eq.s32.totalorder %s27, 0
      %p150 = por %p148, %p149
      %p151 = scmp.ne.s32.totalorder %s143, %s145
      %p152 = scmp.eq.s32.totalorder %s32, 2
      %p153 = por %p151, %p152
      %p154 = scmp.ne.s32.totalorder %s145, %s146
      %p155 = scmp.eq.s32.totalorder %s32, 0
      %p156 = por %p154, %p155
      %p157 = scmp.ne.s32.totalorder %s145, %s146
      %p158 = scmp.eq.s32.totalorder %s33, 2
      %p159 = por %p157, %p158
      %p161 = scmp.ne.s32.totalorder %s146, %s160
      %p162 = scmp.eq.s32.totalorder %s33, 0
      %p163 = por %p161, %p162
      %s165 = sadd.s32 %s164, 1
      %p168 = scmp.eq.s32.totalorder %s27, 2
      %p169 = scmp.ne.s32.totalorder %s164, %s166
      %p170 = scmp.eq.s32.totalorder %s27, 0
      %p171 = por %p169, %p170
      %p172 = scmp.ne.s32.totalorder %s164, %s166
      %p173 = scmp.eq.s32.totalorder %s32, 2
      %p174 = por %p172, %p173
      %p175 = scmp.ne.s32.totalorder %s166, %s167
      %p176 = scmp.eq.s32.totalorder %s32, 0
      %p177 = por %p175, %p176
      %p178 = scmp.ne.s32.totalorder %s166, %s167
      %p179 = scmp.eq.s32.totalorder %s33, 2
      %p180 = por %p178, %p179
      %p182 = scmp.ne.s32.totalorder %s167, %s181
      %p183 = scmp.eq.s32.totalorder %s33, 0
      %p184 = por %p182, %p183
      %s186 = sadd.s32 %s185, 1
      %p189 = scmp.eq.s32.totalorder %s27, 2
      %p190 = scmp.ne.s32.totalorder %s185, %s187
      %p191 = scmp.eq.s32.totalorder %s27, 0
      %p192 = por %p190, %p191
      %p193 = scmp.ne.s32.totalorder %s185, %s187
      %p194 = scmp.eq.s32.totalorder %s32, 2
      %p195 = por %p193, %p194
      %p196 = scmp.ne.s32.totalorder %s187, %s188
      %p197 = scmp.eq.s32.totalorder %s32, 0
      %p198 = por %p196, %p197
      %p199 = scmp.ne.s32.totalorder %s187, %s188
      %p200 = scmp.eq.s32.totalorder %s33, 2
      %p201 = por %p199, %p200
      %p203 = scmp.ne.s32.totalorder %s188, %s202
      %p204 = scmp.eq.s32.totalorder %s33, 0
      %p205 = por %p203, %p204
      %s207 = sadd.s32 %s206, 1
      %p210 = scmp.eq.s32.totalorder %s27, 2
      %p211 = scmp.ne.s32.totalorder %s206, %s208
      %p212 = scmp.eq.s32.totalorder %s27, 0
      %p213 = por %p211, %p212
      %p214 = scmp.ne.s32.totalorder %s206, %s208
      %p215 = scmp.eq.s32.totalorder %s32, 2
      %p216 = por %p214, %p215
      %p217 = scmp.ne.s32.totalorder %s208, %s209
      %p218 = scmp.eq.s32.totalorder %s32, 0
      %p219 = por %p217, %p218
      %p220 = scmp.ne.s32.totalorder %s208, %s209
      %p221 = scmp.eq.s32.totalorder %s33, 2
      %p222 = por %p220, %p221
      %p224 = scmp.ne.s32.totalorder %s209, %s223
      %p225 = scmp.eq.s32.totalorder %s33, 0
      %p226 = por %p224, %p225
      %s228 = sadd.s32 %s227, 1
      %p231 = scmp.eq.s32.totalorder %s27, 2
      %p232 = scmp.ne.s32.totalorder %s227, %s229
      %p233 = scmp.eq.s32.totalorder %s27, 0
      %p234 = por %p232, %p233
      %p235 = scmp.ne.s32.totalorder %s227, %s229
      %p236 = scmp.eq.s32.totalorder %s32, 2
      %p237 = por %p235, %p236
      %p238 = scmp.ne.s32.totalorder %s229, %s230
      %p239 = scmp.eq.s32.totalorder %s32, 0
      %p240 = por %p238, %p239
      %p241 = scmp.ne.s32.totalorder %s229, %s230
      %p242 = scmp.eq.s32.totalorder %s33, 2
      %p243 = por %p241, %p242
      %p245 = scmp.ne.s32.totalorder %s230, %s244
      %p246 = scmp.eq.s32.totalorder %s33, 0
      %p247 = por %p245, %p246
      %s248 = ssub.s32 %s35, %s42
      %s249 = ssub.s32 %s34, %s46
      %s250 = sor.u32 %s248, %s249
      %p251 = scmp.eq.s32.totalorder %s250, 0
      %s253 = sadd.s32 %s252, 1
      %s254 = scalar_select %p251, %s252, %s253
      %p257 = pneg %p251
      %p258 = scmp.eq.s32.totalorder %s27, 2
      %p259 = por %p257, %p258
      %p260 = scmp.ne.s32.totalorder %s252, %s255
      %p261 = scmp.eq.s32.totalorder %s27, 0
      %p262 = por %p260, %p261
      %p263 = scmp.ne.s32.totalorder %s252, %s255
      %p264 = scmp.eq.s32.totalorder %s32, 2
      %p265 = por %p263, %p264
      %p266 = scmp.ne.s32.totalorder %s255, %s256
      %p267 = scmp.eq.s32.totalorder %s32, 0
      %p268 = por %p266, %p267
      %p269 = scmp.ne.s32.totalorder %s255, %s256
      %p270 = scmp.eq.s32.totalorder %s33, 2
      %p271 = por %p269, %p270
      %p273 = scmp.ne.s32.totalorder %s256, %s272
      %p274 = scmp.eq.s32.totalorder %s33, 0
      %p275 = por %p273, %p274
      %s276 = ssub.s32 %s35, %s42
      %s277 = ssub.s32 %s34, %s46
      %s278 = sor.u32 %s276, %s277
      %p279 = scmp.eq.s32.totalorder %s278, 0
      %s281 = sadd.s32 %s280, 1
      %s282 = scalar_select %p279, %s280, %s281
      %p285 = pneg %p279
      %p286 = scmp.eq.s32.totalorder %s27, 2
      %p287 = por %p285, %p286
      %p288 = scmp.ne.s32.totalorder %s280, %s283
      %p289 = scmp.eq.s32.totalorder %s27, 0
      %p290 = por %p288, %p289
      %p291 = scmp.ne.s32.totalorder %s280, %s283
      %p292 = scmp.eq.s32.totalorder %s32, 2
      %p293 = por %p291, %p292
      %p294 = scmp.ne.s32.totalorder %s283, %s284
      %p295 = scmp.eq.s32.totalorder %s32, 0
      %p296 = por %p294, %p295
      %p297 = scmp.ne.s32.totalorder %s283, %s284
      %p298 = scmp.eq.s32.totalorder %s33, 2
      %p299 = por %p297, %p298
      %p301 = scmp.ne.s32.totalorder %s284, %s300
      %p302 = scmp.eq.s32.totalorder %s33, 0
      %p303 = por %p301, %p302
      %p304 = scmp.le.s32.totalorder 1, %s27
      %p305 = scmp.lt.s32.totalorder %s27, 4
      %p306 = pnand %p304, %p305
      %p307 = pneg %p306
      // Predicated region
      $region9: #{tpu_custom_call.1} parent=5 // pred_check
        _
      $region10: #{tpu_custom_call.1} parent=5 // pred_check_branch
        %309 = sbr.rel (%p306) target = $region12
      $region11: #{tpu_custom_call.1} parent=5 // pred_region
        %s310 = ssub.s32 %s27, 1
        // Predicated region
        $region13: #{tpu_custom_call.1} parent=11 // pred_check
          %p311 = pneg %p65
        $region14: #{tpu_custom_call.1} parent=11 // pred_check_branch
          %313 = sbr.rel (%p311) target = $region16
        $region15: #{tpu_custom_call.1} parent=11 // pred_region
          %s314 = smul.u32 4, %s36
          %p315 = scmp.lt.s32.totalorder %s314, 3
          %s316 = scalar_select %p315, %s314, 3
          %s317 = smul.addr %s316, 8
          %s318 = scalar_lea.vmem %s0, %s317
          %s319 = smul.u32 4, %s36
        $region16: #{tpu_custom_call.1} parent=11 // pred_fallthru
          _
        // Predicated region
        $region17: #{tpu_custom_call.1} parent=11 // pred_check
          %p320 = pneg %p114
        $region18: #{tpu_custom_call.1} parent=11 // pred_check_branch
          %322 = sbr.rel (%p320) target = $region20
        $region19: #{tpu_custom_call.1} parent=11 // pred_region
          %s324 = ssub.s32 512, 512
          %325 = vsyncadd [#allocation6], %s324
          %s326 = sshll.u32 [#allocation5], 4
          %s327 = int_to_ptr.vmem [resolvable:$true] %s326
          %332 = dma.hbm_to_vmem [thread:$0]  %s2, 512, %s327, [#allocation6], 128, 128, 8
        $region20: #{tpu_custom_call.1} parent=11 // pred_fallthru
          _
        // Predicated region
        $region21: #{tpu_custom_call.1} parent=11 // pred_check
          %p333 = pneg %p135
        $region22: #{tpu_custom_call.1} parent=11 // pred_check_branch
          %335 = sbr.rel (%p333) target = $region24
        $region23: #{tpu_custom_call.1} parent=11 // pred_region
          _
        $region24: #{tpu_custom_call.1} parent=11 // pred_fallthru
          _
        // Predicated region
        $region25: #{tpu_custom_call.1} parent=11 // pred_check
          %p336 = pneg %p156
        $region26: #{tpu_custom_call.1} parent=11 // pred_check_branch
          %338 = sbr.rel (%p336) target = $region28
        $region27: #{tpu_custom_call.1} parent=11 // pred_region
          %s340 = ssub.s32 512, 512
          %341 = vsyncadd [#allocation6], %s340
          %s342 = sshll.u32 [#allocation7], 4
          %s343 = int_to_ptr.vmem [resolvable:$true] %s342
          %348 = dma.hbm_to_vmem [thread:$0]  %s4, 512, %s343, [#allocation6], 128, 128, 8
        $region28: #{tpu_custom_call.1} parent=11 // pred_fallthru
          _
        // Predicated region
        $region29: #{tpu_custom_call.1} parent=11 // pred_check
          %p349 = pneg %p177
        $region30: #{tpu_custom_call.1} parent=11 // pred_check_branch
          %351 = sbr.rel (%p349) target = $region32
        $region31: #{tpu_custom_call.1} parent=11 // pred_region
          _
        $region32: #{tpu_custom_call.1} parent=11 // pred_fallthru
          _
        // Predicated region
        $region33: #{tpu_custom_call.1} parent=11 // pred_check
          %p352 = pneg %p198
        $region34: #{tpu_custom_call.1} parent=11 // pred_check_branch
          %354 = sbr.rel (%p352) target = $region36
        $region35: #{tpu_custom_call.1} parent=11 // pred_region
          _
        $region36: #{tpu_custom_call.1} parent=11 // pred_fallthru
          _
        // Predicated region
        $region37: #{tpu_custom_call.1} parent=11 // pred_check
          %p355 = pneg %p219
        $region38: #{tpu_custom_call.1} parent=11 // pred_check_branch
          %357 = sbr.rel (%p355) target = $region40
        $region39: #{tpu_custom_call.1} parent=11 // pred_region
          _
        $region40: #{tpu_custom_call.1} parent=11 // pred_fallthru
          _
        // Predicated region
        $region41: #{tpu_custom_call.1} parent=11 // pred_check
          %p358 = pneg %p240
        $region42: #{tpu_custom_call.1} parent=11 // pred_check_branch
          %360 = sbr.rel (%p358) target = $region44
        $region43: #{tpu_custom_call.1} parent=11 // pred_region
          _
        $region44: #{tpu_custom_call.1} parent=11 // pred_fallthru
          _
      $region12: #{tpu_custom_call.1} parent=5 // pred_fallthru
        _
      %p361 = scmp.lt.s32.totalorder %s27, 3
      // Predicated region
      $region45: #{tpu_custom_call.1} parent=5 // pred_check
        %p362 = pneg %p361
      $region46: #{tpu_custom_call.1} parent=5 // pred_check_branch
        %364 = sbr.rel (%p362) target = $region48
      $region47: #{tpu_custom_call.1} parent=5 // pred_region
        // Predicated region
        $region49: #{tpu_custom_call.1} parent=47 // pred_check
          %p365 = pneg %p87
        $region50: #{tpu_custom_call.1} parent=47 // pred_check_branch
          %367 = sbr.rel (%p365) target = $region52
        $region51: #{tpu_custom_call.1} parent=47 // pred_region
          %s368 = sand.u32 %s77, 1
          %s369 = scalar_lea.sflag [#allocation3], %s368
          %s370 = sand.u32 %s77, 1
          %s371 = smul.addr %s370, 32
          %s372 = scalar_lea.vmem [#allocation2], %s371
          %s373 = smul.u32 4, %s34
          %s375 = ssub.s32 512, 512
          %376 = vsyncadd %s369, %s375
          %s377 = smul.addr %s35, 4
          %s378 = sadd.s32 %s373, %s377
          %s379 = smul.addr %s378, 128
          %s380 = scalar_lea.hbm %s1, %s379
          %s381 = sshll.u32 %s372, 4
          %s382 = int_to_ptr.vmem [resolvable:$true] %s381
          %387 = dma.hbm_to_vmem [thread:$0]  %s380, 512, %s382, %s369, 128, 128, 8
        $region52: #{tpu_custom_call.1} parent=47 // pred_fallthru
          _
      $region48: #{tpu_custom_call.1} parent=5 // pred_fallthru
        _
      %p388 = scmp.le.s32.totalorder 1, %s27
      %p389 = scmp.lt.s32.totalorder %s27, 4
      %p390 = pnand %p388, %p389
      %p391 = pneg %p390
      // Predicated region
      $region53: #{tpu_custom_call.1} parent=5 // pred_check
        _
      $region54: #{tpu_custom_call.1} parent=5 // pred_check_branch
        %393 = sbr.rel (%p390) target = $region56
      $region55: #{tpu_custom_call.1} parent=5 // pred_region
        %s394 = ssub.s32 %s27, 1
        %s395 = sand.u32 %s80, 1
        %s396 = scalar_lea.sflag [#allocation3], %s395
        %s397 = sand.u32 %s80, 1
        %s398 = smul.addr %s397, 32
        %s399 = scalar_lea.vmem [#allocation2], %s398
        // Predicated region
        $region57: #{tpu_custom_call.1} parent=55 // pred_check
          %p400 = pneg %p93
        $region58: #{tpu_custom_call.1} parent=55 // pred_check_branch
          %402 = sbr.rel (%p400) target = $region60
        $region59: #{tpu_custom_call.1} parent=55 // pred_region
          %403 = dma.done %s396, 512
        $region60: #{tpu_custom_call.1} parent=55 // pred_fallthru
          _
        // Predicated region
        $region61: #{tpu_custom_call.1} parent=55 // pred_check
          %p404 = pneg %p114
        $region62: #{tpu_custom_call.1} parent=55 // pred_check_branch
          %406 = sbr.rel (%p404) target = $region64
        $region63: #{tpu_custom_call.1} parent=55 // pred_region
          %407 = dma.done [#allocation6], 512
        $region64: #{tpu_custom_call.1} parent=55 // pred_fallthru
          _
        // Predicated region
        $region65: #{tpu_custom_call.1} parent=55 // pred_check
          %p408 = pneg %p156
        $region66: #{tpu_custom_call.1} parent=55 // pred_check_branch
          %410 = sbr.rel (%p408) target = $region68
        $region67: #{tpu_custom_call.1} parent=55 // pred_region
          %411 = dma.done [#allocation6], 512
        $region68: #{tpu_custom_call.1} parent=55 // pred_fallthru
          _
        %s412 = smul.u32 4, %s36
        %p413 = scmp.lt.s32.totalorder %s412, 3
        %s414 = scalar_select %p413, %s412, 3
        %s415 = smul.addr %s414, 8
        %s416 = scalar_lea.vmem %s0, %s415
        %p417 = pneg %p65
        %p418 = pneg %p62
        %s419 = sand.u32 %s80, 1
        %s420 = scalar_lea.sflag [#allocation3], %s419
        %s421 = sand.u32 %s80, 1
        %s422 = smul.addr %s421, 32
        %s423 = scalar_lea.vmem [#allocation2], %s422
        %p424 = pneg %p93
        %p425 = pneg %p90
        %p426 = pneg %p114
        %p427 = pneg %p111
        %p428 = pneg %p135
        %p429 = pneg %p132
        %p430 = pneg %p156
        %p431 = pneg %p153
        %p432 = pneg %p177
        %p433 = pneg %p174
        %p434 = pneg %p198
        %p435 = pneg %p195
        %p436 = pneg %p219
        %p437 = pneg %p216
        %p438 = pneg %p240
        %p439 = pneg %p237
        %p440 = pneg %p268
        %p441 = pneg %p265
        %s442 = sand.u32 %s255, 1
        %s443 = scalar_lea.sflag [#allocation4], %s442
        %s444 = sand.u32 %s255, 1
        %s445 = smul.addr %s444, 32
        %s446 = scalar_lea.vmem [#allocation8], %s445
        %p447 = pneg %p296
        %p448 = pneg %p293
        %s449 = sand.u32 %s283, 1
        %s450 = scalar_lea.sflag [#allocation10], %s449
        %s451 = sand.u32 %s283, 1
        %s452 = smul.addr %s451, 32
        %s453 = scalar_lea.vmem [#allocation9], %s452
        %s454 = smul.u32 4, %s36
        %p455 = scmp.lt.s32.totalorder %s454, 3
        %s456 = scalar_select %p455, %s454, 3
        %s457 = smul.addr %s456, 8
        %s458 = scalar_lea.vmem %s0, %s457
        %s459 = smul.u32 4, %s36
        %s460 = smul.u32 4, %s36
        %s461 = smul.u32 4, %s36
        %s462 = smul.u32 4, %s36
        %v463 = vld [vmem:[%s458] sm:$0xff]
        %v464 = vld [vmem:[%s458 + $0x8] sm:$0xff]
        %v465 = vld [vmem:[%s458 + $0x10] sm:$0xff]
        %v466 = vld [vmem:[%s458 + $0x18] sm:$0xff]
        %v467 = vld [vmem:[#allocation5] sm:$0xff]
        %v468 = vld [vmem:[#allocation5 + $0x8] sm:$0xff]
        %v469 = vld [vmem:[#allocation5 + $0x10] sm:$0xff]
        %v470 = vld [vmem:[#allocation5 + $0x18] sm:$0xff]
        %v471 = vld [vmem:[%s3] sm:$0x1]
        %v473 = vlaneseq
        %v474 = vshrl.u32 %v473, 7
        %v475 = vsub.s32 0, %v474
        %v476 = vrot.slane %v471, %v475
        %vm478 = vcmask 261120
        %v480 = vsel %vm478, %v463, 0
        %v483 = vsel %vm478, %v464, 0
        %v486 = vsel %vm478, %v465, 0
        %v489 = vsel %vm478, %v466, 0
        %491 = vmatprep.subr.mxu0 0.0
        %v492 = vand.u32 %v467, 4294901760
        %493 = vmatpush1.msra.mxu0 %v492
        %494 = vmatprep.subr.mxu0 0.0
        %v495 = vand.u32 %v468, 4294901760
        %496 = vmatpush1.msra.mxu0 %v495
        %497 = vmatprep.subr.mxu0 0.0
        %v498 = vand.u32 %v469, 4294901760
        %499 = vmatpush1.msra.mxu0 %v498
        %500 = vmatprep.subr.mxu0 0.0
        %v501 = vand.u32 %v470, 4294901760
        %502 = vmatpush1.msra.mxu0 %v501
        %503 = vmatprep.subr.mxu0 0.0
        %504 = vmatpush1.msra.mxu0 0.0
        %505 = vmatprep.subr.mxu0 0.0
        %506 = vmatpush1.msra.mxu0 0.0
        %507 = vmatprep.subr.mxu0 0.0
        %508 = vmatpush1.msra.mxu0 0.0
        %509 = vmatprep.subr.mxu0 0.0
        %510 = vmatpush1.msra.mxu0 0.0
        %511 = vmatprep.subr.mxu0 0.0
        %512 = vmatpush1.msra.mxu0 0.0
        %513 = vmatprep.subr.mxu0 0.0
        %514 = vmatpush1.msra.mxu0 0.0
        %515 = vmatprep.subr.mxu0 0.0
        %516 = vmatpush1.msra.mxu0 0.0
        %517 = vmatprep.subr.mxu0 0.0
        %518 = vmatpush1.msra.mxu0 0.0
        %519 = vmatprep.subr.mxu0 0.0
        %520 = vmatpush1.msra.mxu0 0.0
        %521 = vmatprep.subr.mxu0 0.0
        %522 = vmatpush1.msra.mxu0 0.0
        %523 = vmatprep.subr.mxu0 0.0
        %524 = vmatpush1.msra.mxu0 0.0
        %525 = vmatprep.subr.mxu0 0.0
        %526 = vmatpush1.msra.mxu0 0.0
        %527 = vmatprep.subr.mxu0 0.0
        %528 = vmatpush1.msra.mxu0 0.0
        %529 = vmatprep.subr.mxu0 0.0
        %530 = vmatpush1.msra.mxu0 0.0
        %531 = vmatprep.subr.mxu0 0.0
        %532 = vmatpush1.msra.mxu0 0.0
        %533 = vmatprep.subr.mxu0 0.0
        %534 = vmatpush1.msra.mxu0 0.0
        %535 = vmatprep.subr.mxu0 0.0
        %536 = vmatpush1.msra.mxu0 0.0
        %537 = vmatprep.subr.mxu0 0.0
        %538 = vmatpush1.msra.mxu0 0.0
        %539 = vmatprep.subr.mxu0 0.0
        %540 = vmatpush1.msra.mxu0 0.0
        %541 = vmatprep.subr.mxu0 0.0
        %542 = vmatpush1.msra.mxu0 0.0
        %543 = vmatprep.subr.mxu0 0.0
        %544 = vmatpush1.msra.mxu0 0.0
        %545 = vmatprep.subr.mxu0 0.0
        %546 = vmatpush1.msra.mxu0 0.0
        %547 = vmatprep.subr.mxu0 0.0
        %548 = vmatpush1.msra.mxu0 0.0
        %549 = vmatprep.subr.mxu0 0.0
        %550 = vmatpush1.msra.mxu0 0.0
        %551 = vmatprep.subr.mxu0 0.0
        %552 = vmatpush1.msra.mxu0 0.0
        %553 = vmatprep.subr.mxu0 0.0
        %554 = vmatpush1.msra.mxu0 0.0
        %555 = vmatprep.subr.mxu0 0.0
        %556 = vmatpush1.msra.mxu0 0.0
        %557 = vmatprep.subr.mxu0 0.0
        %558 = vmatpush1.msra.mxu0 0.0
        %559 = vmatprep.mubr.f32.mxu0 0.0
        %v560 = vand.u32 %v480, 4294901760
        %v561 = vsub.f32 %v480, %v560
        %v562 = vand.u32 %v561, 4294901760
        %v563 = vsub.f32 %v561, %v562
        %v564 = vand.u32 %v563, 4294901760
        %565 = vmatmul.mubr.f32.gmra.mrb[0].mxu0 %v564
        %v566 = vpop.f32.mrb[0].mxu0
        %v567 = vadd.f32 %v476, %v566
        %v568 = vpop.f32.mrb[0].mxu0
        %569 = vmatprep.mubr.f32.mxu0 0.0
        %v570 = vand.u32 %v483, 4294901760
        %v571 = vsub.f32 %v483, %v570
        %v572 = vand.u32 %v571, 4294901760
        %v573 = vsub.f32 %v571, %v572
        %v574 = vand.u32 %v573, 4294901760
        %575 = vmatmul.mubr.f32.gmra.mrb[0].mxu0 %v574
        %v576 = vpop.f32.mrb[0].mxu0
        %v577 = vadd.f32 %v476, %v576
        %v578 = vpop.f32.mrb[0].mxu0
        %579 = vmatprep.mubr.f32.mxu0 0.0
        %v580 = vand.u32 %v486, 4294901760
        %v581 = vsub.f32 %v486, %v580
        %v582 = vand.u32 %v581, 4294901760
        %v583 = vsub.f32 %v581, %v582
        %v584 = vand.u32 %v583, 4294901760
        %585 = vmatmul.mubr.f32.gmra.mrb[0].mxu0 %v584
        %v586 = vpop.f32.mrb[0].mxu0
        %v587 = vadd.f32 %v476, %v586
        %v588 = vpop.f32.mrb[0].mxu0
        %589 = vmatprep.mubr.f32.mxu0 0.0
        %v590 = vand.u32 %v489, 4294901760
        %v591 = vsub.f32 %v489, %v590
        %v592 = vand.u32 %v591, 4294901760
        %v593 = vsub.f32 %v591, %v592
        %v594 = vand.u32 %v593, 4294901760
        %595 = vmatmul.mubr.f32.gmra.mrb[0].mxu0 %v594
        %v596 = vpop.f32.mrb[0].mxu0
        %v597 = vadd.f32 %v476, %v596
        %v598 = vpop.f32.mrb[0].mxu0
        %599 = vdwg.mxu0
        %600 = vmatprep.subr.mxu0 0.0
        %v601 = vand.u32 %v467, 4294901760
        %v602 = vsub.f32 %v467, %v601
        %v603 = vand.u32 %v602, 4294901760
        %v604 = vsub.f32 %v602, %v603
        %v605 = vand.u32 %v604, 4294901760
        %606 = vmatpush1.msra.mxu0 %v605
        %607 = vmatprep.subr.mxu0 0.0
        %v608 = vand.u32 %v468, 4294901760
        %v609 = vsub.f32 %v468, %v608
        %v610 = vand.u32 %v609, 4294901760
        %v611 = vsub.f32 %v609, %v610
        %v612 = vand.u32 %v611, 4294901760
        %613 = vmatpush1.msra.mxu0 %v612
        %614 = vmatprep.subr.mxu0 0.0
        %v615 = vand.u32 %v469, 4294901760
        %v616 = vsub.f32 %v469, %v615
        %v617 = vand.u32 %v616, 4294901760
        %v618 = vsub.f32 %v616, %v617
        %v619 = vand.u32 %v618, 4294901760
        %620 = vmatpush1.msra.mxu0 %v619
        %621 = vmatprep.subr.mxu0 0.0
        %v622 = vand.u32 %v470, 4294901760
        %v623 = vsub.f32 %v470, %v622
        %v624 = vand.u32 %v623, 4294901760
        %v625 = vsub.f32 %v623, %v624
        %v626 = vand.u32 %v625, 4294901760
        %627 = vmatpush1.msra.mxu0 %v626
        %628 = vmatprep.subr.mxu0 0.0
        %629 = vmatpush1.msra.mxu0 0.0
        %630 = vmatprep.subr.mxu0 0.0
        %631 = vmatpush1.msra.mxu0 0.0
        %632 = vmatprep.subr.mxu0 0.0
        %633 = vmatpush1.msra.mxu0 0.0
        %634 = vmatprep.subr.mxu0 0.0
        %635 = vmatpush1.msra.mxu0 0.0
        %636 = vmatprep.subr.mxu0 0.0
        %637 = vmatpush1.msra.mxu0 0.0
        %638 = vmatprep.subr.mxu0 0.0
        %639 = vmatpush1.msra.mxu0 0.0
        %640 = vmatprep.subr.mxu0 0.0
        %641 = vmatpush1.msra.mxu0 0.0
        %642 = vmatprep.subr.mxu0 0.0
        %643 = vmatpush1.msra.mxu0 0.0
        %644 = vmatprep.subr.mxu0 0.0
        %645 = vmatpush1.msra.mxu0 0.0
        %646 = vmatprep.subr.mxu0 0.0
        %647 = vmatpush1.msra.mxu0 0.0
        %648 = vmatprep.subr.mxu0 0.0
        %649 = vmatpush1.msra.mxu0 0.0
        %650 = vmatprep.subr.mxu0 0.0
        %651 = vmatpush1.msra.mxu0 0.0
        %652 = vmatprep.subr.mxu0 0.0
        %653 = vmatpush1.msra.mxu0 0.0
        %654 = vmatprep.subr.mxu0 0.0
        %655 = vmatpush1.msra.mxu0 0.0
        %656 = vmatprep.subr.mxu0 0.0
        %657 = vmatpush1.msra.mxu0 0.0
        %658 = vmatprep.subr.mxu0 0.0
        %659 = vmatpush1.msra.mxu0 0.0
        %660 = vmatprep.subr.mxu0 0.0
        %661 = vmatpush1.msra.mxu0 0.0
        %662 = vmatprep.subr.mxu0 0.0
        %663 = vmatpush1.msra.mxu0 0.0
        %664 = vmatprep.subr.mxu0 0.0
        %665 = vmatpush1.msra.mxu0 0.0
        %666 = vmatprep.subr.mxu0 0.0
        %667 = vmatpush1.msra.mxu0 0.0
        %668 = vmatprep.subr.mxu0 0.0
        %669 = vmatpush1.msra.mxu0 0.0
        %670 = vmatprep.subr.mxu0 0.0
        %671 = vmatpush1.msra.mxu0 0.0
        %672 = vmatprep.subr.mxu0 0.0
        %673 = vmatpush1.msra.mxu0 0.0
        %674 = vmatprep.subr.mxu0 0.0
        %675 = vmatpush1.msra.mxu0 0.0
        %676 = vmatprep.subr.mxu0 0.0
        %677 = vmatpush1.msra.mxu0 0.0
        %678 = vmatprep.subr.mxu0 0.0
        %679 = vmatpush1.msra.mxu0 0.0
        %680 = vmatprep.subr.mxu0 0.0
        %681 = vmatpush1.msra.mxu0 0.0
        %682 = vmatprep.subr.mxu0 0.0
        %683 = vmatpush1.msra.mxu0 0.0
        %684 = vmatprep.mubr.f32.mxu0 0.0
        %v685 = vand.u32 %v480, 4294901760
        %686 = vmatmul.mubr.f32.gmra.mrb[0].mxu0 %v685
        %v687 = vpop.f32.mrb[0].mxu0
        %v688 = vadd.f32 %v567, %v687
        %v689 = vpop.f32.mrb[0].mxu0
        %690 = vmatprep.mubr.f32.mxu0 0.0
        %v691 = vand.u32 %v483, 4294901760
        %692 = vmatmul.mubr.f32.gmra.mrb[0].mxu0 %v691
        %v693 = vpop.f32.mrb[0].mxu0
        %v694 = vadd.f32 %v577, %v693
        %v695 = vpop.f32.mrb[0].mxu0
        %696 = vmatprep.mubr.f32.mxu0 0.0
        %v697 = vand.u32 %v486, 4294901760
        %698 = vmatmul.mubr.f32.gmra.mrb[0].mxu0 %v697
        %v699 = vpop.f32.mrb[0].mxu0
        %v700 = vadd.f32 %v587, %v699
        %v701 = vpop.f32.mrb[0].mxu0
        %702 = vmatprep.mubr.f32.mxu0 0.0
        %v703 = vand.u32 %v489, 4294901760
        %704 = vmatmul.mubr.f32.gmra.mrb[0].mxu0 %v703
        %v705 = vpop.f32.mrb[0].mxu0
        %v706 = vadd.f32 %v597, %v705
        %v707 = vpop.f32.mrb[0].mxu0
        %708 = vdwg.mxu0
        %709 = vmatprep.subr.mxu0 0.0
        %v710 = vand.u32 %v467, 4294901760
        %v711 = vsub.f32 %v467, %v710
        %712 = vmatpush1.msra.mxu0 %v711
        %713 = vmatprep.subr.mxu0 0.0
        %v714 = vand.u32 %v468, 4294901760
        %v715 = vsub.f32 %v468, %v714
        %716 = vmatpush1.msra.mxu0 %v715
        %717 = vmatprep.subr.mxu0 0.0
        %v718 = vand.u32 %v469, 4294901760
        %v719 = vsub.f32 %v469, %v718
        %720 = vmatpush1.msra.mxu0 %v719
        %721 = vmatprep.subr.mxu0 0.0
        %v722 = vand.u32 %v470, 4294901760
        %v723 = vsub.f32 %v470, %v722
        %724 = vmatpush1.msra.mxu0 %v723
        %725 = vmatprep.subr.mxu0 0.0
        %726 = vmatpush1.msra.mxu0 0.0
        %727 = vmatprep.subr.mxu0 0.0
        %728 = vmatpush1.msra.mxu0 0.0
        %729 = vmatprep.subr.mxu0 0.0
        %730 = vmatpush1.msra.mxu0 0.0
        %731 = vmatprep.subr.mxu0 0.0
        %732 = vmatpush1.msra.mxu0 0.0
        %733 = vmatprep.subr.mxu0 0.0
        %734 = vmatpush1.msra.mxu0 0.0
        %735 = vmatprep.subr.mxu0 0.0
        %736 = vmatpush1.msra.mxu0 0.0
        %737 = vmatprep.subr.mxu0 0.0
        %738 = vmatpush1.msra.mxu0 0.0
        %739 = vmatprep.subr.mxu0 0.0
        %740 = vmatpush1.msra.mxu0 0.0
        %741 = vmatprep.subr.mxu0 0.0
        %742 = vmatpush1.msra.mxu0 0.0
        %743 = vmatprep.subr.mxu0 0.0
        %744 = vmatpush1.msra.mxu0 0.0
        %745 = vmatprep.subr.mxu0 0.0
        %746 = vmatpush1.msra.mxu0 0.0
        %747 = vmatprep.subr.mxu0 0.0
        %748 = vmatpush1.msra.mxu0 0.0
        %749 = vmatprep.subr.mxu0 0.0
        %750 = vmatpush1.msra.mxu0 0.0
        %751 = vmatprep.subr.mxu0 0.0
        %752 = vmatpush1.msra.mxu0 0.0
        %753 = vmatprep.subr.mxu0 0.0
        %754 = vmatpush1.msra.mxu0 0.0
        %755 = vmatprep.subr.mxu0 0.0
        %756 = vmatpush1.msra.mxu0 0.0
        %757 = vmatprep.subr.mxu0 0.0
        %758 = vmatpush1.msra.mxu0 0.0
        %759 = vmatprep.subr.mxu0 0.0
        %760 = vmatpush1.msra.mxu0 0.0
        %761 = vmatprep.subr.mxu0 0.0
        %762 = vmatpush1.msra.mxu0 0.0
        %763 = vmatprep.subr.mxu0 0.0
        %764 = vmatpush1.msra.mxu0 0.0
        %765 = vmatprep.subr.mxu0 0.0
        %766 = vmatpush1.msra.mxu0 0.0
        %767 = vmatprep.subr.mxu0 0.0
        %768 = vmatpush1.msra.mxu0 0.0
        %769 = vmatprep.subr.mxu0 0.0
        %770 = vmatpush1.msra.mxu0 0.0
        %771 = vmatprep.subr.mxu0 0.0
        %772 = vmatpush1.msra.mxu0 0.0
        %773 = vmatprep.subr.mxu0 0.0
        %774 = vmatpush1.msra.mxu0 0.0
        %775 = vmatprep.subr.mxu0 0.0
        %776 = vmatpush1.msra.mxu0 0.0
        %777 = vmatprep.subr.mxu0 0.0
        %778 = vmatpush1.msra.mxu0 0.0
        %779 = vmatprep.subr.mxu0 0.0
        %780 = vmatpush1.msra.mxu0 0.0
        %781 = vmatprep.mubr.f32.mxu0 0.0
        %v782 = vand.u32 %v480, 4294901760
        %v783 = vsub.f32 %v480, %v782
        %784 = vmatmul.mubr.f32.gmra.mrb[0].mxu0 %v783
        %v785 = vpop.f32.mrb[0].mxu0
        %v786 = vadd.f32 %v688, %v785
        %v787 = vpop.f32.mrb[0].mxu0
        %788 = vmatprep.mubr.f32.mxu0 0.0
        %v789 = vand.u32 %v483, 4294901760
        %v790 = vsub.f32 %v483, %v789
        %791 = vmatmul.mubr.f32.gmra.mrb[0].mxu0 %v790
        %v792 = vpop.f32.mrb[0].mxu0
        %v793 = vadd.f32 %v694, %v792
        %v794 = vpop.f32.mrb[0].mxu0
        %795 = vmatprep.mubr.f32.mxu0 0.0
        %v796 = vand.u32 %v486, 4294901760
        %v797 = vsub.f32 %v486, %v796
        %798 = vmatmul.mubr.f32.gmra.mrb[0].mxu0 %v797
        %v799 = vpop.f32.mrb[0].mxu0
        %v800 = vadd.f32 %v700, %v799
        %v801 = vpop.f32.mrb[0].mxu0
        %802 = vmatprep.mubr.f32.mxu0 0.0
        %v803 = vand.u32 %v489, 4294901760
        %v804 = vsub.f32 %v489, %v803
        %805 = vmatmul.mubr.f32.gmra.mrb[0].mxu0 %v804
        %v806 = vpop.f32.mrb[0].mxu0
        %v807 = vadd.f32 %v706, %v806
        %v808 = vpop.f32.mrb[0].mxu0
        %809 = vdwg.mxu0
        %810 = vmatprep.subr.mxu0 0.0
        %v811 = vand.u32 %v467, 4294901760
        %812 = vmatpush1.msra.mxu0 %v811
        %813 = vmatprep.subr.mxu0 0.0
        %v814 = vand.u32 %v468, 4294901760
        %815 = vmatpush1.msra.mxu0 %v814
        %816 = vmatprep.subr.mxu0 0.0
        %v817 = vand.u32 %v469, 4294901760
        %818 = vmatpush1.msra.mxu0 %v817
        %819 = vmatprep.subr.mxu0 0.0
        %v820 = vand.u32 %v470, 4294901760
        %821 = vmatpush1.msra.mxu0 %v820
        %822 = vmatprep.subr.mxu0 0.0
        %823 = vmatpush1.msra.mxu0 0.0
        %824 = vmatprep.subr.mxu0 0.0
        %825 = vmatpush1.msra.mxu0 0.0
        %826 = vmatprep.subr.mxu0 0.0
        %827 = vmatpush1.msra.mxu0 0.0
        %828 = vmatprep.subr.mxu0 0.0
        %829 = vmatpush1.msra.mxu0 0.0
        %830 = vmatprep.subr.mxu0 0.0
        %831 = vmatpush1.msra.mxu0 0.0
        %832 = vmatprep.subr.mxu0 0.0
        %833 = vmatpush1.msra.mxu0 0.0
        %834 = vmatprep.subr.mxu0 0.0
        %835 = vmatpush1.msra.mxu0 0.0
        %836 = vmatprep.subr.mxu0 0.0
        %837 = vmatpush1.msra.mxu0 0.0
        %838 = vmatprep.subr.mxu0 0.0
        %839 = vmatpush1.msra.mxu0 0.0
        %840 = vmatprep.subr.mxu0 0.0
        %841 = vmatpush1.msra.mxu0 0.0
        %842 = vmatprep.subr.mxu0 0.0
        %843 = vmatpush1.msra.mxu0 0.0
        %844 = vmatprep.subr.mxu0 0.0
        %845 = vmatpush1.msra.mxu0 0.0
        %846 = vmatprep.subr.mxu0 0.0
        %847 = vmatpush1.msra.mxu0 0.0
        %848 = vmatprep.subr.mxu0 0.0
        %849 = vmatpush1.msra.mxu0 0.0
        %850 = vmatprep.subr.mxu0 0.0
        %851 = vmatpush1.msra.mxu0 0.0
        %852 = vmatprep.subr.mxu0 0.0
        %853 = vmatpush1.msra.mxu0 0.0
        %854 = vmatprep.subr.mxu0 0.0
        %855 = vmatpush1.msra.mxu0 0.0
        %856 = vmatprep.subr.mxu0 0.0
        %857 = vmatpush1.msra.mxu0 0.0
        %858 = vmatprep.subr.mxu0 0.0
        %859 = vmatpush1.msra.mxu0 0.0
        %860 = vmatprep.subr.mxu0 0.0
        %861 = vmatpush1.msra.mxu0 0.0
        %862 = vmatprep.subr.mxu0 0.0
        %863 = vmatpush1.msra.mxu0 0.0
        %864 = vmatprep.subr.mxu0 0.0
        %865 = vmatpush1.msra.mxu0 0.0
        %866 = vmatprep.subr.mxu0 0.0
        %867 = vmatpush1.msra.mxu0 0.0
        %868 = vmatprep.subr.mxu0 0.0
        %869 = vmatpush1.msra.mxu0 0.0
        %870 = vmatprep.subr.mxu0 0.0
        %871 = vmatpush1.msra.mxu0 0.0
        %872 = vmatprep.subr.mxu0 0.0
        %873 = vmatpush1.msra.mxu0 0.0
        %874 = vmatprep.subr.mxu0 0.0
        %875 = vmatpush1.msra.mxu0 0.0
        %876 = vmatprep.subr.mxu0 0.0
        %877 = vmatpush1.msra.mxu0 0.0
        %878 = vmatprep.mubr.f32.mxu0 0.0
        %v879 = vand.u32 %v480, 4294901760
        %v880 = vsub.f32 %v480, %v879
        %v881 = vand.u32 %v880, 4294901760
        %882 = vmatmul.mubr.f32.gmra.mrb[0].mxu0 %v881
        %v883 = vpop.f32.mrb[0].mxu0
        %v884 = vadd.f32 %v786, %v883
        %v885 = vpop.f32.mrb[0].mxu0
        %886 = vmatprep.mubr.f32.mxu0 0.0
        %v887 = vand.u32 %v483, 4294901760
        %v888 = vsub.f32 %v483, %v887
        %v889 = vand.u32 %v888, 4294901760
        %890 = vmatmul.mubr.f32.gmra.mrb[0].mxu0 %v889
        %v891 = vpop.f32.mrb[0].mxu0
        %v892 = vadd.f32 %v793, %v891
        %v893 = vpop.f32.mrb[0].mxu0
        %894 = vmatprep.mubr.f32.mxu0 0.0
        %v895 = vand.u32 %v486, 4294901760
        %v896 = vsub.f32 %v486, %v895
        %v897 = vand.u32 %v896, 4294901760
        %898 = vmatmul.mubr.f32.gmra.mrb[0].mxu0 %v897
        %v899 = vpop.f32.mrb[0].mxu0
        %v900 = vadd.f32 %v800, %v899
        %v901 = vpop.f32.mrb[0].mxu0
        %902 = vmatprep.mubr.f32.mxu0 0.0
        %v903 = vand.u32 %v489, 4294901760
        %v904 = vsub.f32 %v489, %v903
        %v905 = vand.u32 %v904, 4294901760
        %906 = vmatmul.mubr.f32.gmra.mrb[0].mxu0 %v905
        %v907 = vpop.f32.mrb[0].mxu0
        %v908 = vadd.f32 %v807, %v907
        %v909 = vpop.f32.mrb[0].mxu0
        %910 = vdwg.mxu0
        %911 = vmatprep.subr.mxu0 0.0
        %v912 = vand.u32 %v467, 4294901760
        %v913 = vsub.f32 %v467, %v912
        %v914 = vand.u32 %v913, 4294901760
        %915 = vmatpush1.msra.mxu0 %v914
        %916 = vmatprep.subr.mxu0 0.0
        %v917 = vand.u32 %v468, 4294901760
        %v918 = vsub.f32 %v468, %v917
        %v919 = vand.u32 %v918, 4294901760
        %920 = vmatpush1.msra.mxu0 %v919
        %921 = vmatprep.subr.mxu0 0.0
        %v922 = vand.u32 %v469, 4294901760
        %v923 = vsub.f32 %v469, %v922
        %v924 = vand.u32 %v923, 4294901760
        %925 = vmatpush1.msra.mxu0 %v924
        %926 = vmatprep.subr.mxu0 0.0
        %v927 = vand.u32 %v470, 4294901760
        %v928 = vsub.f32 %v470, %v927
        %v929 = vand.u32 %v928, 4294901760
        %930 = vmatpush1.msra.mxu0 %v929
        %931 = vmatprep.subr.mxu0 0.0
        %932 = vmatpush1.msra.mxu0 0.0
        %933 = vmatprep.subr.mxu0 0.0
        %934 = vmatpush1.msra.mxu0 0.0
        %935 = vmatprep.subr.mxu0 0.0
        %936 = vmatpush1.msra.mxu0 0.0
        %937 = vmatprep.subr.mxu0 0.0
        %938 = vmatpush1.msra.mxu0 0.0
        %939 = vmatprep.subr.mxu0 0.0
        %940 = vmatpush1.msra.mxu0 0.0
        %941 = vmatprep.subr.mxu0 0.0
        %942 = vmatpush1.msra.mxu0 0.0
        %943 = vmatprep.subr.mxu0 0.0
        %944 = vmatpush1.msra.mxu0 0.0
        %945 = vmatprep.subr.mxu0 0.0
        %946 = vmatpush1.msra.mxu0 0.0
        %947 = vmatprep.subr.mxu0 0.0
        %948 = vmatpush1.msra.mxu0 0.0
        %949 = vmatprep.subr.mxu0 0.0
        %950 = vmatpush1.msra.mxu0 0.0
        %951 = vmatprep.subr.mxu0 0.0
        %952 = vmatpush1.msra.mxu0 0.0
        %953 = vmatprep.subr.mxu0 0.0
        %954 = vmatpush1.msra.mxu0 0.0
        %955 = vmatprep.subr.mxu0 0.0
        %956 = vmatpush1.msra.mxu0 0.0
        %957 = vmatprep.subr.mxu0 0.0
        %958 = vmatpush1.msra.mxu0 0.0
        %959 = vmatprep.subr.mxu0 0.0
        %960 = vmatpush1.msra.mxu0 0.0
        %961 = vmatprep.subr.mxu0 0.0
        %962 = vmatpush1.msra.mxu0 0.0
        %963 = vmatprep.subr.mxu0 0.0
        %964 = vmatpush1.msra.mxu0 0.0
        %965 = vmatprep.subr.mxu0 0.0
        %966 = vmatpush1.msra.mxu0 0.0
        %967 = vmatprep.subr.mxu0 0.0
        %968 = vmatpush1.msra.mxu0 0.0
        %969 = vmatprep.subr.mxu0 0.0
        %970 = vmatpush1.msra.mxu0 0.0
        %971 = vmatprep.subr.mxu0 0.0
        %972 = vmatpush1.msra.mxu0 0.0
        %973 = vmatprep.subr.mxu0 0.0
        %974 = vmatpush1.msra.mxu0 0.0
        %975 = vmatprep.subr.mxu0 0.0
        %976 = vmatpush1.msra.mxu0 0.0
        %977 = vmatprep.subr.mxu0 0.0
        %978 = vmatpush1.msra.mxu0 0.0
        %979 = vmatprep.subr.mxu0 0.0
        %980 = vmatpush1.msra.mxu0 0.0
        %981 = vmatprep.subr.mxu0 0.0
        %982 = vmatpush1.msra.mxu0 0.0
        %983 = vmatprep.subr.mxu0 0.0
        %984 = vmatpush1.msra.mxu0 0.0
        %985 = vmatprep.subr.mxu0 0.0
        %986 = vmatpush1.msra.mxu0 0.0
        %987 = vmatprep.mubr.f32.mxu0 0.0
        %v988 = vand.u32 %v480, 4294901760
        %989 = vmatmul.mubr.f32.gmra.mrb[0].mxu0 %v988
        %v990 = vpop.f32.mrb[0].mxu0
        %v991 = vadd.f32 %v884, %v990
        %v992 = vpop.f32.mrb[0].mxu0
        %993 = vmatprep.mubr.f32.mxu0 0.0
        %v994 = vand.u32 %v483, 4294901760
        %995 = vmatmul.mubr.f32.gmra.mrb[0].mxu0 %v994
        %v996 = vpop.f32.mrb[0].mxu0
        %v997 = vadd.f32 %v892, %v996
        %v998 = vpop.f32.mrb[0].mxu0
        %999 = vmatprep.mubr.f32.mxu0 0.0
        %v1000 = vand.u32 %v486, 4294901760
        %1001 = vmatmul.mubr.f32.gmra.mrb[0].mxu0 %v1000
        %v1002 = vpop.f32.mrb[0].mxu0
        %v1003 = vadd.f32 %v900, %v1002
        %v1004 = vpop.f32.mrb[0].mxu0
        %1005 = vmatprep.mubr.f32.mxu0 0.0
        %v1006 = vand.u32 %v489, 4294901760
        %1007 = vmatmul.mubr.f32.gmra.mrb[0].mxu0 %v1006
        %v1008 = vpop.f32.mrb[0].mxu0
        %v1009 = vadd.f32 %v908, %v1008
        %v1010 = vpop.f32.mrb[0].mxu0
        %1011 = vdwg.mxu0
        %1012 = vmatprep.subr.mxu0 0.0
        %v1013 = vand.u32 %v467, 4294901760
        %1014 = vmatpush1.msra.mxu0 %v1013
        %1015 = vmatprep.subr.mxu0 0.0
        %v1016 = vand.u32 %v468, 4294901760
        %1017 = vmatpush1.msra.mxu0 %v1016
        %1018 = vmatprep.subr.mxu0 0.0
        %v1019 = vand.u32 %v469, 4294901760
        %1020 = vmatpush1.msra.mxu0 %v1019
        %1021 = vmatprep.subr.mxu0 0.0
        %v1022 = vand.u32 %v470, 4294901760
        %1023 = vmatpush1.msra.mxu0 %v1022
        %1024 = vmatprep.subr.mxu0 0.0
        %1025 = vmatpush1.msra.mxu0 0.0
        %1026 = vmatprep.subr.mxu0 0.0
        %1027 = vmatpush1.msra.mxu0 0.0
        %1028 = vmatprep.subr.mxu0 0.0
        %1029 = vmatpush1.msra.mxu0 0.0
        %1030 = vmatprep.subr.mxu0 0.0
        %1031 = vmatpush1.msra.mxu0 0.0
        %1032 = vmatprep.subr.mxu0 0.0
        %1033 = vmatpush1.msra.mxu0 0.0
        %1034 = vmatprep.subr.mxu0 0.0
        %1035 = vmatpush1.msra.mxu0 0.0
        %1036 = vmatprep.subr.mxu0 0.0
        %1037 = vmatpush1.msra.mxu0 0.0
        %1038 = vmatprep.subr.mxu0 0.0
        %1039 = vmatpush1.msra.mxu0 0.0
        %1040 = vmatprep.subr.mxu0 0.0
        %1041 = vmatpush1.msra.mxu0 0.0
        %1042 = vmatprep.subr.mxu0 0.0
        %1043 = vmatpush1.msra.mxu0 0.0
        %1044 = vmatprep.subr.mxu0 0.0
        %1045 = vmatpush1.msra.mxu0 0.0
        %1046 = vmatprep.subr.mxu0 0.0
        %1047 = vmatpush1.msra.mxu0 0.0
        %1048 = vmatprep.subr.mxu0 0.0
        %1049 = vmatpush1.msra.mxu0 0.0
        %1050 = vmatprep.subr.mxu0 0.0
        %1051 = vmatpush1.msra.mxu0 0.0
        %1052 = vmatprep.subr.mxu0 0.0
        %1053 = vmatpush1.msra.mxu0 0.0
        %1054 = vmatprep.subr.mxu0 0.0
        %1055 = vmatpush1.msra.mxu0 0.0
        %1056 = vmatprep.subr.mxu0 0.0
        %1057 = vmatpush1.msra.mxu0 0.0
        %1058 = vmatprep.subr.mxu0 0.0
        %1059 = vmatpush1.msra.mxu0 0.0
        %1060 = vmatprep.subr.mxu0 0.0
        %1061 = vmatpush1.msra.mxu0 0.0
        %1062 = vmatprep.subr.mxu0 0.0
        %1063 = vmatpush1.msra.mxu0 0.0
        %1064 = vmatprep.subr.mxu0 0.0
        %1065 = vmatpush1.msra.mxu0 0.0
        %1066 = vmatprep.subr.mxu0 0.0
        %1067 = vmatpush1.msra.mxu0 0.0
        %1068 = vmatprep.subr.mxu0 0.0
        %1069 = vmatpush1.msra.mxu0 0.0
        %1070 = vmatprep.subr.mxu0 0.0
        %1071 = vmatpush1.msra.mxu0 0.0
        %1072 = vmatprep.subr.mxu0 0.0
        %1073 = vmatpush1.msra.mxu0 0.0
        %1074 = vmatprep.subr.mxu0 0.0
        %1075 = vmatpush1.msra.mxu0 0.0
        %1076 = vmatprep.subr.mxu0 0.0
        %1077 = vmatpush1.msra.mxu0 0.0
        %1078 = vmatprep.subr.mxu0 0.0
        %1079 = vmatpush1.msra.mxu0 0.0
        %1080 = vmatprep.mubr.f32.mxu0 0.0
        %v1081 = vand.u32 %v480, 4294901760
        %1082 = vmatmul.mubr.f32.gmra.mrb[0].mxu0 %v1081
        %v1083 = vpop.f32.mrb[0].mxu0
        %v1084 = vadd.f32 %v991, %v1083
        %v1085 = vpop.f32.mrb[0].mxu0
        %1086 = vmatprep.mubr.f32.mxu0 0.0
        %v1087 = vand.u32 %v483, 4294901760
        %1088 = vmatmul.mubr.f32.gmra.mrb[0].mxu0 %v1087
        %v1089 = vpop.f32.mrb[0].mxu0
        %v1090 = vadd.f32 %v997, %v1089
        %v1091 = vpop.f32.mrb[0].mxu0
        %1092 = vmatprep.mubr.f32.mxu0 0.0
        %v1093 = vand.u32 %v486, 4294901760
        %1094 = vmatmul.mubr.f32.gmra.mrb[0].mxu0 %v1093
        %v1095 = vpop.f32.mrb[0].mxu0
        %v1096 = vadd.f32 %v1003, %v1095
        %v1097 = vpop.f32.mrb[0].mxu0
        %1098 = vmatprep.mubr.f32.mxu0 0.0
        %v1099 = vand.u32 %v489, 4294901760
        %1100 = vmatmul.mubr.f32.gmra.mrb[0].mxu0 %v1099
        %v1101 = vpop.f32.mrb[0].mxu0
        %v1102 = vadd.f32 %v1009, %v1101
        %v1103 = vpop.f32.mrb[0].mxu0
        %1104 = vdwg.mxu0
        %v1105 = vmax.f32 %v1084, 0.0
        %v1106 = vmax.f32 %v1090, 0.0
        %v1107 = vmax.f32 %v1096, 0.0
        %v1108 = vmax.f32 %v1102, 0.0
        %v1109 = vld [vmem:[#allocation7] sm:$0xff]
        %v1110 = vld [vmem:[#allocation7 + $0x8] sm:$0xff]
        %v1111 = vld [vmem:[#allocation7 + $0x10] sm:$0xff]
        %v1112 = vld [vmem:[#allocation7 + $0x18] sm:$0xff]
        %v1114 = vsel %vm478, %v1105, 0
        %v1117 = vsel %vm478, %v1106, 0
        %v1120 = vsel %vm478, %v1107, 0
        %v1123 = vsel %vm478, %v1108, 0
        %1125 = vmatprep.subr.mxu0 0.0
        %v1126 = vand.u32 %v1109, 4294901760
        %1127 = vmatpush1.msra.mxu0 %v1126
        %1128 = vmatprep.subr.mxu0 0.0
        %v1129 = vand.u32 %v1110, 4294901760
        %1130 = vmatpush1.msra.mxu0 %v1129
        %1131 = vmatprep.subr.mxu0 0.0
        %v1132 = vand.u32 %v1111, 4294901760
        %1133 = vmatpush1.msra.mxu0 %v1132
        %1134 = vmatprep.subr.mxu0 0.0
        %v1135 = vand.u32 %v1112, 4294901760
        %1136 = vmatpush1.msra.mxu0 %v1135
        %1137 = vmatprep.subr.mxu0 0.0
        %1138 = vmatpush1.msra.mxu0 0.0
        %1139 = vmatprep.subr.mxu0 0.0
        %1140 = vmatpush1.msra.mxu0 0.0
        %1141 = vmatprep.subr.mxu0 0.0
        %1142 = vmatpush1.msra.mxu0 0.0
        %1143 = vmatprep.subr.mxu0 0.0
        %1144 = vmatpush1.msra.mxu0 0.0
        %1145 = vmatprep.subr.mxu0 0.0
        %1146 = vmatpush1.msra.mxu0 0.0
        %1147 = vmatprep.subr.mxu0 0.0
        %1148 = vmatpush1.msra.mxu0 0.0
        %1149 = vmatprep.subr.mxu0 0.0
        %1150 = vmatpush1.msra.mxu0 0.0
        %1151 = vmatprep.subr.mxu0 0.0
        %1152 = vmatpush1.msra.mxu0 0.0
        %1153 = vmatprep.subr.mxu0 0.0
        %1154 = vmatpush1.msra.mxu0 0.0
        %1155 = vmatprep.subr.mxu0 0.0
        %1156 = vmatpush1.msra.mxu0 0.0
        %1157 = vmatprep.subr.mxu0 0.0
        %1158 = vmatpush1.msra.mxu0 0.0
        %1159 = vmatprep.subr.mxu0 0.0
        %1160 = vmatpush1.msra.mxu0 0.0
        %1161 = vmatprep.subr.mxu0 0.0
        %1162 = vmatpush1.msra.mxu0 0.0
        %1163 = vmatprep.subr.mxu0 0.0
        %1164 = vmatpush1.msra.mxu0 0.0
        %1165 = vmatprep.subr.mxu0 0.0
        %1166 = vmatpush1.msra.mxu0 0.0
        %1167 = vmatprep.subr.mxu0 0.0
        %1168 = vmatpush1.msra.mxu0 0.0
        %1169 = vmatprep.subr.mxu0 0.0
        %1170 = vmatpush1.msra.mxu0 0.0
        %1171 = vmatprep.subr.mxu0 0.0
        %1172 = vmatpush1.msra.mxu0 0.0
        %1173 = vmatprep.subr.mxu0 0.0
        %1174 = vmatpush1.msra.mxu0 0.0
        %1175 = vmatprep.subr.mxu0 0.0
        %1176 = vmatpush1.msra.mxu0 0.0
        %1177 = vmatprep.subr.mxu0 0.0
        %1178 = vmatpush1.msra.mxu0 0.0
        %1179 = vmatprep.subr.mxu0 0.0
        %1180 = vmatpush1.msra.mxu0 0.0
        %1181 = vmatprep.subr.mxu0 0.0
        %1182 = vmatpush1.msra.mxu0 0.0
        %1183 = vmatprep.subr.mxu0 0.0
        %1184 = vmatpush1.msra.mxu0 0.0
        %1185 = vmatprep.subr.mxu0 0.0
        %1186 = vmatpush1.msra.mxu0 0.0
        %1187 = vmatprep.subr.mxu0 0.0
        %1188 = vmatpush1.msra.mxu0 0.0
        %1189 = vmatprep.subr.mxu0 0.0
        %1190 = vmatpush1.msra.mxu0 0.0
        %1191 = vmatprep.subr.mxu0 0.0
        %1192 = vmatpush1.msra.mxu0 0.0
        %1193 = vmatprep.mubr.f32.mxu0 0.0
        %v1194 = vand.u32 %v1114, 4294901760
        %v1195 = vsub.f32 %v1114, %v1194
        %v1196 = vand.u32 %v1195, 4294901760
        %v1197 = vsub.f32 %v1195, %v1196
        %v1198 = vand.u32 %v1197, 4294901760
        %1199 = vmatmul.mubr.f32.gmra.mrb[0].mxu0 %v1198
        %v1200 = vpop.f32.mrb[0].mxu0
        %v1201 = vadd.f32 0.0, %v1200
        %v1202 = vpop.f32.mrb[0].mxu0
        %1203 = vmatprep.mubr.f32.mxu0 0.0
        %v1204 = vand.u32 %v1117, 4294901760
        %v1205 = vsub.f32 %v1117, %v1204
        %v1206 = vand.u32 %v1205, 4294901760
        %v1207 = vsub.f32 %v1205, %v1206
        %v1208 = vand.u32 %v1207, 4294901760
        %1209 = vmatmul.mubr.f32.gmra.mrb[0].mxu0 %v1208
        %v1210 = vpop.f32.mrb[0].mxu0
        %v1211 = vadd.f32 0.0, %v1210
        %v1212 = vpop.f32.mrb[0].mxu0
        %1213 = vmatprep.mubr.f32.mxu0 0.0
        %v1214 = vand.u32 %v1120, 4294901760
        %v1215 = vsub.f32 %v1120, %v1214
        %v1216 = vand.u32 %v1215, 4294901760
        %v1217 = vsub.f32 %v1215, %v1216
        %v1218 = vand.u32 %v1217, 4294901760
        %1219 = vmatmul.mubr.f32.gmra.mrb[0].mxu0 %v1218
        %v1220 = vpop.f32.mrb[0].mxu0
        %v1221 = vadd.f32 0.0, %v1220
        %v1222 = vpop.f32.mrb[0].mxu0
        %1223 = vmatprep.mubr.f32.mxu0 0.0
        %v1224 = vand.u32 %v1123, 4294901760
        %v1225 = vsub.f32 %v1123, %v1224
        %v1226 = vand.u32 %v1225, 4294901760
        %v1227 = vsub.f32 %v1225, %v1226
        %v1228 = vand.u32 %v1227, 4294901760
        %1229 = vmatmul.mubr.f32.gmra.mrb[0].mxu0 %v1228
        %v1230 = vpop.f32.mrb[0].mxu0
        %v1231 = vadd.f32 0.0, %v1230
        %v1232 = vpop.f32.mrb[0].mxu0
        %1233 = vdwg.mxu0
        %1234 = vmatprep.subr.mxu0 0.0
        %v1235 = vand.u32 %v1109, 4294901760
        %v1236 = vsub.f32 %v1109, %v1235
        %v1237 = vand.u32 %v1236, 4294901760
        %v1238 = vsub.f32 %v1236, %v1237
        %v1239 = vand.u32 %v1238, 4294901760
        %1240 = vmatpush1.msra.mxu0 %v1239
        %1241 = vmatprep.subr.mxu0 0.0
        %v1242 = vand.u32 %v1110, 4294901760
        %v1243 = vsub.f32 %v1110, %v1242
        %v1244 = vand.u32 %v1243, 4294901760
        %v1245 = vsub.f32 %v1243, %v1244
        %v1246 = vand.u32 %v1245, 4294901760
        %1247 = vmatpush1.msra.mxu0 %v1246
        %1248 = vmatprep.subr.mxu0 0.0
        %v1249 = vand.u32 %v1111, 4294901760
        %v1250 = vsub.f32 %v1111, %v1249
        %v1251 = vand.u32 %v1250, 4294901760
        %v1252 = vsub.f32 %v1250, %v1251
        %v1253 = vand.u32 %v1252, 4294901760
        %1254 = vmatpush1.msra.mxu0 %v1253
        %1255 = vmatprep.subr.mxu0 0.0
        %v1256 = vand.u32 %v1112, 4294901760
        %v1257 = vsub.f32 %v1112, %v1256
        %v1258 = vand.u32 %v1257, 4294901760
        %v1259 = vsub.f32 %v1257, %v1258
        %v1260 = vand.u32 %v1259, 4294901760
        %1261 = vmatpush1.msra.mxu0 %v1260
        %1262 = vmatprep.subr.mxu0 0.0
        %1263 = vmatpush1.msra.mxu0 0.0
        %1264 = vmatprep.subr.mxu0 0.0
        %1265 = vmatpush1.msra.mxu0 0.0
        %1266 = vmatprep.subr.mxu0 0.0
        %1267 = vmatpush1.msra.mxu0 0.0
        %1268 = vmatprep.subr.mxu0 0.0
        %1269 = vmatpush1.msra.mxu0 0.0
        %1270 = vmatprep.subr.mxu0 0.0
        %1271 = vmatpush1.msra.mxu0 0.0
        %1272 = vmatprep.subr.mxu0 0.0
        %1273 = vmatpush1.msra.mxu0 0.0
        %1274 = vmatprep.subr.mxu0 0.0
        %1275 = vmatpush1.msra.mxu0 0.0
        %1276 = vmatprep.subr.mxu0 0.0
        %1277 = vmatpush1.msra.mxu0 0.0
        %1278 = vmatprep.subr.mxu0 0.0
        %1279 = vmatpush1.msra.mxu0 0.0
        %1280 = vmatprep.subr.mxu0 0.0
        %1281 = vmatpush1.msra.mxu0 0.0
        %1282 = vmatprep.subr.mxu0 0.0
        %1283 = vmatpush1.msra.mxu0 0.0
        %1284 = vmatprep.subr.mxu0 0.0
        %1285 = vmatpush1.msra.mxu0 0.0
        %1286 = vmatprep.subr.mxu0 0.0
        %1287 = vmatpush1.msra.mxu0 0.0
        %1288 = vmatprep.subr.mxu0 0.0
        %1289 = vmatpush1.msra.mxu0 0.0
        %1290 = vmatprep.subr.mxu0 0.0
        %1291 = vmatpush1.msra.mxu0 0.0
        %1292 = vmatprep.subr.mxu0 0.0
        %1293 = vmatpush1.msra.mxu0 0.0
        %1294 = vmatprep.subr.mxu0 0.0
        %1295 = vmatpush1.msra.mxu0 0.0
        %1296 = vmatprep.subr.mxu0 0.0
        %1297 = vmatpush1.msra.mxu0 0.0
        %1298 = vmatprep.subr.mxu0 0.0
        %1299 = vmatpush1.msra.mxu0 0.0
        %1300 = vmatprep.subr.mxu0 0.0
        %1301 = vmatpush1.msra.mxu0 0.0
        %1302 = vmatprep.subr.mxu0 0.0
        %1303 = vmatpush1.msra.mxu0 0.0
        %1304 = vmatprep.subr.mxu0 0.0
        %1305 = vmatpush1.msra.mxu0 0.0
        %1306 = vmatprep.subr.mxu0 0.0
        %1307 = vmatpush1.msra.mxu0 0.0
        %1308 = vmatprep.subr.mxu0 0.0
        %1309 = vmatpush1.msra.mxu0 0.0
        %1310 = vmatprep.subr.mxu0 0.0
        %1311 = vmatpush1.msra.mxu0 0.0
        %1312 = vmatprep.subr.mxu0 0.0
        %1313 = vmatpush1.msra.mxu0 0.0
        %1314 = vmatprep.subr.mxu0 0.0
        %1315 = vmatpush1.msra.mxu0 0.0
        %1316 = vmatprep.subr.mxu0 0.0
        %1317 = vmatpush1.msra.mxu0 0.0
        %1318 = vmatprep.mubr.f32.mxu0 0.0
        %v1319 = vand.u32 %v1114, 4294901760
        %1320 = vmatmul.mubr.f32.gmra.mrb[0].mxu0 %v1319
        %v1321 = vpop.f32.mrb[0].mxu0
        %v1322 = vadd.f32 %v1201, %v1321
        %v1323 = vpop.f32.mrb[0].mxu0
        %1324 = vmatprep.mubr.f32.mxu0 0.0
        %v1325 = vand.u32 %v1117, 4294901760
        %1326 = vmatmul.mubr.f32.gmra.mrb[0].mxu0 %v1325
        %v1327 = vpop.f32.mrb[0].mxu0
        %v1328 = vadd.f32 %v1211, %v1327
        %v1329 = vpop.f32.mrb[0].mxu0
        %1330 = vmatprep.mubr.f32.mxu0 0.0
        %v1331 = vand.u32 %v1120, 4294901760
        %1332 = vmatmul.mubr.f32.gmra.mrb[0].mxu0 %v1331
        %v1333 = vpop.f32.mrb[0].mxu0
        %v1334 = vadd.f32 %v1221, %v1333
        %v1335 = vpop.f32.mrb[0].mxu0
        %1336 = vmatprep.mubr.f32.mxu0 0.0
        %v1337 = vand.u32 %v1123, 4294901760
        %1338 = vmatmul.mubr.f32.gmra.mrb[0].mxu0 %v1337
        %v1339 = vpop.f32.mrb[0].mxu0
        %v1340 = vadd.f32 %v1231, %v1339
        %v1341 = vpop.f32.mrb[0].mxu0
        %1342 = vdwg.mxu0
        %1343 = vmatprep.subr.mxu0 0.0
        %v1344 = vand.u32 %v1109, 4294901760
        %v1345 = vsub.f32 %v1109, %v1344
        %1346 = vmatpush1.msra.mxu0 %v1345
        %1347 = vmatprep.subr.mxu0 0.0
        %v1348 = vand.u32 %v1110, 4294901760
        %v1349 = vsub.f32 %v1110, %v1348
        %1350 = vmatpush1.msra.mxu0 %v1349
        %1351 = vmatprep.subr.mxu0 0.0
        %v1352 = vand.u32 %v1111, 4294901760
        %v1353 = vsub.f32 %v1111, %v1352
        %1354 = vmatpush1.msra.mxu0 %v1353
        %1355 = vmatprep.subr.mxu0 0.0
        %v1356 = vand.u32 %v1112, 4294901760
        %v1357 = vsub.f32 %v1112, %v1356
        %1358 = vmatpush1.msra.mxu0 %v1357
        %1359 = vmatprep.subr.mxu0 0.0
        %1360 = vmatpush1.msra.mxu0 0.0
        %1361 = vmatprep.subr.mxu0 0.0
        %1362 = vmatpush1.msra.mxu0 0.0
        %1363 = vmatprep.subr.mxu0 0.0
        %1364 = vmatpush1.msra.mxu0 0.0
        %1365 = vmatprep.subr.mxu0 0.0
        %1366 = vmatpush1.msra.mxu0 0.0
        %1367 = vmatprep.subr.mxu0 0.0
        %1368 = vmatpush1.msra.mxu0 0.0
        %1369 = vmatprep.subr.mxu0 0.0
        %1370 = vmatpush1.msra.mxu0 0.0
        %1371 = vmatprep.subr.mxu0 0.0
        %1372 = vmatpush1.msra.mxu0 0.0
        %1373 = vmatprep.subr.mxu0 0.0
        %1374 = vmatpush1.msra.mxu0 0.0
        %1375 = vmatprep.subr.mxu0 0.0
        %1376 = vmatpush1.msra.mxu0 0.0
        %1377 = vmatprep.subr.mxu0 0.0
        %1378 = vmatpush1.msra.mxu0 0.0
        %1379 = vmatprep.subr.mxu0 0.0
        %1380 = vmatpush1.msra.mxu0 0.0
        %1381 = vmatprep.subr.mxu0 0.0
        %1382 = vmatpush1.msra.mxu0 0.0
        %1383 = vmatprep.subr.mxu0 0.0
        %1384 = vmatpush1.msra.mxu0 0.0
        %1385 = vmatprep.subr.mxu0 0.0
        %1386 = vmatpush1.msra.mxu0 0.0
        %1387 = vmatprep.subr.mxu0 0.0
        %1388 = vmatpush1.msra.mxu0 0.0
        %1389 = vmatprep.subr.mxu0 0.0
        %1390 = vmatpush1.msra.mxu0 0.0
        %1391 = vmatprep.subr.mxu0 0.0
        %1392 = vmatpush1.msra.mxu0 0.0
        %1393 = vmatprep.subr.mxu0 0.0
        %1394 = vmatpush1.msra.mxu0 0.0
        %1395 = vmatprep.subr.mxu0 0.0
        %1396 = vmatpush1.msra.mxu0 0.0
        %1397 = vmatprep.subr.mxu0 0.0
        %1398 = vmatpush1.msra.mxu0 0.0
        %1399 = vmatprep.subr.mxu0 0.0
        %1400 = vmatpush1.msra.mxu0 0.0
        %1401 = vmatprep.subr.mxu0 0.0
        %1402 = vmatpush1.msra.mxu0 0.0
        %1403 = vmatprep.subr.mxu0 0.0
        %1404 = vmatpush1.msra.mxu0 0.0
        %1405 = vmatprep.subr.mxu0 0.0
        %1406 = vmatpush1.msra.mxu0 0.0
        %1407 = vmatprep.subr.mxu0 0.0
        %1408 = vmatpush1.msra.mxu0 0.0
        %1409 = vmatprep.subr.mxu0 0.0
        %1410 = vmatpush1.msra.mxu0 0.0
        %1411 = vmatprep.subr.mxu0 0.0
        %1412 = vmatpush1.msra.mxu0 0.0
        %1413 = vmatprep.subr.mxu0 0.0
        %1414 = vmatpush1.msra.mxu0 0.0
        %1415 = vmatprep.mubr.f32.mxu0 0.0
        %v1416 = vand.u32 %v1114, 4294901760
        %v1417 = vsub.f32 %v1114, %v1416
        %1418 = vmatmul.mubr.f32.gmra.mrb[0].mxu0 %v1417
        %v1419 = vpop.f32.mrb[0].mxu0
        %v1420 = vadd.f32 %v1322, %v1419
        %v1421 = vpop.f32.mrb[0].mxu0
        %1422 = vmatprep.mubr.f32.mxu0 0.0
        %v1423 = vand.u32 %v1117, 4294901760
        %v1424 = vsub.f32 %v1117, %v1423
        %1425 = vmatmul.mubr.f32.gmra.mrb[0].mxu0 %v1424
        %v1426 = vpop.f32.mrb[0].mxu0
        %v1427 = vadd.f32 %v1328, %v1426
        %v1428 = vpop.f32.mrb[0].mxu0
        %1429 = vmatprep.mubr.f32.mxu0 0.0
        %v1430 = vand.u32 %v1120, 4294901760
        %v1431 = vsub.f32 %v1120, %v1430
        %1432 = vmatmul.mubr.f32.gmra.mrb[0].mxu0 %v1431
        %v1433 = vpop.f32.mrb[0].mxu0
        %v1434 = vadd.f32 %v1334, %v1433
        %v1435 = vpop.f32.mrb[0].mxu0
        %1436 = vmatprep.mubr.f32.mxu0 0.0
        %v1437 = vand.u32 %v1123, 4294901760
        %v1438 = vsub.f32 %v1123, %v1437
        %1439 = vmatmul.mubr.f32.gmra.mrb[0].mxu0 %v1438
        %v1440 = vpop.f32.mrb[0].mxu0
        %v1441 = vadd.f32 %v1340, %v1440
        %v1442 = vpop.f32.mrb[0].mxu0
        %1443 = vdwg.mxu0
        %1444 = vmatprep.subr.mxu0 0.0
        %v1445 = vand.u32 %v1109, 4294901760
        %1446 = vmatpush1.msra.mxu0 %v1445
        %1447 = vmatprep.subr.mxu0 0.0
        %v1448 = vand.u32 %v1110, 4294901760
        %1449 = vmatpush1.msra.mxu0 %v1448
        %1450 = vmatprep.subr.mxu0 0.0
        %v1451 = vand.u32 %v1111, 4294901760
        %1452 = vmatpush1.msra.mxu0 %v1451
        %1453 = vmatprep.subr.mxu0 0.0
        %v1454 = vand.u32 %v1112, 4294901760
        %1455 = vmatpush1.msra.mxu0 %v1454
        %1456 = vmatprep.subr.mxu0 0.0
        %1457 = vmatpush1.msra.mxu0 0.0
        %1458 = vmatprep.subr.mxu0 0.0
        %1459 = vmatpush1.msra.mxu0 0.0
        %1460 = vmatprep.subr.mxu0 0.0
        %1461 = vmatpush1.msra.mxu0 0.0
        %1462 = vmatprep.subr.mxu0 0.0
        %1463 = vmatpush1.msra.mxu0 0.0
        %1464 = vmatprep.subr.mxu0 0.0
        %1465 = vmatpush1.msra.mxu0 0.0
        %1466 = vmatprep.subr.mxu0 0.0
        %1467 = vmatpush1.msra.mxu0 0.0
        %1468 = vmatprep.subr.mxu0 0.0
        %1469 = vmatpush1.msra.mxu0 0.0
        %1470 = vmatprep.subr.mxu0 0.0
        %1471 = vmatpush1.msra.mxu0 0.0
        %1472 = vmatprep.subr.mxu0 0.0
        %1473 = vmatpush1.msra.mxu0 0.0
        %1474 = vmatprep.subr.mxu0 0.0
        %1475 = vmatpush1.msra.mxu0 0.0
        %1476 = vmatprep.subr.mxu0 0.0
        %1477 = vmatpush1.msra.mxu0 0.0
        %1478 = vmatprep.subr.mxu0 0.0
        %1479 = vmatpush1.msra.mxu0 0.0
        %1480 = vmatprep.subr.mxu0 0.0
        %1481 = vmatpush1.msra.mxu0 0.0
        %1482 = vmatprep.subr.mxu0 0.0
        %1483 = vmatpush1.msra.mxu0 0.0
        %1484 = vmatprep.subr.mxu0 0.0
        %1485 = vmatpush1.msra.mxu0 0.0
        %1486 = vmatprep.subr.mxu0 0.0
        %1487 = vmatpush1.msra.mxu0 0.0
        %1488 = vmatprep.subr.mxu0 0.0
        %1489 = vmatpush1.msra.mxu0 0.0
        %1490 = vmatprep.subr.mxu0 0.0
        %1491 = vmatpush1.msra.mxu0 0.0
        %1492 = vmatprep.subr.mxu0 0.0
        %1493 = vmatpush1.msra.mxu0 0.0
        %1494 = vmatprep.subr.mxu0 0.0
        %1495 = vmatpush1.msra.mxu0 0.0
        %1496 = vmatprep.subr.mxu0 0.0
        %1497 = vmatpush1.msra.mxu0 0.0
        %1498 = vmatprep.subr.mxu0 0.0
        %1499 = vmatpush1.msra.mxu0 0.0
        %1500 = vmatprep.subr.mxu0 0.0
        %1501 = vmatpush1.msra.mxu0 0.0
        %1502 = vmatprep.subr.mxu0 0.0
        %1503 = vmatpush1.msra.mxu0 0.0
        %1504 = vmatprep.subr.mxu0 0.0
        %1505 = vmatpush1.msra.mxu0 0.0
        %1506 = vmatprep.subr.mxu0 0.0
        %1507 = vmatpush1.msra.mxu0 0.0
        %1508 = vmatprep.subr.mxu0 0.0
        %1509 = vmatpush1.msra.mxu0 0.0
        %1510 = vmatprep.subr.mxu0 0.0
        %1511 = vmatpush1.msra.mxu0 0.0
        %1512 = vmatprep.mubr.f32.mxu0 0.0
        %v1513 = vand.u32 %v1114, 4294901760
        %v1514 = vsub.f32 %v1114, %v1513
        %v1515 = vand.u32 %v1514, 4294901760
        %1516 = vmatmul.mubr.f32.gmra.mrb[0].mxu0 %v1515
        %v1517 = vpop.f32.mrb[0].mxu0
        %v1518 = vadd.f32 %v1420, %v1517
        %v1519 = vpop.f32.mrb[0].mxu0
        %1520 = vmatprep.mubr.f32.mxu0 0.0
        %v1521 = vand.u32 %v1117, 4294901760
        %v1522 = vsub.f32 %v1117, %v1521
        %v1523 = vand.u32 %v1522, 4294901760
        %1524 = vmatmul.mubr.f32.gmra.mrb[0].mxu0 %v1523
        %v1525 = vpop.f32.mrb[0].mxu0
        %v1526 = vadd.f32 %v1427, %v1525
        %v1527 = vpop.f32.mrb[0].mxu0
        %1528 = vmatprep.mubr.f32.mxu0 0.0
        %v1529 = vand.u32 %v1120, 4294901760
        %v1530 = vsub.f32 %v1120, %v1529
        %v1531 = vand.u32 %v1530, 4294901760
        %1532 = vmatmul.mubr.f32.gmra.mrb[0].mxu0 %v1531
        %v1533 = vpop.f32.mrb[0].mxu0
        %v1534 = vadd.f32 %v1434, %v1533
        %v1535 = vpop.f32.mrb[0].mxu0
        %1536 = vmatprep.mubr.f32.mxu0 0.0
        %v1537 = vand.u32 %v1123, 4294901760
        %v1538 = vsub.f32 %v1123, %v1537
        %v1539 = vand.u32 %v1538, 4294901760
        %1540 = vmatmul.mubr.f32.gmra.mrb[0].mxu0 %v1539
        %v1541 = vpop.f32.mrb[0].mxu0
        %v1542 = vadd.f32 %v1441, %v1541
        %v1543 = vpop.f32.mrb[0].mxu0
        %1544 = vdwg.mxu0
        %1545 = vmatprep.subr.mxu0 0.0
        %v1546 = vand.u32 %v1109, 4294901760
        %v1547 = vsub.f32 %v1109, %v1546
        %v1548 = vand.u32 %v1547, 4294901760
        %1549 = vmatpush1.msra.mxu0 %v1548
        %1550 = vmatprep.subr.mxu0 0.0
        %v1551 = vand.u32 %v1110, 4294901760
        %v1552 = vsub.f32 %v1110, %v1551
        %v1553 = vand.u32 %v1552, 4294901760
        %1554 = vmatpush1.msra.mxu0 %v1553
        %1555 = vmatprep.subr.mxu0 0.0
        %v1556 = vand.u32 %v1111, 4294901760
        %v1557 = vsub.f32 %v1111, %v1556
        %v1558 = vand.u32 %v1557, 4294901760
        %1559 = vmatpush1.msra.mxu0 %v1558
        %1560 = vmatprep.subr.mxu0 0.0
        %v1561 = vand.u32 %v1112, 4294901760
        %v1562 = vsub.f32 %v1112, %v1561
        %v1563 = vand.u32 %v1562, 4294901760
        %1564 = vmatpush1.msra.mxu0 %v1563
        %1565 = vmatprep.subr.mxu0 0.0
        %1566 = vmatpush1.msra.mxu0 0.0
        %1567 = vmatprep.subr.mxu0 0.0
        %1568 = vmatpush1.msra.mxu0 0.0
        %1569 = vmatprep.subr.mxu0 0.0
        %1570 = vmatpush1.msra.mxu0 0.0
        %1571 = vmatprep.subr.mxu0 0.0
        %1572 = vmatpush1.msra.mxu0 0.0
        %1573 = vmatprep.subr.mxu0 0.0
        %1574 = vmatpush1.msra.mxu0 0.0
        %1575 = vmatprep.subr.mxu0 0.0
        %1576 = vmatpush1.msra.mxu0 0.0
        %1577 = vmatprep.subr.mxu0 0.0
        %1578 = vmatpush1.msra.mxu0 0.0
        %1579 = vmatprep.subr.mxu0 0.0
        %1580 = vmatpush1.msra.mxu0 0.0
        %1581 = vmatprep.subr.mxu0 0.0
        %1582 = vmatpush1.msra.mxu0 0.0
        %1583 = vmatprep.subr.mxu0 0.0
        %1584 = vmatpush1.msra.mxu0 0.0
        %1585 = vmatprep.subr.mxu0 0.0
        %1586 = vmatpush1.msra.mxu0 0.0
        %1587 = vmatprep.subr.mxu0 0.0
        %1588 = vmatpush1.msra.mxu0 0.0
        %1589 = vmatprep.subr.mxu0 0.0
        %1590 = vmatpush1.msra.mxu0 0.0
        %1591 = vmatprep.subr.mxu0 0.0
        %1592 = vmatpush1.msra.mxu0 0.0
        %1593 = vmatprep.subr.mxu0 0.0
        %1594 = vmatpush1.msra.mxu0 0.0
        %1595 = vmatprep.subr.mxu0 0.0
        %1596 = vmatpush1.msra.mxu0 0.0
        %1597 = vmatprep.subr.mxu0 0.0
        %1598 = vmatpush1.msra.mxu0 0.0
        %1599 = vmatprep.subr.mxu0 0.0
        %1600 = vmatpush1.msra.mxu0 0.0
        %1601 = vmatprep.subr.mxu0 0.0
        %1602 = vmatpush1.msra.mxu0 0.0
        %1603 = vmatprep.subr.mxu0 0.0
        %1604 = vmatpush1.msra.mxu0 0.0
        %1605 = vmatprep.subr.mxu0 0.0
        %1606 = vmatpush1.msra.mxu0 0.0
        %1607 = vmatprep.subr.mxu0 0.0
        %1608 = vmatpush1.msra.mxu0 0.0
        %1609 = vmatprep.subr.mxu0 0.0
        %1610 = vmatpush1.msra.mxu0 0.0
        %1611 = vmatprep.subr.mxu0 0.0
        %1612 = vmatpush1.msra.mxu0 0.0
        %1613 = vmatprep.subr.mxu0 0.0
        %1614 = vmatpush1.msra.mxu0 0.0
        %1615 = vmatprep.subr.mxu0 0.0
        %1616 = vmatpush1.msra.mxu0 0.0
        %1617 = vmatprep.subr.mxu0 0.0
        %1618 = vmatpush1.msra.mxu0 0.0
        %1619 = vmatprep.subr.mxu0 0.0
        %1620 = vmatpush1.msra.mxu0 0.0
        %1621 = vmatprep.mubr.f32.mxu0 0.0
        %v1622 = vand.u32 %v1114, 4294901760
        %1623 = vmatmul.mubr.f32.gmra.mrb[0].mxu0 %v1622
        %v1624 = vpop.f32.mrb[0].mxu0
        %v1625 = vadd.f32 %v1518, %v1624
        %v1626 = vpop.f32.mrb[0].mxu0
        %1627 = vmatprep.mubr.f32.mxu0 0.0
        %v1628 = vand.u32 %v1117, 4294901760
        %1629 = vmatmul.mubr.f32.gmra.mrb[0].mxu0 %v1628
        %v1630 = vpop.f32.mrb[0].mxu0
        %v1631 = vadd.f32 %v1526, %v1630
        %v1632 = vpop.f32.mrb[0].mxu0
        %1633 = vmatprep.mubr.f32.mxu0 0.0
        %v1634 = vand.u32 %v1120, 4294901760
        %1635 = vmatmul.mubr.f32.gmra.mrb[0].mxu0 %v1634
        %v1636 = vpop.f32.mrb[0].mxu0
        %v1637 = vadd.f32 %v1534, %v1636
        %v1638 = vpop.f32.mrb[0].mxu0
        %1639 = vmatprep.mubr.f32.mxu0 0.0
        %v1640 = vand.u32 %v1123, 4294901760
        %1641 = vmatmul.mubr.f32.gmra.mrb[0].mxu0 %v1640
        %v1642 = vpop.f32.mrb[0].mxu0
        %v1643 = vadd.f32 %v1542, %v1642
        %v1644 = vpop.f32.mrb[0].mxu0
        %1645 = vdwg.mxu0
        %1646 = vmatprep.subr.mxu0 0.0
        %v1647 = vand.u32 %v1109, 4294901760
        %1648 = vmatpush1.msra.mxu0 %v1647
        %1649 = vmatprep.subr.mxu0 0.0
        %v1650 = vand.u32 %v1110, 4294901760
        %1651 = vmatpush1.msra.mxu0 %v1650
        %1652 = vmatprep.subr.mxu0 0.0
        %v1653 = vand.u32 %v1111, 4294901760
        %1654 = vmatpush1.msra.mxu0 %v1653
        %1655 = vmatprep.subr.mxu0 0.0
        %v1656 = vand.u32 %v1112, 4294901760
        %1657 = vmatpush1.msra.mxu0 %v1656
        %1658 = vmatprep.subr.mxu0 0.0
        %1659 = vmatpush1.msra.mxu0 0.0
        %1660 = vmatprep.subr.mxu0 0.0
        %1661 = vmatpush1.msra.mxu0 0.0
        %1662 = vmatprep.subr.mxu0 0.0
        %1663 = vmatpush1.msra.mxu0 0.0
        %1664 = vmatprep.subr.mxu0 0.0
        %1665 = vmatpush1.msra.mxu0 0.0
        %1666 = vmatprep.subr.mxu0 0.0
        %1667 = vmatpush1.msra.mxu0 0.0
        %1668 = vmatprep.subr.mxu0 0.0
        %1669 = vmatpush1.msra.mxu0 0.0
        %1670 = vmatprep.subr.mxu0 0.0
        %1671 = vmatpush1.msra.mxu0 0.0
        %1672 = vmatprep.subr.mxu0 0.0
        %1673 = vmatpush1.msra.mxu0 0.0
        %1674 = vmatprep.subr.mxu0 0.0
        %1675 = vmatpush1.msra.mxu0 0.0
        %1676 = vmatprep.subr.mxu0 0.0
        %1677 = vmatpush1.msra.mxu0 0.0
        %1678 = vmatprep.subr.mxu0 0.0
        %1679 = vmatpush1.msra.mxu0 0.0
        %1680 = vmatprep.subr.mxu0 0.0
        %1681 = vmatpush1.msra.mxu0 0.0
        %1682 = vmatprep.subr.mxu0 0.0
        %1683 = vmatpush1.msra.mxu0 0.0
        %1684 = vmatprep.subr.mxu0 0.0
        %1685 = vmatpush1.msra.mxu0 0.0
        %1686 = vmatprep.subr.mxu0 0.0
        %1687 = vmatpush1.msra.mxu0 0.0
        %1688 = vmatprep.subr.mxu0 0.0
        %1689 = vmatpush1.msra.mxu0 0.0
        %1690 = vmatprep.subr.mxu0 0.0
        %1691 = vmatpush1.msra.mxu0 0.0
        %1692 = vmatprep.subr.mxu0 0.0
        %1693 = vmatpush1.msra.mxu0 0.0
        %1694 = vmatprep.subr.mxu0 0.0
        %1695 = vmatpush1.msra.mxu0 0.0
        %1696 = vmatprep.subr.mxu0 0.0
        %1697 = vmatpush1.msra.mxu0 0.0
        %1698 = vmatprep.subr.mxu0 0.0
        %1699 = vmatpush1.msra.mxu0 0.0
        %1700 = vmatprep.subr.mxu0 0.0
        %1701 = vmatpush1.msra.mxu0 0.0
        %1702 = vmatprep.subr.mxu0 0.0
        %1703 = vmatpush1.msra.mxu0 0.0
        %1704 = vmatprep.subr.mxu0 0.0
        %1705 = vmatpush1.msra.mxu0 0.0
        %1706 = vmatprep.subr.mxu0 0.0
        %1707 = vmatpush1.msra.mxu0 0.0
        %1708 = vmatprep.subr.mxu0 0.0
        %1709 = vmatpush1.msra.mxu0 0.0
        %1710 = vmatprep.subr.mxu0 0.0
        %1711 = vmatpush1.msra.mxu0 0.0
        %1712 = vmatprep.subr.mxu0 0.0
        %1713 = vmatpush1.msra.mxu0 0.0
        %1714 = vmatprep.mubr.f32.mxu0 0.0
        %v1715 = vand.u32 %v1114, 4294901760
        %1716 = vmatmul.mubr.f32.gmra.mrb[0].mxu0 %v1715
        %v1717 = vpop.f32.mrb[0].mxu0
        %v1718 = vadd.f32 %v1625, %v1717
        %v1719 = vpop.f32.mrb[0].mxu0
        %1720 = vmatprep.mubr.f32.mxu0 0.0
        %v1721 = vand.u32 %v1117, 4294901760
        %1722 = vmatmul.mubr.f32.gmra.mrb[0].mxu0 %v1721
        %v1723 = vpop.f32.mrb[0].mxu0
        %v1724 = vadd.f32 %v1631, %v1723
        %v1725 = vpop.f32.mrb[0].mxu0
        %1726 = vmatprep.mubr.f32.mxu0 0.0
        %v1727 = vand.u32 %v1120, 4294901760
        %1728 = vmatmul.mubr.f32.gmra.mrb[0].mxu0 %v1727
        %v1729 = vpop.f32.mrb[0].mxu0
        %v1730 = vadd.f32 %v1637, %v1729
        %v1731 = vpop.f32.mrb[0].mxu0
        %1732 = vmatprep.mubr.f32.mxu0 0.0
        %v1733 = vand.u32 %v1123, 4294901760
        %1734 = vmatmul.mubr.f32.gmra.mrb[0].mxu0 %v1733
        %v1735 = vpop.f32.mrb[0].mxu0
        %v1736 = vadd.f32 %v1643, %v1735
        %v1737 = vpop.f32.mrb[0].mxu0
        %1738 = vdwg.mxu0
        %v1739 = vld [vmem:[%s399] sm:$0xff]
        %v1740 = vld [vmem:[%s399 + $0x8] sm:$0xff]
        %v1741 = vld [vmem:[%s399 + $0x10] sm:$0xff]
        %v1742 = vld [vmem:[%s399 + $0x18] sm:$0xff]
        %vm1743 = vcmask 64512
        %v1744 = vsel %vm1743, %v1739, -inf
        %1745 = vmax.xlane.f32.xlu0 %v1744
        %v1746 = vpop.xlane.xlu0 %1745
        %v1747 = vsel %vm1743, %v1740, -inf
        %1748 = vmax.xlane.f32.xlu0 %v1747
        %v1749 = vpop.xlane.xlu0 %1748
        %v1750 = vsel %vm1743, %v1741, -inf
        %1751 = vmax.xlane.f32.xlu0 %v1750
        %v1752 = vpop.xlane.xlu0 %1751
        %v1753 = vsel %vm1743, %v1742, -inf
        %1754 = vmax.xlane.f32.xlu0 %v1753
        %v1755 = vpop.xlane.xlu0 %1754
        %vm1756 = vcmp.gt.f32.partialorder %v1746, -5e+08
        %vm1757 = vcmp.gt.f32.partialorder %v1749, -5e+08
        %vm1758 = vcmp.gt.f32.partialorder %v1752, -5e+08
        %vm1759 = vcmp.gt.f32.partialorder %v1755, -5e+08
        %vm1760 = vcmp.gt.f32.partialorder %v1746, -1.5e+09
        %vm1761 = vcmp.gt.f32.partialorder %v1749, -1.5e+09
        %vm1762 = vcmp.gt.f32.partialorder %v1752, -1.5e+09
        %vm1763 = vcmp.gt.f32.partialorder %v1755, -1.5e+09
        %v1764 = vlaneseq
        %v1765 = vshrl.u32 %v1764, 7
        %v1766 = vsub.s32 0, %v1765
        %v1767 = vrot.slane %v1718, %v1766
        %v1768 = vlaneseq
        %v1769 = vshrl.u32 %v1768, 7
        %v1770 = vsub.s32 0, %v1769
        %v1771 = vrot.slane %v1724, %v1770
        %v1772 = vlaneseq
        %v1773 = vshrl.u32 %v1772, 7
        %v1774 = vsub.s32 0, %v1773
        %v1775 = vrot.slane %v1730, %v1774
        %v1776 = vlaneseq
        %v1777 = vshrl.u32 %v1776, 7
        %v1778 = vsub.s32 0, %v1777
        %v1779 = vrot.slane %v1736, %v1778
        %1784 = vrot.lane.b32.xlu0 %v1767, 96
        %v1785 = vpop.permute.xlu0 %1784
        %1786 = vrot.lane.b32.xlu0 %v1771, 96
        %v1787 = vpop.permute.xlu0 %1786
        %1788 = vrot.lane.b32.xlu0 %v1775, 96
        %v1789 = vpop.permute.xlu0 %1788
        %1790 = vrot.lane.b32.xlu0 %v1779, 96
        %v1791 = vpop.permute.xlu0 %1790
        %v1796 = vmul.f32 %v1718, %v1785
        %v1797 = vmul.f32 %v1724, %v1787
        %v1798 = vmul.f32 %v1730, %v1789
        %v1799 = vmul.f32 %v1736, %v1791
        %v1800 = vsel %vm1743, %v1796, 0.0
        %1801 = vadd.xlane.f32.xlu0 %v1800
        %v1802 = vpop.xlane.xlu0 %1801
        %v1803 = vsel %vm1743, %v1797, 0.0
        %1804 = vadd.xlane.f32.xlu0 %v1803
        %v1805 = vpop.xlane.xlu0 %1804
        %v1806 = vsel %vm1743, %v1798, 0.0
        %1807 = vadd.xlane.f32.xlu0 %v1806
        %v1808 = vpop.xlane.xlu0 %1807
        %v1809 = vsel %vm1743, %v1799, 0.0
        %1810 = vadd.xlane.f32.xlu0 %v1809
        %v1811 = vpop.xlane.xlu0 %1810
        %v1812 = vlaneseq
        %v1813 = vshrl.u32 %v1812, 7
        %v1814 = vsub.s32 1, %v1813
        %v1815 = vrot.slane %v1718, %v1814
        %v1816 = vlaneseq
        %v1817 = vshrl.u32 %v1816, 7
        %v1818 = vsub.s32 1, %v1817
        %v1819 = vrot.slane %v1724, %v1818
        %v1820 = vlaneseq
        %v1821 = vshrl.u32 %v1820, 7
        %v1822 = vsub.s32 1, %v1821
        %v1823 = vrot.slane %v1730, %v1822
        %v1824 = vlaneseq
        %v1825 = vshrl.u32 %v1824, 7
        %v1826 = vsub.s32 1, %v1825
        %v1827 = vrot.slane %v1736, %v1826
        %1832 = vrot.lane.b32.xlu0 %v1815, 96
        %v1833 = vpop.permute.xlu0 %1832
        %1834 = vrot.lane.b32.xlu0 %v1819, 96
        %v1835 = vpop.permute.xlu0 %1834
        %1836 = vrot.lane.b32.xlu0 %v1823, 96
        %v1837 = vpop.permute.xlu0 %1836
        %1838 = vrot.lane.b32.xlu0 %v1827, 96
        %v1839 = vpop.permute.xlu0 %1838
        %v1844 = vmul.f32 %v1718, %v1833
        %v1845 = vmul.f32 %v1724, %v1835
        %v1846 = vmul.f32 %v1730, %v1837
        %v1847 = vmul.f32 %v1736, %v1839
        %v1848 = vsel %vm1743, %v1844, 0.0
        %1849 = vadd.xlane.f32.xlu0 %v1848
        %v1850 = vpop.xlane.xlu0 %1849
        %v1851 = vsel %vm1743, %v1845, 0.0
        %1852 = vadd.xlane.f32.xlu0 %v1851
        %v1853 = vpop.xlane.xlu0 %1852
        %v1854 = vsel %vm1743, %v1846, 0.0
        %1855 = vadd.xlane.f32.xlu0 %v1854
        %v1856 = vpop.xlane.xlu0 %1855
        %v1857 = vsel %vm1743, %v1847, 0.0
        %1858 = vadd.xlane.f32.xlu0 %v1857
        %v1859 = vpop.xlane.xlu0 %1858
        %v1860 = vlaneseq
        %v1861 = vshrl.u32 %v1860, 7
        %v1862 = vsub.s32 2, %v1861
        %v1863 = vrot.slane %v1718, %v1862
        %v1864 = vlaneseq
        %v1865 = vshrl.u32 %v1864, 7
        %v1866 = vsub.s32 2, %v1865
        %v1867 = vrot.slane %v1724, %v1866
        %v1868 = vlaneseq
        %v1869 = vshrl.u32 %v1868, 7
        %v1870 = vsub.s32 2, %v1869
        %v1871 = vrot.slane %v1730, %v1870
        %v1872 = vlaneseq
        %v1873 = vshrl.u32 %v1872, 7
        %v1874 = vsub.s32 2, %v1873
        %v1875 = vrot.slane %v1736, %v1874
        %1880 = vrot.lane.b32.xlu0 %v1863, 96
        %v1881 = vpop.permute.xlu0 %1880
        %1882 = vrot.lane.b32.xlu0 %v1867, 96
        %v1883 = vpop.permute.xlu0 %1882
        %1884 = vrot.lane.b32.xlu0 %v1871, 96
        %v1885 = vpop.permute.xlu0 %1884
        %1886 = vrot.lane.b32.xlu0 %v1875, 96
        %v1887 = vpop.permute.xlu0 %1886
        %v1892 = vmul.f32 %v1718, %v1881
        %v1893 = vmul.f32 %v1724, %v1883
        %v1894 = vmul.f32 %v1730, %v1885
        %v1895 = vmul.f32 %v1736, %v1887
        %v1896 = vsel %vm1743, %v1892, 0.0
        %1897 = vadd.xlane.f32.xlu0 %v1896
        %v1898 = vpop.xlane.xlu0 %1897
        %v1899 = vsel %vm1743, %v1893, 0.0
        %1900 = vadd.xlane.f32.xlu0 %v1899
        %v1901 = vpop.xlane.xlu0 %1900
        %v1902 = vsel %vm1743, %v1894, 0.0
        %1903 = vadd.xlane.f32.xlu0 %v1902
        %v1904 = vpop.xlane.xlu0 %1903
        %v1905 = vsel %vm1743, %v1895, 0.0
        %1906 = vadd.xlane.f32.xlu0 %v1905
        %v1907 = vpop.xlane.xlu0 %1906
        %v1908 = vlaneseq
        %v1909 = vshrl.u32 %v1908, 7
        %v1910 = vsub.s32 3, %v1909
        %v1911 = vrot.slane %v1718, %v1910
        %v1912 = vlaneseq
        %v1913 = vshrl.u32 %v1912, 7
        %v1914 = vsub.s32 3, %v1913
        %v1915 = vrot.slane %v1724, %v1914
        %v1916 = vlaneseq
        %v1917 = vshrl.u32 %v1916, 7
        %v1918 = vsub.s32 3, %v1917
        %v1919 = vrot.slane %v1730, %v1918
        %v1920 = vlaneseq
        %v1921 = vshrl.u32 %v1920, 7
        %v1922 = vsub.s32 3, %v1921
        %v1923 = vrot.slane %v1736, %v1922
        %1928 = vrot.lane.b32.xlu0 %v1911, 96
        %v1929 = vpop.permute.xlu0 %1928
        %1930 = vrot.lane.b32.xlu0 %v1915, 96
        %v1931 = vpop.permute.xlu0 %1930
        %1932 = vrot.lane.b32.xlu0 %v1919, 96
        %v1933 = vpop.permute.xlu0 %1932
        %1934 = vrot.lane.b32.xlu0 %v1923, 96
        %v1935 = vpop.permute.xlu0 %1934
        %v1940 = vmul.f32 %v1718, %v1929
        %v1941 = vmul.f32 %v1724, %v1931
        %v1942 = vmul.f32 %v1730, %v1933
        %v1943 = vmul.f32 %v1736, %v1935
        %v1944 = vsel %vm1743, %v1940, 0.0
        %1945 = vadd.xlane.f32.xlu0 %v1944
        %v1946 = vpop.xlane.xlu0 %1945
        %v1947 = vsel %vm1743, %v1941, 0.0
        %1948 = vadd.xlane.f32.xlu0 %v1947
        %v1949 = vpop.xlane.xlu0 %1948
        %v1950 = vsel %vm1743, %v1942, 0.0
        %1951 = vadd.xlane.f32.xlu0 %v1950
        %v1952 = vpop.xlane.xlu0 %1951
        %v1953 = vsel %vm1743, %v1943, 0.0
        %1954 = vadd.xlane.f32.xlu0 %v1953
        %v1955 = vpop.xlane.xlu0 %1954
        %v1956 = vlaneseq
        %v1957 = vshrl.u32 %v1956, 7
        %v1958 = vsub.s32 4, %v1957
        %v1959 = vrot.slane %v1718, %v1958
        %v1960 = vlaneseq
        %v1961 = vshrl.u32 %v1960, 7
        %v1962 = vsub.s32 4, %v1961
        %v1963 = vrot.slane %v1724, %v1962
        %v1964 = vlaneseq
        %v1965 = vshrl.u32 %v1964, 7
        %v1966 = vsub.s32 4, %v1965
        %v1967 = vrot.slane %v1730, %v1966
        %v1968 = vlaneseq
        %v1969 = vshrl.u32 %v1968, 7
        %v1970 = vsub.s32 4, %v1969
        %v1971 = vrot.slane %v1736, %v1970
        %1976 = vrot.lane.b32.xlu0 %v1959, 96
        %v1977 = vpop.permute.xlu0 %1976
        %1978 = vrot.lane.b32.xlu0 %v1963, 96
        %v1979 = vpop.permute.xlu0 %1978
        %1980 = vrot.lane.b32.xlu0 %v1967, 96
        %v1981 = vpop.permute.xlu0 %1980
        %1982 = vrot.lane.b32.xlu0 %v1971, 96
        %v1983 = vpop.permute.xlu0 %1982
        %v1988 = vmul.f32 %v1718, %v1977
        %v1989 = vmul.f32 %v1724, %v1979
        %v1990 = vmul.f32 %v1730, %v1981
        %v1991 = vmul.f32 %v1736, %v1983
        %v1992 = vsel %vm1743, %v1988, 0.0
        %1993 = vadd.xlane.f32.xlu0 %v1992
        %v1994 = vpop.xlane.xlu0 %1993
        %v1995 = vsel %vm1743, %v1989, 0.0
        %1996 = vadd.xlane.f32.xlu0 %v1995
        %v1997 = vpop.xlane.xlu0 %1996
        %v1998 = vsel %vm1743, %v1990, 0.0
        %1999 = vadd.xlane.f32.xlu0 %v1998
        %v2000 = vpop.xlane.xlu0 %1999
        %v2001 = vsel %vm1743, %v1991, 0.0
        %2002 = vadd.xlane.f32.xlu0 %v2001
        %v2003 = vpop.xlane.xlu0 %2002
        %v2004 = vlaneseq
        %v2005 = vshrl.u32 %v2004, 7
        %v2006 = vsub.s32 5, %v2005
        %v2007 = vrot.slane %v1718, %v2006
        %v2008 = vlaneseq
        %v2009 = vshrl.u32 %v2008, 7
        %v2010 = vsub.s32 5, %v2009
        %v2011 = vrot.slane %v1724, %v2010
        %v2012 = vlaneseq
        %v2013 = vshrl.u32 %v2012, 7
        %v2014 = vsub.s32 5, %v2013
        %v2015 = vrot.slane %v1730, %v2014
        %v2016 = vlaneseq
        %v2017 = vshrl.u32 %v2016, 7
        %v2018 = vsub.s32 5, %v2017
        %v2019 = vrot.slane %v1736, %v2018
        %2024 = vrot.lane.b32.xlu0 %v2007, 96
        %v2025 = vpop.permute.xlu0 %2024
        %2026 = vrot.lane.b32.xlu0 %v2011, 96
        %v2027 = vpop.permute.xlu0 %2026
        %2028 = vrot.lane.b32.xlu0 %v2015, 96
        %v2029 = vpop.permute.xlu0 %2028
        %2030 = vrot.lane.b32.xlu0 %v2019, 96
        %v2031 = vpop.permute.xlu0 %2030
        %v2036 = vmul.f32 %v1718, %v2025
        %v2037 = vmul.f32 %v1724, %v2027
        %v2038 = vmul.f32 %v1730, %v2029
        %v2039 = vmul.f32 %v1736, %v2031
        %v2040 = vsel %vm1743, %v2036, 0.0
        %2041 = vadd.xlane.f32.xlu0 %v2040
        %v2042 = vpop.xlane.xlu0 %2041
        %v2043 = vsel %vm1743, %v2037, 0.0
        %2044 = vadd.xlane.f32.xlu0 %v2043
        %v2045 = vpop.xlane.xlu0 %2044
        %v2046 = vsel %vm1743, %v2038, 0.0
        %2047 = vadd.xlane.f32.xlu0 %v2046
        %v2048 = vpop.xlane.xlu0 %2047
        %v2049 = vsel %vm1743, %v2039, 0.0
        %2050 = vadd.xlane.f32.xlu0 %v2049
        %v2051 = vpop.xlane.xlu0 %2050
        %v2052 = vlaneseq
        %v2053 = vshrl.u32 %v2052, 7
        %v2054 = vsub.s32 6, %v2053
        %v2055 = vrot.slane %v1718, %v2054
        %v2056 = vlaneseq
        %v2057 = vshrl.u32 %v2056, 7
        %v2058 = vsub.s32 6, %v2057
        %v2059 = vrot.slane %v1724, %v2058
        %v2060 = vlaneseq
        %v2061 = vshrl.u32 %v2060, 7
        %v2062 = vsub.s32 6, %v2061
        %v2063 = vrot.slane %v1730, %v2062
        %v2064 = vlaneseq
        %v2065 = vshrl.u32 %v2064, 7
        %v2066 = vsub.s32 6, %v2065
        %v2067 = vrot.slane %v1736, %v2066
        %2072 = vrot.lane.b32.xlu0 %v2055, 96
        %v2073 = vpop.permute.xlu0 %2072
        %2074 = vrot.lane.b32.xlu0 %v2059, 96
        %v2075 = vpop.permute.xlu0 %2074
        %2076 = vrot.lane.b32.xlu0 %v2063, 96
        %v2077 = vpop.permute.xlu0 %2076
        %2078 = vrot.lane.b32.xlu0 %v2067, 96
        %v2079 = vpop.permute.xlu0 %2078
        %v2084 = vmul.f32 %v1718, %v2073
        %v2085 = vmul.f32 %v1724, %v2075
        %v2086 = vmul.f32 %v1730, %v2077
        %v2087 = vmul.f32 %v1736, %v2079
        %v2088 = vsel %vm1743, %v2084, 0.0
        %2089 = vadd.xlane.f32.xlu0 %v2088
        %v2090 = vpop.xlane.xlu0 %2089
        %v2091 = vsel %vm1743, %v2085, 0.0
        %2092 = vadd.xlane.f32.xlu0 %v2091
        %v2093 = vpop.xlane.xlu0 %2092
        %v2094 = vsel %vm1743, %v2086, 0.0
        %2095 = vadd.xlane.f32.xlu0 %v2094
        %v2096 = vpop.xlane.xlu0 %2095
        %v2097 = vsel %vm1743, %v2087, 0.0
        %2098 = vadd.xlane.f32.xlu0 %v2097
        %v2099 = vpop.xlane.xlu0 %2098
        %v2100 = vlaneseq
        %v2101 = vshrl.u32 %v2100, 7
        %v2102 = vsub.s32 7, %v2101
        %v2103 = vrot.slane %v1718, %v2102
        %v2104 = vlaneseq
        %v2105 = vshrl.u32 %v2104, 7
        %v2106 = vsub.s32 7, %v2105
        %v2107 = vrot.slane %v1724, %v2106
        %v2108 = vlaneseq
        %v2109 = vshrl.u32 %v2108, 7
        %v2110 = vsub.s32 7, %v2109
        %v2111 = vrot.slane %v1730, %v2110
        %v2112 = vlaneseq
        %v2113 = vshrl.u32 %v2112, 7
        %v2114 = vsub.s32 7, %v2113
        %v2115 = vrot.slane %v1736, %v2114
        %2120 = vrot.lane.b32.xlu0 %v2103, 96
        %v2121 = vpop.permute.xlu0 %2120
        %2122 = vrot.lane.b32.xlu0 %v2107, 96
        %v2123 = vpop.permute.xlu0 %2122
        %2124 = vrot.lane.b32.xlu0 %v2111, 96
        %v2125 = vpop.permute.xlu0 %2124
        %2126 = vrot.lane.b32.xlu0 %v2115, 96
        %v2127 = vpop.permute.xlu0 %2126
        %v2132 = vmul.f32 %v1718, %v2121
        %v2133 = vmul.f32 %v1724, %v2123
        %v2134 = vmul.f32 %v1730, %v2125
        %v2135 = vmul.f32 %v1736, %v2127
        %v2136 = vsel %vm1743, %v2132, 0.0
        %2137 = vadd.xlane.f32.xlu0 %v2136
        %v2138 = vpop.xlane.xlu0 %2137
        %v2139 = vsel %vm1743, %v2133, 0.0
        %2140 = vadd.xlane.f32.xlu0 %v2139
        %v2141 = vpop.xlane.xlu0 %2140
        %v2142 = vsel %vm1743, %v2134, 0.0
        %2143 = vadd.xlane.f32.xlu0 %v2142
        %v2144 = vpop.xlane.xlu0 %2143
        %v2145 = vsel %vm1743, %v2135, 0.0
        %2146 = vadd.xlane.f32.xlu0 %v2145
        %v2147 = vpop.xlane.xlu0 %2146
        %vm2148 = vcmask 7168
        %v2149 = vsel %vm2148, %v1802, %v1850
        %v2150 = vsel %vm2148, %v1805, %v1853
        %v2151 = vsel %vm2148, %v1808, %v1856
        %v2152 = vsel %vm2148, %v1811, %v1859
        %vm2153 = vcmask 15360
        %v2154 = vsel %vm2153, %v2149, %v1898
        %v2155 = vsel %vm2153, %v2150, %v1901
        %v2156 = vsel %vm2153, %v2151, %v1904
        %v2157 = vsel %vm2153, %v2152, %v1907
        %vm2158 = vcmask 23552
        %v2159 = vsel %vm2158, %v2154, %v1946
        %v2160 = vsel %vm2158, %v2155, %v1949
        %v2161 = vsel %vm2158, %v2156, %v1952
        %v2162 = vsel %vm2158, %v2157, %v1955
        %vm2163 = vcmask 31744
        %v2164 = vsel %vm2163, %v2159, %v1994
        %v2165 = vsel %vm2163, %v2160, %v1997
        %v2166 = vsel %vm2163, %v2161, %v2000
        %v2167 = vsel %vm2163, %v2162, %v2003
        %vm2168 = vcmask 39936
        %v2169 = vsel %vm2168, %v2164, %v2042
        %v2170 = vsel %vm2168, %v2165, %v2045
        %v2171 = vsel %vm2168, %v2166, %v2048
        %v2172 = vsel %vm2168, %v2167, %v2051
        %vm2173 = vcmask 48128
        %v2174 = vsel %vm2173, %v2169, %v2090
        %v2175 = vsel %vm2173, %v2170, %v2093
        %v2176 = vsel %vm2173, %v2171, %v2096
        %v2177 = vsel %vm2173, %v2172, %v2099
        %vm2178 = vcmask 56320
        %v2179 = vsel %vm2178, %v2174, %v2138
        %v2180 = vsel %vm2178, %v2175, %v2141
        %v2181 = vsel %vm2178, %v2176, %v2144
        %v2182 = vsel %vm2178, %v2177, %v2147
        %v2183 = vadd.f32 %v2179, %v1739
        %v2184 = vadd.f32 %v2180, %v1740
        %v2185 = vadd.f32 %v2181, %v1741
        %v2186 = vadd.f32 %v2182, %v1742
        %v2187 = vsel %vm1743, %v2183, -inf
        %2188 = vmax.xlane.f32.xlu0 %v2187
        %v2189 = vpop.xlane.xlu0 %2188
        %v2190 = vsel %vm1743, %v2184, -inf
        %2191 = vmax.xlane.f32.xlu0 %v2190
        %v2192 = vpop.xlane.xlu0 %2191
        %v2193 = vsel %vm1743, %v2185, -inf
        %2194 = vmax.xlane.f32.xlu0 %v2193
        %v2195 = vpop.xlane.xlu0 %2194
        %v2196 = vsel %vm1743, %v2186, -inf
        %2197 = vmax.xlane.f32.xlu0 %v2196
        %v2198 = vpop.xlane.xlu0 %2197
        %v2199 = vsub.f32 %v2183, %v2189
        %v2200 = vsub.f32 %v2184, %v2192
        %v2201 = vsub.f32 %v2185, %v2195
        %v2202 = vsub.f32 %v2186, %v2198
        %v2203 = vmul.f32 %v2199, 1.442695
        %v2204 = vpow.pop %v2203
        %v2205 = vmul.f32 %v2200, 1.442695
        %v2206 = vpow.pop %v2205
        %v2207 = vmul.f32 %v2201, 1.442695
        %v2208 = vpow.pop %v2207
        %v2209 = vmul.f32 %v2202, 1.442695
        %v2210 = vpow.pop %v2209
        %v2211 = vsel %vm1743, %v2204, 0.0
        %2212 = vadd.xlane.f32.xlu0 %v2211
        %v2213 = vpop.xlane.xlu0 %2212
        %v2214 = vsel %vm1743, %v2206, 0.0
        %2215 = vadd.xlane.f32.xlu0 %v2214
        %v2216 = vpop.xlane.xlu0 %2215
        %v2217 = vsel %vm1743, %v2208, 0.0
        %2218 = vadd.xlane.f32.xlu0 %v2217
        %v2219 = vpop.xlane.xlu0 %2218
        %v2220 = vsel %vm1743, %v2210, 0.0
        %2221 = vadd.xlane.f32.xlu0 %v2220
        %v2222 = vpop.xlane.xlu0 %2221
        %v2223 = vrcp.pop %v2213
        %v2224 = vrcp.pop %v2216
        %v2225 = vrcp.pop %v2219
        %v2226 = vrcp.pop %v2222
        %v2227 = vmul.f32 %v2204, %v2223
        %v2228 = vmul.f32 %v2206, %v2224
        %v2229 = vmul.f32 %v2208, %v2225
        %v2230 = vmul.f32 %v2210, %v2226
        %v2231 = vsel %vm1756, 1, 0
        %v2232 = vsel %vm1757, 1, 0
        %v2233 = vsel %vm1758, 1, 0
        %v2234 = vsel %vm1759, 1, 0
        %vm2235 = vcmp.eq.s32.totalorder %v2231, 1
        %vm2236 = vcmp.eq.s32.totalorder %v2232, 1
        %vm2237 = vcmp.eq.s32.totalorder %v2233, 1
        %vm2238 = vcmp.eq.s32.totalorder %v2234, 1
        %v2239 = vsel %vm2235, %v2227, 0.0
        %v2240 = vsel %vm2236, %v2228, 0.0
        %v2241 = vsel %vm2237, %v2229, 0.0
        %v2242 = vsel %vm2238, %v2230, 0.0
        %2244 = vset.pattern.permute.xlu0 0
        %2245 = vperm.xlu0 %2244, %v2239
        %v2246 = vpop.permute.xlu0 %2245
        %2249 = vset.pattern.permute.xlu0 0
        %2250 = vperm.xlu0 %2249, %v2240
        %v2251 = vpop.permute.xlu0 %2250
        %2254 = vset.pattern.permute.xlu0 0
        %2255 = vperm.xlu0 %2254, %v2241
        %v2256 = vpop.permute.xlu0 %2255
        %2259 = vset.pattern.permute.xlu0 0
        %2260 = vperm.xlu0 %2259, %v2242
        %v2261 = vpop.permute.xlu0 %2260
        %v2263 = vmul.f32 %v2246, %v1767
        %v2264 = vmul.f32 %v2251, %v1771
        %v2265 = vmul.f32 %v2256, %v1775
        %v2266 = vmul.f32 %v2261, %v1779
        %2267 = vset.pattern.permute.xlu0 1
        %2268 = vperm.xlu0 %2267, %v2239
        %v2269 = vpop.permute.xlu0 %2268
        %2271 = vset.pattern.permute.xlu0 1
        %2272 = vperm.xlu0 %2271, %v2240
        %v2273 = vpop.permute.xlu0 %2272
        %2275 = vset.pattern.permute.xlu0 1
        %2276 = vperm.xlu0 %2275, %v2241
        %v2277 = vpop.permute.xlu0 %2276
        %2279 = vset.pattern.permute.xlu0 1
        %2280 = vperm.xlu0 %2279, %v2242
        %v2281 = vpop.permute.xlu0 %2280
        %v2283 = vmul.f32 %v2269, %v1815
        %v2284 = vmul.f32 %v2273, %v1819
        %v2285 = vmul.f32 %v2277, %v1823
        %v2286 = vmul.f32 %v2281, %v1827
        %v2287 = vadd.f32 %v2263, %v2283
        %v2288 = vadd.f32 %v2264, %v2284
        %v2289 = vadd.f32 %v2265, %v2285
        %v2290 = vadd.f32 %v2266, %v2286
        %2291 = vset.pattern.permute.xlu0 2
        %2292 = vperm.xlu0 %2291, %v2239
        %v2293 = vpop.permute.xlu0 %2292
        %2295 = vset.pattern.permute.xlu0 2
        %2296 = vperm.xlu0 %2295, %v2240
        %v2297 = vpop.permute.xlu0 %2296
        %2299 = vset.pattern.permute.xlu0 2
        %2300 = vperm.xlu0 %2299, %v2241
        %v2301 = vpop.permute.xlu0 %2300
        %2303 = vset.pattern.permute.xlu0 2
        %2304 = vperm.xlu0 %2303, %v2242
        %v2305 = vpop.permute.xlu0 %2304
        %v2307 = vmul.f32 %v2293, %v1863
        %v2308 = vmul.f32 %v2297, %v1867
        %v2309 = vmul.f32 %v2301, %v1871
        %v2310 = vmul.f32 %v2305, %v1875
        %v2311 = vadd.f32 %v2287, %v2307
        %v2312 = vadd.f32 %v2288, %v2308
        %v2313 = vadd.f32 %v2289, %v2309
        %v2314 = vadd.f32 %v2290, %v2310
        %2315 = vset.pattern.permute.xlu0 3
        %2316 = vperm.xlu0 %2315, %v2239
        %v2317 = vpop.permute.xlu0 %2316
        %2319 = vset.pattern.permute.xlu0 3
        %2320 = vperm.xlu0 %2319, %v2240
        %v2321 = vpop.permute.xlu0 %2320
        %2323 = vset.pattern.permute.xlu0 3
        %2324 = vperm.xlu0 %2323, %v2241
        %v2325 = vpop.permute.xlu0 %2324
        %2327 = vset.pattern.permute.xlu0 3
        %2328 = vperm.xlu0 %2327, %v2242
        %v2329 = vpop.permute.xlu0 %2328
        %v2331 = vmul.f32 %v2317, %v1911
        %v2332 = vmul.f32 %v2321, %v1915
        %v2333 = vmul.f32 %v2325, %v1919
        %v2334 = vmul.f32 %v2329, %v1923
        %v2335 = vadd.f32 %v2311, %v2331
        %v2336 = vadd.f32 %v2312, %v2332
        %v2337 = vadd.f32 %v2313, %v2333
        %v2338 = vadd.f32 %v2314, %v2334
        %2339 = vset.pattern.permute.xlu0 4
        %2340 = vperm.xlu0 %2339, %v2239
        %v2341 = vpop.permute.xlu0 %2340
        %2343 = vset.pattern.permute.xlu0 4
        %2344 = vperm.xlu0 %2343, %v2240
        %v2345 = vpop.permute.xlu0 %2344
        %2347 = vset.pattern.permute.xlu0 4
        %2348 = vperm.xlu0 %2347, %v2241
        %v2349 = vpop.permute.xlu0 %2348
        %2351 = vset.pattern.permute.xlu0 4
        %2352 = vperm.xlu0 %2351, %v2242
        %v2353 = vpop.permute.xlu0 %2352
        %v2355 = vmul.f32 %v2341, %v1959
        %v2356 = vmul.f32 %v2345, %v1963
        %v2357 = vmul.f32 %v2349, %v1967
        %v2358 = vmul.f32 %v2353, %v1971
        %v2359 = vadd.f32 %v2335, %v2355
        %v2360 = vadd.f32 %v2336, %v2356
        %v2361 = vadd.f32 %v2337, %v2357
        %v2362 = vadd.f32 %v2338, %v2358
        %2363 = vset.pattern.permute.xlu0 5
        %2364 = vperm.xlu0 %2363, %v2239
        %v2365 = vpop.permute.xlu0 %2364
        %2367 = vset.pattern.permute.xlu0 5
        %2368 = vperm.xlu0 %2367, %v2240
        %v2369 = vpop.permute.xlu0 %2368
        %2371 = vset.pattern.permute.xlu0 5
        %2372 = vperm.xlu0 %2371, %v2241
        %v2373 = vpop.permute.xlu0 %2372
        %2375 = vset.pattern.permute.xlu0 5
        %2376 = vperm.xlu0 %2375, %v2242
        %v2377 = vpop.permute.xlu0 %2376
        %v2379 = vmul.f32 %v2365, %v2007
        %v2380 = vmul.f32 %v2369, %v2011
        %v2381 = vmul.f32 %v2373, %v2015
        %v2382 = vmul.f32 %v2377, %v2019
        %v2383 = vadd.f32 %v2359, %v2379
        %v2384 = vadd.f32 %v2360, %v2380
        %v2385 = vadd.f32 %v2361, %v2381
        %v2386 = vadd.f32 %v2362, %v2382
        %2387 = vset.pattern.permute.xlu0 6
        %2388 = vperm.xlu0 %2387, %v2239
        %v2389 = vpop.permute.xlu0 %2388
        %2391 = vset.pattern.permute.xlu0 6
        %2392 = vperm.xlu0 %2391, %v2240
        %v2393 = vpop.permute.xlu0 %2392
        %2395 = vset.pattern.permute.xlu0 6
        %2396 = vperm.xlu0 %2395, %v2241
        %v2397 = vpop.permute.xlu0 %2396
        %2399 = vset.pattern.permute.xlu0 6
        %2400 = vperm.xlu0 %2399, %v2242
        %v2401 = vpop.permute.xlu0 %2400
        %v2403 = vmul.f32 %v2389, %v2055
        %v2404 = vmul.f32 %v2393, %v2059
        %v2405 = vmul.f32 %v2397, %v2063
        %v2406 = vmul.f32 %v2401, %v2067
        %v2407 = vadd.f32 %v2383, %v2403
        %v2408 = vadd.f32 %v2384, %v2404
        %v2409 = vadd.f32 %v2385, %v2405
        %v2410 = vadd.f32 %v2386, %v2406
        %2411 = vset.pattern.permute.xlu0 7
        %2412 = vperm.xlu0 %2411, %v2239
        %v2413 = vpop.permute.xlu0 %2412
        %2415 = vset.pattern.permute.xlu0 7
        %2416 = vperm.xlu0 %2415, %v2240
        %v2417 = vpop.permute.xlu0 %2416
        %2419 = vset.pattern.permute.xlu0 7
        %2420 = vperm.xlu0 %2419, %v2241
        %v2421 = vpop.permute.xlu0 %2420
        %2423 = vset.pattern.permute.xlu0 7
        %2424 = vperm.xlu0 %2423, %v2242
        %v2425 = vpop.permute.xlu0 %2424
        %v2427 = vmul.f32 %v2413, %v2103
        %v2428 = vmul.f32 %v2417, %v2107
        %v2429 = vmul.f32 %v2421, %v2111
        %v2430 = vmul.f32 %v2425, %v2115
        %v2431 = vadd.f32 %v2407, %v2427
        %v2432 = vadd.f32 %v2408, %v2428
        %v2433 = vadd.f32 %v2409, %v2429
        %v2434 = vadd.f32 %v2410, %v2430
        %2439 = vrot.lane.b32.xlu0 %v1796, 120
        %v2440 = vpop.permute.xlu0 %2439
        %2441 = vrot.lane.b32.xlu0 %v1797, 120
        %v2442 = vpop.permute.xlu0 %2441
        %2443 = vrot.lane.b32.xlu0 %v1798, 120
        %v2444 = vpop.permute.xlu0 %2443
        %2445 = vrot.lane.b32.xlu0 %v1799, 120
        %v2446 = vpop.permute.xlu0 %2445
        %v2451 = vsel %vm1743, %v2440, 0.0
        %2452 = vadd.xlane.f32.xlu0 %v2451
        %v2453 = vpop.xlane.xlu0 %2452
        %v2454 = vsel %vm1743, %v2442, 0.0
        %2455 = vadd.xlane.f32.xlu0 %v2454
        %v2456 = vpop.xlane.xlu0 %2455
        %v2457 = vsel %vm1743, %v2444, 0.0
        %2458 = vadd.xlane.f32.xlu0 %v2457
        %v2459 = vpop.xlane.xlu0 %2458
        %v2460 = vsel %vm1743, %v2446, 0.0
        %2461 = vadd.xlane.f32.xlu0 %v2460
        %v2462 = vpop.xlane.xlu0 %2461
        %2467 = vrot.lane.b32.xlu0 %v1844, 120
        %v2468 = vpop.permute.xlu0 %2467
        %2469 = vrot.lane.b32.xlu0 %v1845, 120
        %v2470 = vpop.permute.xlu0 %2469
        %2471 = vrot.lane.b32.xlu0 %v1846, 120
        %v2472 = vpop.permute.xlu0 %2471
        %2473 = vrot.lane.b32.xlu0 %v1847, 120
        %v2474 = vpop.permute.xlu0 %2473
        %v2479 = vsel %vm1743, %v2468, 0.0
        %2480 = vadd.xlane.f32.xlu0 %v2479
        %v2481 = vpop.xlane.xlu0 %2480
        %v2482 = vsel %vm1743, %v2470, 0.0
        %2483 = vadd.xlane.f32.xlu0 %v2482
        %v2484 = vpop.xlane.xlu0 %2483
        %v2485 = vsel %vm1743, %v2472, 0.0
        %2486 = vadd.xlane.f32.xlu0 %v2485
        %v2487 = vpop.xlane.xlu0 %2486
        %v2488 = vsel %vm1743, %v2474, 0.0
        %2489 = vadd.xlane.f32.xlu0 %v2488
        %v2490 = vpop.xlane.xlu0 %2489
        %2495 = vrot.lane.b32.xlu0 %v1892, 120
        %v2496 = vpop.permute.xlu0 %2495
        %2497 = vrot.lane.b32.xlu0 %v1893, 120
        %v2498 = vpop.permute.xlu0 %2497
        %2499 = vrot.lane.b32.xlu0 %v1894, 120
        %v2500 = vpop.permute.xlu0 %2499
        %2501 = vrot.lane.b32.xlu0 %v1895, 120
        %v2502 = vpop.permute.xlu0 %2501
        %v2507 = vsel %vm1743, %v2496, 0.0
        %2508 = vadd.xlane.f32.xlu0 %v2507
        %v2509 = vpop.xlane.xlu0 %2508
        %v2510 = vsel %vm1743, %v2498, 0.0
        %2511 = vadd.xlane.f32.xlu0 %v2510
        %v2512 = vpop.xlane.xlu0 %2511
        %v2513 = vsel %vm1743, %v2500, 0.0
        %2514 = vadd.xlane.f32.xlu0 %v2513
        %v2515 = vpop.xlane.xlu0 %2514
        %v2516 = vsel %vm1743, %v2502, 0.0
        %2517 = vadd.xlane.f32.xlu0 %v2516
        %v2518 = vpop.xlane.xlu0 %2517
        %2523 = vrot.lane.b32.xlu0 %v1940, 120
        %v2524 = vpop.permute.xlu0 %2523
        %2525 = vrot.lane.b32.xlu0 %v1941, 120
        %v2526 = vpop.permute.xlu0 %2525
        %2527 = vrot.lane.b32.xlu0 %v1942, 120
        %v2528 = vpop.permute.xlu0 %2527
        %2529 = vrot.lane.b32.xlu0 %v1943, 120
        %v2530 = vpop.permute.xlu0 %2529
        %v2535 = vsel %vm1743, %v2524, 0.0
        %2536 = vadd.xlane.f32.xlu0 %v2535
        %v2537 = vpop.xlane.xlu0 %2536
        %v2538 = vsel %vm1743, %v2526, 0.0
        %2539 = vadd.xlane.f32.xlu0 %v2538
        %v2540 = vpop.xlane.xlu0 %2539
        %v2541 = vsel %vm1743, %v2528, 0.0
        %2542 = vadd.xlane.f32.xlu0 %v2541
        %v2543 = vpop.xlane.xlu0 %2542
        %v2544 = vsel %vm1743, %v2530, 0.0
        %2545 = vadd.xlane.f32.xlu0 %v2544
        %v2546 = vpop.xlane.xlu0 %2545
        %2551 = vrot.lane.b32.xlu0 %v1988, 120
        %v2552 = vpop.permute.xlu0 %2551
        %2553 = vrot.lane.b32.xlu0 %v1989, 120
        %v2554 = vpop.permute.xlu0 %2553
        %2555 = vrot.lane.b32.xlu0 %v1990, 120
        %v2556 = vpop.permute.xlu0 %2555
        %2557 = vrot.lane.b32.xlu0 %v1991, 120
        %v2558 = vpop.permute.xlu0 %2557
        %v2563 = vsel %vm1743, %v2552, 0.0
        %2564 = vadd.xlane.f32.xlu0 %v2563
        %v2565 = vpop.xlane.xlu0 %2564
        %v2566 = vsel %vm1743, %v2554, 0.0
        %2567 = vadd.xlane.f32.xlu0 %v2566
        %v2568 = vpop.xlane.xlu0 %2567
        %v2569 = vsel %vm1743, %v2556, 0.0
        %2570 = vadd.xlane.f32.xlu0 %v2569
        %v2571 = vpop.xlane.xlu0 %2570
        %v2572 = vsel %vm1743, %v2558, 0.0
        %2573 = vadd.xlane.f32.xlu0 %v2572
        %v2574 = vpop.xlane.xlu0 %2573
        %2579 = vrot.lane.b32.xlu0 %v2036, 120
        %v2580 = vpop.permute.xlu0 %2579
        %2581 = vrot.lane.b32.xlu0 %v2037, 120
        %v2582 = vpop.permute.xlu0 %2581
        %2583 = vrot.lane.b32.xlu0 %v2038, 120
        %v2584 = vpop.permute.xlu0 %2583
        %2585 = vrot.lane.b32.xlu0 %v2039, 120
        %v2586 = vpop.permute.xlu0 %2585
        %v2591 = vsel %vm1743, %v2580, 0.0
        %2592 = vadd.xlane.f32.xlu0 %v2591
        %v2593 = vpop.xlane.xlu0 %2592
        %v2594 = vsel %vm1743, %v2582, 0.0
        %2595 = vadd.xlane.f32.xlu0 %v2594
        %v2596 = vpop.xlane.xlu0 %2595
        %v2597 = vsel %vm1743, %v2584, 0.0
        %2598 = vadd.xlane.f32.xlu0 %v2597
        %v2599 = vpop.xlane.xlu0 %2598
        %v2600 = vsel %vm1743, %v2586, 0.0
        %2601 = vadd.xlane.f32.xlu0 %v2600
        %v2602 = vpop.xlane.xlu0 %2601
        %2607 = vrot.lane.b32.xlu0 %v2084, 120
        %v2608 = vpop.permute.xlu0 %2607
        %2609 = vrot.lane.b32.xlu0 %v2085, 120
        %v2610 = vpop.permute.xlu0 %2609
        %2611 = vrot.lane.b32.xlu0 %v2086, 120
        %v2612 = vpop.permute.xlu0 %2611
        %2613 = vrot.lane.b32.xlu0 %v2087, 120
        %v2614 = vpop.permute.xlu0 %2613
        %v2619 = vsel %vm1743, %v2608, 0.0
        %2620 = vadd.xlane.f32.xlu0 %v2619
        %v2621 = vpop.xlane.xlu0 %2620
        %v2622 = vsel %vm1743, %v2610, 0.0
        %2623 = vadd.xlane.f32.xlu0 %v2622
        %v2624 = vpop.xlane.xlu0 %2623
        %v2625 = vsel %vm1743, %v2612, 0.0
        %2626 = vadd.xlane.f32.xlu0 %v2625
        %v2627 = vpop.xlane.xlu0 %2626
        %v2628 = vsel %vm1743, %v2614, 0.0
        %2629 = vadd.xlane.f32.xlu0 %v2628
        %v2630 = vpop.xlane.xlu0 %2629
        %2635 = vrot.lane.b32.xlu0 %v2132, 120
        %v2636 = vpop.permute.xlu0 %2635
        %2637 = vrot.lane.b32.xlu0 %v2133, 120
        %v2638 = vpop.permute.xlu0 %2637
        %2639 = vrot.lane.b32.xlu0 %v2134, 120
        %v2640 = vpop.permute.xlu0 %2639
        %2641 = vrot.lane.b32.xlu0 %v2135, 120
        %v2642 = vpop.permute.xlu0 %2641
        %v2647 = vsel %vm1743, %v2636, 0.0
        %2648 = vadd.xlane.f32.xlu0 %v2647
        %v2649 = vpop.xlane.xlu0 %2648
        %v2650 = vsel %vm1743, %v2638, 0.0
        %2651 = vadd.xlane.f32.xlu0 %v2650
        %v2652 = vpop.xlane.xlu0 %2651
        %v2653 = vsel %vm1743, %v2640, 0.0
        %2654 = vadd.xlane.f32.xlu0 %v2653
        %v2655 = vpop.xlane.xlu0 %2654
        %v2656 = vsel %vm1743, %v2642, 0.0
        %2657 = vadd.xlane.f32.xlu0 %v2656
        %v2658 = vpop.xlane.xlu0 %2657
        %v2659 = vsel %vm2148, %v2453, %v2481
        %v2660 = vsel %vm2148, %v2456, %v2484
        %v2661 = vsel %vm2148, %v2459, %v2487
        %v2662 = vsel %vm2148, %v2462, %v2490
        %v2663 = vsel %vm2153, %v2659, %v2509
        %v2664 = vsel %vm2153, %v2660, %v2512
        %v2665 = vsel %vm2153, %v2661, %v2515
        %v2666 = vsel %vm2153, %v2662, %v2518
        %v2667 = vsel %vm2158, %v2663, %v2537
        %v2668 = vsel %vm2158, %v2664, %v2540
        %v2669 = vsel %vm2158, %v2665, %v2543
        %v2670 = vsel %vm2158, %v2666, %v2546
        %v2671 = vsel %vm2163, %v2667, %v2565
        %v2672 = vsel %vm2163, %v2668, %v2568
        %v2673 = vsel %vm2163, %v2669, %v2571
        %v2674 = vsel %vm2163, %v2670, %v2574
        %v2675 = vsel %vm2168, %v2671, %v2593
        %v2676 = vsel %vm2168, %v2672, %v2596
        %v2677 = vsel %vm2168, %v2673, %v2599
        %v2678 = vsel %vm2168, %v2674, %v2602
        %v2679 = vsel %vm2173, %v2675, %v2621
        %v2680 = vsel %vm2173, %v2676, %v2624
        %v2681 = vsel %vm2173, %v2677, %v2627
        %v2682 = vsel %vm2173, %v2678, %v2630
        %v2683 = vsel %vm2178, %v2679, %v2649
        %v2684 = vsel %vm2178, %v2680, %v2652
        %v2685 = vsel %vm2178, %v2681, %v2655
        %v2686 = vsel %vm2178, %v2682, %v2658
        %v2687 = vadd.f32 %v2683, %v1739
        %v2688 = vadd.f32 %v2684, %v1740
        %v2689 = vadd.f32 %v2685, %v1741
        %v2690 = vadd.f32 %v2686, %v1742
        %v2691 = vsel %vm1743, %v2687, -inf
        %2692 = vmax.xlane.f32.xlu0 %v2691
        %v2693 = vpop.xlane.xlu0 %2692
        %v2694 = vsel %vm1743, %v2688, -inf
        %2695 = vmax.xlane.f32.xlu0 %v2694
        %v2696 = vpop.xlane.xlu0 %2695
        %v2697 = vsel %vm1743, %v2689, -inf
        %2698 = vmax.xlane.f32.xlu0 %v2697
        %v2699 = vpop.xlane.xlu0 %2698
        %v2700 = vsel %vm1743, %v2690, -inf
        %2701 = vmax.xlane.f32.xlu0 %v2700
        %v2702 = vpop.xlane.xlu0 %2701
        %v2703 = vsub.f32 %v2687, %v2693
        %v2704 = vsub.f32 %v2688, %v2696
        %v2705 = vsub.f32 %v2689, %v2699
        %v2706 = vsub.f32 %v2690, %v2702
        %v2707 = vmul.f32 %v2703, 1.442695
        %v2708 = vpow.pop %v2707
        %v2709 = vmul.f32 %v2704, 1.442695
        %v2710 = vpow.pop %v2709
        %v2711 = vmul.f32 %v2705, 1.442695
        %v2712 = vpow.pop %v2711
        %v2713 = vmul.f32 %v2706, 1.442695
        %v2714 = vpow.pop %v2713
        %v2715 = vsel %vm1743, %v2708, 0.0
        %2716 = vadd.xlane.f32.xlu0 %v2715
        %v2717 = vpop.xlane.xlu0 %2716
        %v2718 = vsel %vm1743, %v2710, 0.0
        %2719 = vadd.xlane.f32.xlu0 %v2718
        %v2720 = vpop.xlane.xlu0 %2719
        %v2721 = vsel %vm1743, %v2712, 0.0
        %2722 = vadd.xlane.f32.xlu0 %v2721
        %v2723 = vpop.xlane.xlu0 %2722
        %v2724 = vsel %vm1743, %v2714, 0.0
        %2725 = vadd.xlane.f32.xlu0 %v2724
        %v2726 = vpop.xlane.xlu0 %2725
        %v2727 = vrcp.pop %v2717
        %v2728 = vrcp.pop %v2720
        %v2729 = vrcp.pop %v2723
        %v2730 = vrcp.pop %v2726
        %v2731 = vmul.f32 %v2708, %v2727
        %v2732 = vmul.f32 %v2710, %v2728
        %v2733 = vmul.f32 %v2712, %v2729
        %v2734 = vmul.f32 %v2714, %v2730
        %v2735 = vsel %vm2235, %v2731, 0.0
        %v2736 = vsel %vm2236, %v2732, 0.0
        %v2737 = vsel %vm2237, %v2733, 0.0
        %v2738 = vsel %vm2238, %v2734, 0.0
        %2740 = vset.pattern.permute.xlu0 0
        %2741 = vperm.xlu0 %2740, %v2735
        %v2742 = vpop.permute.xlu0 %2741
        %2745 = vset.pattern.permute.xlu0 0
        %2746 = vperm.xlu0 %2745, %v2736
        %v2747 = vpop.permute.xlu0 %2746
        %2750 = vset.pattern.permute.xlu0 0
        %2751 = vperm.xlu0 %2750, %v2737
        %v2752 = vpop.permute.xlu0 %2751
        %2755 = vset.pattern.permute.xlu0 0
        %2756 = vperm.xlu0 %2755, %v2738
        %v2757 = vpop.permute.xlu0 %2756
        %v2759 = vmul.f32 %v2742, %v1767
        %v2760 = vmul.f32 %v2747, %v1771
        %v2761 = vmul.f32 %v2752, %v1775
        %v2762 = vmul.f32 %v2757, %v1779
        %2763 = vset.pattern.permute.xlu0 1
        %2764 = vperm.xlu0 %2763, %v2735
        %v2765 = vpop.permute.xlu0 %2764
        %2767 = vset.pattern.permute.xlu0 1
        %2768 = vperm.xlu0 %2767, %v2736
        %v2769 = vpop.permute.xlu0 %2768
        %2771 = vset.pattern.permute.xlu0 1
        %2772 = vperm.xlu0 %2771, %v2737
        %v2773 = vpop.permute.xlu0 %2772
        %2775 = vset.pattern.permute.xlu0 1
        %2776 = vperm.xlu0 %2775, %v2738
        %v2777 = vpop.permute.xlu0 %2776
        %v2779 = vmul.f32 %v2765, %v1815
        %v2780 = vmul.f32 %v2769, %v1819
        %v2781 = vmul.f32 %v2773, %v1823
        %v2782 = vmul.f32 %v2777, %v1827
        %v2783 = vadd.f32 %v2759, %v2779
        %v2784 = vadd.f32 %v2760, %v2780
        %v2785 = vadd.f32 %v2761, %v2781
        %v2786 = vadd.f32 %v2762, %v2782
        %2787 = vset.pattern.permute.xlu0 2
        %2788 = vperm.xlu0 %2787, %v2735
        %v2789 = vpop.permute.xlu0 %2788
        %2791 = vset.pattern.permute.xlu0 2
        %2792 = vperm.xlu0 %2791, %v2736
        %v2793 = vpop.permute.xlu0 %2792
        %2795 = vset.pattern.permute.xlu0 2
        %2796 = vperm.xlu0 %2795, %v2737
        %v2797 = vpop.permute.xlu0 %2796
        %2799 = vset.pattern.permute.xlu0 2
        %2800 = vperm.xlu0 %2799, %v2738
        %v2801 = vpop.permute.xlu0 %2800
        %v2803 = vmul.f32 %v2789, %v1863
        %v2804 = vmul.f32 %v2793, %v1867
        %v2805 = vmul.f32 %v2797, %v1871
        %v2806 = vmul.f32 %v2801, %v1875
        %v2807 = vadd.f32 %v2783, %v2803
        %v2808 = vadd.f32 %v2784, %v2804
        %v2809 = vadd.f32 %v2785, %v2805
        %v2810 = vadd.f32 %v2786, %v2806
        %2811 = vset.pattern.permute.xlu0 3
        %2812 = vperm.xlu0 %2811, %v2735
        %v2813 = vpop.permute.xlu0 %2812
        %2815 = vset.pattern.permute.xlu0 3
        %2816 = vperm.xlu0 %2815, %v2736
        %v2817 = vpop.permute.xlu0 %2816
        %2819 = vset.pattern.permute.xlu0 3
        %2820 = vperm.xlu0 %2819, %v2737
        %v2821 = vpop.permute.xlu0 %2820
        %2823 = vset.pattern.permute.xlu0 3
        %2824 = vperm.xlu0 %2823, %v2738
        %v2825 = vpop.permute.xlu0 %2824
        %v2827 = vmul.f32 %v2813, %v1911
        %v2828 = vmul.f32 %v2817, %v1915
        %v2829 = vmul.f32 %v2821, %v1919
        %v2830 = vmul.f32 %v2825, %v1923
        %v2831 = vadd.f32 %v2807, %v2827
        %v2832 = vadd.f32 %v2808, %v2828
        %v2833 = vadd.f32 %v2809, %v2829
        %v2834 = vadd.f32 %v2810, %v2830
        %2835 = vset.pattern.permute.xlu0 4
        %2836 = vperm.xlu0 %2835, %v2735
        %v2837 = vpop.permute.xlu0 %2836
        %2839 = vset.pattern.permute.xlu0 4
        %2840 = vperm.xlu0 %2839, %v2736
        %v2841 = vpop.permute.xlu0 %2840
        %2843 = vset.pattern.permute.xlu0 4
        %2844 = vperm.xlu0 %2843, %v2737
        %v2845 = vpop.permute.xlu0 %2844
        %2847 = vset.pattern.permute.xlu0 4
        %2848 = vperm.xlu0 %2847, %v2738
        %v2849 = vpop.permute.xlu0 %2848
        %v2851 = vmul.f32 %v2837, %v1959
        %v2852 = vmul.f32 %v2841, %v1963
        %v2853 = vmul.f32 %v2845, %v1967
        %v2854 = vmul.f32 %v2849, %v1971
        %v2855 = vadd.f32 %v2831, %v2851
        %v2856 = vadd.f32 %v2832, %v2852
        %v2857 = vadd.f32 %v2833, %v2853
        %v2858 = vadd.f32 %v2834, %v2854
        %2859 = vset.pattern.permute.xlu0 5
        %2860 = vperm.xlu0 %2859, %v2735
        %v2861 = vpop.permute.xlu0 %2860
        %2863 = vset.pattern.permute.xlu0 5
        %2864 = vperm.xlu0 %2863, %v2736
        %v2865 = vpop.permute.xlu0 %2864
        %2867 = vset.pattern.permute.xlu0 5
        %2868 = vperm.xlu0 %2867, %v2737
        %v2869 = vpop.permute.xlu0 %2868
        %2871 = vset.pattern.permute.xlu0 5
        %2872 = vperm.xlu0 %2871, %v2738
        %v2873 = vpop.permute.xlu0 %2872
        %v2875 = vmul.f32 %v2861, %v2007
        %v2876 = vmul.f32 %v2865, %v2011
        %v2877 = vmul.f32 %v2869, %v2015
        %v2878 = vmul.f32 %v2873, %v2019
        %v2879 = vadd.f32 %v2855, %v2875
        %v2880 = vadd.f32 %v2856, %v2876
        %v2881 = vadd.f32 %v2857, %v2877
        %v2882 = vadd.f32 %v2858, %v2878
        %2883 = vset.pattern.permute.xlu0 6
        %2884 = vperm.xlu0 %2883, %v2735
        %v2885 = vpop.permute.xlu0 %2884
        %2887 = vset.pattern.permute.xlu0 6
        %2888 = vperm.xlu0 %2887, %v2736
        %v2889 = vpop.permute.xlu0 %2888
        %2891 = vset.pattern.permute.xlu0 6
        %2892 = vperm.xlu0 %2891, %v2737
        %v2893 = vpop.permute.xlu0 %2892
        %2895 = vset.pattern.permute.xlu0 6
        %2896 = vperm.xlu0 %2895, %v2738
        %v2897 = vpop.permute.xlu0 %2896
        %v2899 = vmul.f32 %v2885, %v2055
        %v2900 = vmul.f32 %v2889, %v2059
        %v2901 = vmul.f32 %v2893, %v2063
        %v2902 = vmul.f32 %v2897, %v2067
        %v2903 = vadd.f32 %v2879, %v2899
        %v2904 = vadd.f32 %v2880, %v2900
        %v2905 = vadd.f32 %v2881, %v2901
        %v2906 = vadd.f32 %v2882, %v2902
        %2907 = vset.pattern.permute.xlu0 7
        %2908 = vperm.xlu0 %2907, %v2735
        %v2909 = vpop.permute.xlu0 %2908
        %2911 = vset.pattern.permute.xlu0 7
        %2912 = vperm.xlu0 %2911, %v2736
        %v2913 = vpop.permute.xlu0 %2912
        %2915 = vset.pattern.permute.xlu0 7
        %2916 = vperm.xlu0 %2915, %v2737
        %v2917 = vpop.permute.xlu0 %2916
        %2919 = vset.pattern.permute.xlu0 7
        %2920 = vperm.xlu0 %2919, %v2738
        %v2921 = vpop.permute.xlu0 %2920
        %v2923 = vmul.f32 %v2909, %v2103
        %v2924 = vmul.f32 %v2913, %v2107
        %v2925 = vmul.f32 %v2917, %v2111
        %v2926 = vmul.f32 %v2921, %v2115
        %v2927 = vadd.f32 %v2903, %v2923
        %v2928 = vadd.f32 %v2904, %v2924
        %v2929 = vadd.f32 %v2905, %v2925
        %v2930 = vadd.f32 %v2906, %v2926
        %2931 = vrot.lane.b32.xlu0 %v1796, 112
        %v2932 = vpop.permute.xlu0 %2931
        %2933 = vrot.lane.b32.xlu0 %v1797, 112
        %v2934 = vpop.permute.xlu0 %2933
        %2935 = vrot.lane.b32.xlu0 %v1798, 112
        %v2936 = vpop.permute.xlu0 %2935
        %2937 = vrot.lane.b32.xlu0 %v1799, 112
        %v2938 = vpop.permute.xlu0 %2937
        %v2943 = vsel %vm1743, %v2932, 0.0
        %2944 = vadd.xlane.f32.xlu0 %v2943
        %v2945 = vpop.xlane.xlu0 %2944
        %v2946 = vsel %vm1743, %v2934, 0.0
        %2947 = vadd.xlane.f32.xlu0 %v2946
        %v2948 = vpop.xlane.xlu0 %2947
        %v2949 = vsel %vm1743, %v2936, 0.0
        %2950 = vadd.xlane.f32.xlu0 %v2949
        %v2951 = vpop.xlane.xlu0 %2950
        %v2952 = vsel %vm1743, %v2938, 0.0
        %2953 = vadd.xlane.f32.xlu0 %v2952
        %v2954 = vpop.xlane.xlu0 %2953
        %2955 = vrot.lane.b32.xlu0 %v1844, 112
        %v2956 = vpop.permute.xlu0 %2955
        %2957 = vrot.lane.b32.xlu0 %v1845, 112
        %v2958 = vpop.permute.xlu0 %2957
        %2959 = vrot.lane.b32.xlu0 %v1846, 112
        %v2960 = vpop.permute.xlu0 %2959
        %2961 = vrot.lane.b32.xlu0 %v1847, 112
        %v2962 = vpop.permute.xlu0 %2961
        %v2967 = vsel %vm1743, %v2956, 0.0
        %2968 = vadd.xlane.f32.xlu0 %v2967
        %v2969 = vpop.xlane.xlu0 %2968
        %v2970 = vsel %vm1743, %v2958, 0.0
        %2971 = vadd.xlane.f32.xlu0 %v2970
        %v2972 = vpop.xlane.xlu0 %2971
        %v2973 = vsel %vm1743, %v2960, 0.0
        %2974 = vadd.xlane.f32.xlu0 %v2973
        %v2975 = vpop.xlane.xlu0 %2974
        %v2976 = vsel %vm1743, %v2962, 0.0
        %2977 = vadd.xlane.f32.xlu0 %v2976
        %v2978 = vpop.xlane.xlu0 %2977
        %2979 = vrot.lane.b32.xlu0 %v1892, 112
        %v2980 = vpop.permute.xlu0 %2979
        %2981 = vrot.lane.b32.xlu0 %v1893, 112
        %v2982 = vpop.permute.xlu0 %2981
        %2983 = vrot.lane.b32.xlu0 %v1894, 112
        %v2984 = vpop.permute.xlu0 %2983
        %2985 = vrot.lane.b32.xlu0 %v1895, 112
        %v2986 = vpop.permute.xlu0 %2985
        %v2991 = vsel %vm1743, %v2980, 0.0
        %2992 = vadd.xlane.f32.xlu0 %v2991
        %v2993 = vpop.xlane.xlu0 %2992
        %v2994 = vsel %vm1743, %v2982, 0.0
        %2995 = vadd.xlane.f32.xlu0 %v2994
        %v2996 = vpop.xlane.xlu0 %2995
        %v2997 = vsel %vm1743, %v2984, 0.0
        %2998 = vadd.xlane.f32.xlu0 %v2997
        %v2999 = vpop.xlane.xlu0 %2998
        %v3000 = vsel %vm1743, %v2986, 0.0
        %3001 = vadd.xlane.f32.xlu0 %v3000
        %v3002 = vpop.xlane.xlu0 %3001
        %3003 = vrot.lane.b32.xlu0 %v1940, 112
        %v3004 = vpop.permute.xlu0 %3003
        %3005 = vrot.lane.b32.xlu0 %v1941, 112
        %v3006 = vpop.permute.xlu0 %3005
        %3007 = vrot.lane.b32.xlu0 %v1942, 112
        %v3008 = vpop.permute.xlu0 %3007
        %3009 = vrot.lane.b32.xlu0 %v1943, 112
        %v3010 = vpop.permute.xlu0 %3009
        %v3015 = vsel %vm1743, %v3004, 0.0
        %3016 = vadd.xlane.f32.xlu0 %v3015
        %v3017 = vpop.xlane.xlu0 %3016
        %v3018 = vsel %vm1743, %v3006, 0.0
        %3019 = vadd.xlane.f32.xlu0 %v3018
        %v3020 = vpop.xlane.xlu0 %3019
        %v3021 = vsel %vm1743, %v3008, 0.0
        %3022 = vadd.xlane.f32.xlu0 %v3021
        %v3023 = vpop.xlane.xlu0 %3022
        %v3024 = vsel %vm1743, %v3010, 0.0
        %3025 = vadd.xlane.f32.xlu0 %v3024
        %v3026 = vpop.xlane.xlu0 %3025
        %3027 = vrot.lane.b32.xlu0 %v1988, 112
        %v3028 = vpop.permute.xlu0 %3027
        %3029 = vrot.lane.b32.xlu0 %v1989, 112
        %v3030 = vpop.permute.xlu0 %3029
        %3031 = vrot.lane.b32.xlu0 %v1990, 112
        %v3032 = vpop.permute.xlu0 %3031
        %3033 = vrot.lane.b32.xlu0 %v1991, 112
        %v3034 = vpop.permute.xlu0 %3033
        %v3039 = vsel %vm1743, %v3028, 0.0
        %3040 = vadd.xlane.f32.xlu0 %v3039
        %v3041 = vpop.xlane.xlu0 %3040
        %v3042 = vsel %vm1743, %v3030, 0.0
        %3043 = vadd.xlane.f32.xlu0 %v3042
        %v3044 = vpop.xlane.xlu0 %3043
        %v3045 = vsel %vm1743, %v3032, 0.0
        %3046 = vadd.xlane.f32.xlu0 %v3045
        %v3047 = vpop.xlane.xlu0 %3046
        %v3048 = vsel %vm1743, %v3034, 0.0
        %3049 = vadd.xlane.f32.xlu0 %v3048
        %v3050 = vpop.xlane.xlu0 %3049
        %3051 = vrot.lane.b32.xlu0 %v2036, 112
        %v3052 = vpop.permute.xlu0 %3051
        %3053 = vrot.lane.b32.xlu0 %v2037, 112
        %v3054 = vpop.permute.xlu0 %3053
        %3055 = vrot.lane.b32.xlu0 %v2038, 112
        %v3056 = vpop.permute.xlu0 %3055
        %3057 = vrot.lane.b32.xlu0 %v2039, 112
        %v3058 = vpop.permute.xlu0 %3057
        %v3063 = vsel %vm1743, %v3052, 0.0
        %3064 = vadd.xlane.f32.xlu0 %v3063
        %v3065 = vpop.xlane.xlu0 %3064
        %v3066 = vsel %vm1743, %v3054, 0.0
        %3067 = vadd.xlane.f32.xlu0 %v3066
        %v3068 = vpop.xlane.xlu0 %3067
        %v3069 = vsel %vm1743, %v3056, 0.0
        %3070 = vadd.xlane.f32.xlu0 %v3069
        %v3071 = vpop.xlane.xlu0 %3070
        %v3072 = vsel %vm1743, %v3058, 0.0
        %3073 = vadd.xlane.f32.xlu0 %v3072
        %v3074 = vpop.xlane.xlu0 %3073
        %3075 = vrot.lane.b32.xlu0 %v2084, 112
        %v3076 = vpop.permute.xlu0 %3075
        %3077 = vrot.lane.b32.xlu0 %v2085, 112
        %v3078 = vpop.permute.xlu0 %3077
        %3079 = vrot.lane.b32.xlu0 %v2086, 112
        %v3080 = vpop.permute.xlu0 %3079
        %3081 = vrot.lane.b32.xlu0 %v2087, 112
        %v3082 = vpop.permute.xlu0 %3081
        %v3087 = vsel %vm1743, %v3076, 0.0
        %3088 = vadd.xlane.f32.xlu0 %v3087
        %v3089 = vpop.xlane.xlu0 %3088
        %v3090 = vsel %vm1743, %v3078, 0.0
        %3091 = vadd.xlane.f32.xlu0 %v3090
        %v3092 = vpop.xlane.xlu0 %3091
        %v3093 = vsel %vm1743, %v3080, 0.0
        %3094 = vadd.xlane.f32.xlu0 %v3093
        %v3095 = vpop.xlane.xlu0 %3094
        %v3096 = vsel %vm1743, %v3082, 0.0
        %3097 = vadd.xlane.f32.xlu0 %v3096
        %v3098 = vpop.xlane.xlu0 %3097
        %3099 = vrot.lane.b32.xlu0 %v2132, 112
        %v3100 = vpop.permute.xlu0 %3099
        %3101 = vrot.lane.b32.xlu0 %v2133, 112
        %v3102 = vpop.permute.xlu0 %3101
        %3103 = vrot.lane.b32.xlu0 %v2134, 112
        %v3104 = vpop.permute.xlu0 %3103
        %3105 = vrot.lane.b32.xlu0 %v2135, 112
        %v3106 = vpop.permute.xlu0 %3105
        %v3111 = vsel %vm1743, %v3100, 0.0
        %3112 = vadd.xlane.f32.xlu0 %v3111
        %v3113 = vpop.xlane.xlu0 %3112
        %v3114 = vsel %vm1743, %v3102, 0.0
        %3115 = vadd.xlane.f32.xlu0 %v3114
        %v3116 = vpop.xlane.xlu0 %3115
        %v3117 = vsel %vm1743, %v3104, 0.0
        %3118 = vadd.xlane.f32.xlu0 %v3117
        %v3119 = vpop.xlane.xlu0 %3118
        %v3120 = vsel %vm1743, %v3106, 0.0
        %3121 = vadd.xlane.f32.xlu0 %v3120
        %v3122 = vpop.xlane.xlu0 %3121
        %v3123 = vsel %vm2148, %v2945, %v2969
        %v3124 = vsel %vm2148, %v2948, %v2972
        %v3125 = vsel %vm2148, %v2951, %v2975
        %v3126 = vsel %vm2148, %v2954, %v2978
        %v3127 = vsel %vm2153, %v3123, %v2993
        %v3128 = vsel %vm2153, %v3124, %v2996
        %v3129 = vsel %vm2153, %v3125, %v2999
        %v3130 = vsel %vm2153, %v3126, %v3002
        %v3131 = vsel %vm2158, %v3127, %v3017
        %v3132 = vsel %vm2158, %v3128, %v3020
        %v3133 = vsel %vm2158, %v3129, %v3023
        %v3134 = vsel %vm2158, %v3130, %v3026
        %v3135 = vsel %vm2163, %v3131, %v3041
        %v3136 = vsel %vm2163, %v3132, %v3044
        %v3137 = vsel %vm2163, %v3133, %v3047
        %v3138 = vsel %vm2163, %v3134, %v3050
        %v3139 = vsel %vm2168, %v3135, %v3065
        %v3140 = vsel %vm2168, %v3136, %v3068
        %v3141 = vsel %vm2168, %v3137, %v3071
        %v3142 = vsel %vm2168, %v3138, %v3074
        %v3143 = vsel %vm2173, %v3139, %v3089
        %v3144 = vsel %vm2173, %v3140, %v3092
        %v3145 = vsel %vm2173, %v3141, %v3095
        %v3146 = vsel %vm2173, %v3142, %v3098
        %v3147 = vsel %vm2178, %v3143, %v3113
        %v3148 = vsel %vm2178, %v3144, %v3116
        %v3149 = vsel %vm2178, %v3145, %v3119
        %v3150 = vsel %vm2178, %v3146, %v3122
        %v3151 = vadd.f32 %v3147, %v1739
        %v3152 = vadd.f32 %v3148, %v1740
        %v3153 = vadd.f32 %v3149, %v1741
        %v3154 = vadd.f32 %v3150, %v1742
        %v3155 = vsel %vm1743, %v3151, -inf
        %3156 = vmax.xlane.f32.xlu0 %v3155
        %v3157 = vpop.xlane.xlu0 %3156
        %v3158 = vsel %vm1743, %v3152, -inf
        %3159 = vmax.xlane.f32.xlu0 %v3158
        %v3160 = vpop.xlane.xlu0 %3159
        %v3161 = vsel %vm1743, %v3153, -inf
        %3162 = vmax.xlane.f32.xlu0 %v3161
        %v3163 = vpop.xlane.xlu0 %3162
        %v3164 = vsel %vm1743, %v3154, -inf
        %3165 = vmax.xlane.f32.xlu0 %v3164
        %v3166 = vpop.xlane.xlu0 %3165
        %v3167 = vsub.f32 %v3151, %v3157
        %v3168 = vsub.f32 %v3152, %v3160
        %v3169 = vsub.f32 %v3153, %v3163
        %v3170 = vsub.f32 %v3154, %v3166
        %v3171 = vmul.f32 %v3167, 1.442695
        %v3172 = vpow.pop %v3171
        %v3173 = vmul.f32 %v3168, 1.442695
        %v3174 = vpow.pop %v3173
        %v3175 = vmul.f32 %v3169, 1.442695
        %v3176 = vpow.pop %v3175
        %v3177 = vmul.f32 %v3170, 1.442695
        %v3178 = vpow.pop %v3177
        %v3179 = vsel %vm1743, %v3172, 0.0
        %3180 = vadd.xlane.f32.xlu0 %v3179
        %v3181 = vpop.xlane.xlu0 %3180
        %v3182 = vsel %vm1743, %v3174, 0.0
        %3183 = vadd.xlane.f32.xlu0 %v3182
        %v3184 = vpop.xlane.xlu0 %3183
        %v3185 = vsel %vm1743, %v3176, 0.0
        %3186 = vadd.xlane.f32.xlu0 %v3185
        %v3187 = vpop.xlane.xlu0 %3186
        %v3188 = vsel %vm1743, %v3178, 0.0
        %3189 = vadd.xlane.f32.xlu0 %v3188
        %v3190 = vpop.xlane.xlu0 %3189
        %v3191 = vrcp.pop %v3181
        %v3192 = vrcp.pop %v3184
        %v3193 = vrcp.pop %v3187
        %v3194 = vrcp.pop %v3190
        %v3195 = vmul.f32 %v3172, %v3191
        %v3196 = vmul.f32 %v3174, %v3192
        %v3197 = vmul.f32 %v3176, %v3193
        %v3198 = vmul.f32 %v3178, %v3194
        %v3199 = vsel %vm2235, %v3195, 0.0
        %v3200 = vsel %vm2236, %v3196, 0.0
        %v3201 = vsel %vm2237, %v3197, 0.0
        %v3202 = vsel %vm2238, %v3198, 0.0
        %3204 = vset.pattern.permute.xlu0 0
        %3205 = vperm.xlu0 %3204, %v3199
        %v3206 = vpop.permute.xlu0 %3205
        %3209 = vset.pattern.permute.xlu0 0
        %3210 = vperm.xlu0 %3209, %v3200
        %v3211 = vpop.permute.xlu0 %3210
        %3214 = vset.pattern.permute.xlu0 0
        %3215 = vperm.xlu0 %3214, %v3201
        %v3216 = vpop.permute.xlu0 %3215
        %3219 = vset.pattern.permute.xlu0 0
        %3220 = vperm.xlu0 %3219, %v3202
        %v3221 = vpop.permute.xlu0 %3220
        %v3223 = vmul.f32 %v3206, %v1767
        %v3224 = vmul.f32 %v3211, %v1771
        %v3225 = vmul.f32 %v3216, %v1775
        %v3226 = vmul.f32 %v3221, %v1779
        %3227 = vset.pattern.permute.xlu0 1
        %3228 = vperm.xlu0 %3227, %v3199
        %v3229 = vpop.permute.xlu0 %3228
        %3231 = vset.pattern.permute.xlu0 1
        %3232 = vperm.xlu0 %3231, %v3200
        %v3233 = vpop.permute.xlu0 %3232
        %3235 = vset.pattern.permute.xlu0 1
        %3236 = vperm.xlu0 %3235, %v3201
        %v3237 = vpop.permute.xlu0 %3236
        %3239 = vset.pattern.permute.xlu0 1
        %3240 = vperm.xlu0 %3239, %v3202
        %v3241 = vpop.permute.xlu0 %3240
        %v3243 = vmul.f32 %v3229, %v1815
        %v3244 = vmul.f32 %v3233, %v1819
        %v3245 = vmul.f32 %v3237, %v1823
        %v3246 = vmul.f32 %v3241, %v1827
        %v3247 = vadd.f32 %v3223, %v3243
        %v3248 = vadd.f32 %v3224, %v3244
        %v3249 = vadd.f32 %v3225, %v3245
        %v3250 = vadd.f32 %v3226, %v3246
        %3251 = vset.pattern.permute.xlu0 2
        %3252 = vperm.xlu0 %3251, %v3199
        %v3253 = vpop.permute.xlu0 %3252
        %3255 = vset.pattern.permute.xlu0 2
        %3256 = vperm.xlu0 %3255, %v3200
        %v3257 = vpop.permute.xlu0 %3256
        %3259 = vset.pattern.permute.xlu0 2
        %3260 = vperm.xlu0 %3259, %v3201
        %v3261 = vpop.permute.xlu0 %3260
        %3263 = vset.pattern.permute.xlu0 2
        %3264 = vperm.xlu0 %3263, %v3202
        %v3265 = vpop.permute.xlu0 %3264
        %v3267 = vmul.f32 %v3253, %v1863
        %v3268 = vmul.f32 %v3257, %v1867
        %v3269 = vmul.f32 %v3261, %v1871
        %v3270 = vmul.f32 %v3265, %v1875
        %v3271 = vadd.f32 %v3247, %v3267
        %v3272 = vadd.f32 %v3248, %v3268
        %v3273 = vadd.f32 %v3249, %v3269
        %v3274 = vadd.f32 %v3250, %v3270
        %3275 = vset.pattern.permute.xlu0 3
        %3276 = vperm.xlu0 %3275, %v3199
        %v3277 = vpop.permute.xlu0 %3276
        %3279 = vset.pattern.permute.xlu0 3
        %3280 = vperm.xlu0 %3279, %v3200
        %v3281 = vpop.permute.xlu0 %3280
        %3283 = vset.pattern.permute.xlu0 3
        %3284 = vperm.xlu0 %3283, %v3201
        %v3285 = vpop.permute.xlu0 %3284
        %3287 = vset.pattern.permute.xlu0 3
        %3288 = vperm.xlu0 %3287, %v3202
        %v3289 = vpop.permute.xlu0 %3288
        %v3291 = vmul.f32 %v3277, %v1911
        %v3292 = vmul.f32 %v3281, %v1915
        %v3293 = vmul.f32 %v3285, %v1919
        %v3294 = vmul.f32 %v3289, %v1923
        %v3295 = vadd.f32 %v3271, %v3291
        %v3296 = vadd.f32 %v3272, %v3292
        %v3297 = vadd.f32 %v3273, %v3293
        %v3298 = vadd.f32 %v3274, %v3294
        %3299 = vset.pattern.permute.xlu0 4
        %3300 = vperm.xlu0 %3299, %v3199
        %v3301 = vpop.permute.xlu0 %3300
        %3303 = vset.pattern.permute.xlu0 4
        %3304 = vperm.xlu0 %3303, %v3200
        %v3305 = vpop.permute.xlu0 %3304
        %3307 = vset.pattern.permute.xlu0 4
        %3308 = vperm.xlu0 %3307, %v3201
        %v3309 = vpop.permute.xlu0 %3308
        %3311 = vset.pattern.permute.xlu0 4
        %3312 = vperm.xlu0 %3311, %v3202
        %v3313 = vpop.permute.xlu0 %3312
        %v3315 = vmul.f32 %v3301, %v1959
        %v3316 = vmul.f32 %v3305, %v1963
        %v3317 = vmul.f32 %v3309, %v1967
        %v3318 = vmul.f32 %v3313, %v1971
        %v3319 = vadd.f32 %v3295, %v3315
        %v3320 = vadd.f32 %v3296, %v3316
        %v3321 = vadd.f32 %v3297, %v3317
        %v3322 = vadd.f32 %v3298, %v3318
        %3323 = vset.pattern.permute.xlu0 5
        %3324 = vperm.xlu0 %3323, %v3199
        %v3325 = vpop.permute.xlu0 %3324
        %3327 = vset.pattern.permute.xlu0 5
        %3328 = vperm.xlu0 %3327, %v3200
        %v3329 = vpop.permute.xlu0 %3328
        %3331 = vset.pattern.permute.xlu0 5
        %3332 = vperm.xlu0 %3331, %v3201
        %v3333 = vpop.permute.xlu0 %3332
        %3335 = vset.pattern.permute.xlu0 5
        %3336 = vperm.xlu0 %3335, %v3202
        %v3337 = vpop.permute.xlu0 %3336
        %v3339 = vmul.f32 %v3325, %v2007
        %v3340 = vmul.f32 %v3329, %v2011
        %v3341 = vmul.f32 %v3333, %v2015
        %v3342 = vmul.f32 %v3337, %v2019
        %v3343 = vadd.f32 %v3319, %v3339
        %v3344 = vadd.f32 %v3320, %v3340
        %v3345 = vadd.f32 %v3321, %v3341
        %v3346 = vadd.f32 %v3322, %v3342
        %3347 = vset.pattern.permute.xlu0 6
        %3348 = vperm.xlu0 %3347, %v3199
        %v3349 = vpop.permute.xlu0 %3348
        %3351 = vset.pattern.permute.xlu0 6
        %3352 = vperm.xlu0 %3351, %v3200
        %v3353 = vpop.permute.xlu0 %3352
        %3355 = vset.pattern.permute.xlu0 6
        %3356 = vperm.xlu0 %3355, %v3201
        %v3357 = vpop.permute.xlu0 %3356
        %3359 = vset.pattern.permute.xlu0 6
        %3360 = vperm.xlu0 %3359, %v3202
        %v3361 = vpop.permute.xlu0 %3360
        %v3363 = vmul.f32 %v3349, %v2055
        %v3364 = vmul.f32 %v3353, %v2059
        %v3365 = vmul.f32 %v3357, %v2063
        %v3366 = vmul.f32 %v3361, %v2067
        %v3367 = vadd.f32 %v3343, %v3363
        %v3368 = vadd.f32 %v3344, %v3364
        %v3369 = vadd.f32 %v3345, %v3365
        %v3370 = vadd.f32 %v3346, %v3366
        %3371 = vset.pattern.permute.xlu0 7
        %3372 = vperm.xlu0 %3371, %v3199
        %v3373 = vpop.permute.xlu0 %3372
        %3375 = vset.pattern.permute.xlu0 7
        %3376 = vperm.xlu0 %3375, %v3200
        %v3377 = vpop.permute.xlu0 %3376
        %3379 = vset.pattern.permute.xlu0 7
        %3380 = vperm.xlu0 %3379, %v3201
        %v3381 = vpop.permute.xlu0 %3380
        %3383 = vset.pattern.permute.xlu0 7
        %3384 = vperm.xlu0 %3383, %v3202
        %v3385 = vpop.permute.xlu0 %3384
        %v3387 = vmul.f32 %v3373, %v2103
        %v3388 = vmul.f32 %v3377, %v2107
        %v3389 = vmul.f32 %v3381, %v2111
        %v3390 = vmul.f32 %v3385, %v2115
        %v3391 = vadd.f32 %v3367, %v3387
        %v3392 = vadd.f32 %v3368, %v3388
        %v3393 = vadd.f32 %v3369, %v3389
        %v3394 = vadd.f32 %v3370, %v3390
        %3395 = vrot.lane.b32.xlu0 %v1796, 104
        %v3396 = vpop.permute.xlu0 %3395
        %3397 = vrot.lane.b32.xlu0 %v1797, 104
        %v3398 = vpop.permute.xlu0 %3397
        %3399 = vrot.lane.b32.xlu0 %v1798, 104
        %v3400 = vpop.permute.xlu0 %3399
        %3401 = vrot.lane.b32.xlu0 %v1799, 104
        %v3402 = vpop.permute.xlu0 %3401
        %v3407 = vsel %vm1743, %v3396, 0.0
        %3408 = vadd.xlane.f32.xlu0 %v3407
        %v3409 = vpop.xlane.xlu0 %3408
        %v3410 = vsel %vm1743, %v3398, 0.0
        %3411 = vadd.xlane.f32.xlu0 %v3410
        %v3412 = vpop.xlane.xlu0 %3411
        %v3413 = vsel %vm1743, %v3400, 0.0
        %3414 = vadd.xlane.f32.xlu0 %v3413
        %v3415 = vpop.xlane.xlu0 %3414
        %v3416 = vsel %vm1743, %v3402, 0.0
        %3417 = vadd.xlane.f32.xlu0 %v3416
        %v3418 = vpop.xlane.xlu0 %3417
        %3419 = vrot.lane.b32.xlu0 %v1844, 104
        %v3420 = vpop.permute.xlu0 %3419
        %3421 = vrot.lane.b32.xlu0 %v1845, 104
        %v3422 = vpop.permute.xlu0 %3421
        %3423 = vrot.lane.b32.xlu0 %v1846, 104
        %v3424 = vpop.permute.xlu0 %3423
        %3425 = vrot.lane.b32.xlu0 %v1847, 104
        %v3426 = vpop.permute.xlu0 %3425
        %v3431 = vsel %vm1743, %v3420, 0.0
        %3432 = vadd.xlane.f32.xlu0 %v3431
        %v3433 = vpop.xlane.xlu0 %3432
        %v3434 = vsel %vm1743, %v3422, 0.0
        %3435 = vadd.xlane.f32.xlu0 %v3434
        %v3436 = vpop.xlane.xlu0 %3435
        %v3437 = vsel %vm1743, %v3424, 0.0
        %3438 = vadd.xlane.f32.xlu0 %v3437
        %v3439 = vpop.xlane.xlu0 %3438
        %v3440 = vsel %vm1743, %v3426, 0.0
        %3441 = vadd.xlane.f32.xlu0 %v3440
        %v3442 = vpop.xlane.xlu0 %3441
        %3443 = vrot.lane.b32.xlu0 %v1892, 104
        %v3444 = vpop.permute.xlu0 %3443
        %3445 = vrot.lane.b32.xlu0 %v1893, 104
        %v3446 = vpop.permute.xlu0 %3445
        %3447 = vrot.lane.b32.xlu0 %v1894, 104
        %v3448 = vpop.permute.xlu0 %3447
        %3449 = vrot.lane.b32.xlu0 %v1895, 104
        %v3450 = vpop.permute.xlu0 %3449
        %v3455 = vsel %vm1743, %v3444, 0.0
        %3456 = vadd.xlane.f32.xlu0 %v3455
        %v3457 = vpop.xlane.xlu0 %3456
        %v3458 = vsel %vm1743, %v3446, 0.0
        %3459 = vadd.xlane.f32.xlu0 %v3458
        %v3460 = vpop.xlane.xlu0 %3459
        %v3461 = vsel %vm1743, %v3448, 0.0
        %3462 = vadd.xlane.f32.xlu0 %v3461
        %v3463 = vpop.xlane.xlu0 %3462
        %v3464 = vsel %vm1743, %v3450, 0.0
        %3465 = vadd.xlane.f32.xlu0 %v3464
        %v3466 = vpop.xlane.xlu0 %3465
        %3467 = vrot.lane.b32.xlu0 %v1940, 104
        %v3468 = vpop.permute.xlu0 %3467
        %3469 = vrot.lane.b32.xlu0 %v1941, 104
        %v3470 = vpop.permute.xlu0 %3469
        %3471 = vrot.lane.b32.xlu0 %v1942, 104
        %v3472 = vpop.permute.xlu0 %3471
        %3473 = vrot.lane.b32.xlu0 %v1943, 104
        %v3474 = vpop.permute.xlu0 %3473
        %v3479 = vsel %vm1743, %v3468, 0.0
        %3480 = vadd.xlane.f32.xlu0 %v3479
        %v3481 = vpop.xlane.xlu0 %3480
        %v3482 = vsel %vm1743, %v3470, 0.0
        %3483 = vadd.xlane.f32.xlu0 %v3482
        %v3484 = vpop.xlane.xlu0 %3483
        %v3485 = vsel %vm1743, %v3472, 0.0
        %3486 = vadd.xlane.f32.xlu0 %v3485
        %v3487 = vpop.xlane.xlu0 %3486
        %v3488 = vsel %vm1743, %v3474, 0.0
        %3489 = vadd.xlane.f32.xlu0 %v3488
        %v3490 = vpop.xlane.xlu0 %3489
        %3491 = vrot.lane.b32.xlu0 %v1988, 104
        %v3492 = vpop.permute.xlu0 %3491
        %3493 = vrot.lane.b32.xlu0 %v1989, 104
        %v3494 = vpop.permute.xlu0 %3493
        %3495 = vrot.lane.b32.xlu0 %v1990, 104
        %v3496 = vpop.permute.xlu0 %3495
        %3497 = vrot.lane.b32.xlu0 %v1991, 104
        %v3498 = vpop.permute.xlu0 %3497
        %v3503 = vsel %vm1743, %v3492, 0.0
        %3504 = vadd.xlane.f32.xlu0 %v3503
        %v3505 = vpop.xlane.xlu0 %3504
        %v3506 = vsel %vm1743, %v3494, 0.0
        %3507 = vadd.xlane.f32.xlu0 %v3506
        %v3508 = vpop.xlane.xlu0 %3507
        %v3509 = vsel %vm1743, %v3496, 0.0
        %3510 = vadd.xlane.f32.xlu0 %v3509
        %v3511 = vpop.xlane.xlu0 %3510
        %v3512 = vsel %vm1743, %v3498, 0.0
        %3513 = vadd.xlane.f32.xlu0 %v3512
        %v3514 = vpop.xlane.xlu0 %3513
        %3515 = vrot.lane.b32.xlu0 %v2036, 104
        %v3516 = vpop.permute.xlu0 %3515
        %3517 = vrot.lane.b32.xlu0 %v2037, 104
        %v3518 = vpop.permute.xlu0 %3517
        %3519 = vrot.lane.b32.xlu0 %v2038, 104
        %v3520 = vpop.permute.xlu0 %3519
        %3521 = vrot.lane.b32.xlu0 %v2039, 104
        %v3522 = vpop.permute.xlu0 %3521
        %v3527 = vsel %vm1743, %v3516, 0.0
        %3528 = vadd.xlane.f32.xlu0 %v3527
        %v3529 = vpop.xlane.xlu0 %3528
        %v3530 = vsel %vm1743, %v3518, 0.0
        %3531 = vadd.xlane.f32.xlu0 %v3530
        %v3532 = vpop.xlane.xlu0 %3531
        %v3533 = vsel %vm1743, %v3520, 0.0
        %3534 = vadd.xlane.f32.xlu0 %v3533
        %v3535 = vpop.xlane.xlu0 %3534
        %v3536 = vsel %vm1743, %v3522, 0.0
        %3537 = vadd.xlane.f32.xlu0 %v3536
        %v3538 = vpop.xlane.xlu0 %3537
        %3539 = vrot.lane.b32.xlu0 %v2084, 104
        %v3540 = vpop.permute.xlu0 %3539
        %3541 = vrot.lane.b32.xlu0 %v2085, 104
        %v3542 = vpop.permute.xlu0 %3541
        %3543 = vrot.lane.b32.xlu0 %v2086, 104
        %v3544 = vpop.permute.xlu0 %3543
        %3545 = vrot.lane.b32.xlu0 %v2087, 104
        %v3546 = vpop.permute.xlu0 %3545
        %v3551 = vsel %vm1743, %v3540, 0.0
        %3552 = vadd.xlane.f32.xlu0 %v3551
        %v3553 = vpop.xlane.xlu0 %3552
        %v3554 = vsel %vm1743, %v3542, 0.0
        %3555 = vadd.xlane.f32.xlu0 %v3554
        %v3556 = vpop.xlane.xlu0 %3555
        %v3557 = vsel %vm1743, %v3544, 0.0
        %3558 = vadd.xlane.f32.xlu0 %v3557
        %v3559 = vpop.xlane.xlu0 %3558
        %v3560 = vsel %vm1743, %v3546, 0.0
        %3561 = vadd.xlane.f32.xlu0 %v3560
        %v3562 = vpop.xlane.xlu0 %3561
        %3563 = vrot.lane.b32.xlu0 %v2132, 104
        %v3564 = vpop.permute.xlu0 %3563
        %3565 = vrot.lane.b32.xlu0 %v2133, 104
        %v3566 = vpop.permute.xlu0 %3565
        %3567 = vrot.lane.b32.xlu0 %v2134, 104
        %v3568 = vpop.permute.xlu0 %3567
        %3569 = vrot.lane.b32.xlu0 %v2135, 104
        %v3570 = vpop.permute.xlu0 %3569
        %v3575 = vsel %vm1743, %v3564, 0.0
        %3576 = vadd.xlane.f32.xlu0 %v3575
        %v3577 = vpop.xlane.xlu0 %3576
        %v3578 = vsel %vm1743, %v3566, 0.0
        %3579 = vadd.xlane.f32.xlu0 %v3578
        %v3580 = vpop.xlane.xlu0 %3579
        %v3581 = vsel %vm1743, %v3568, 0.0
        %3582 = vadd.xlane.f32.xlu0 %v3581
        %v3583 = vpop.xlane.xlu0 %3582
        %v3584 = vsel %vm1743, %v3570, 0.0
        %3585 = vadd.xlane.f32.xlu0 %v3584
        %v3586 = vpop.xlane.xlu0 %3585
        %v3587 = vsel %vm2148, %v3409, %v3433
        %v3588 = vsel %vm2148, %v3412, %v3436
        %v3589 = vsel %vm2148, %v3415, %v3439
        %v3590 = vsel %vm2148, %v3418, %v3442
        %v3591 = vsel %vm2153, %v3587, %v3457
        %v3592 = vsel %vm2153, %v3588, %v3460
        %v3593 = vsel %vm2153, %v3589, %v3463
        %v3594 = vsel %vm2153, %v3590, %v3466
        %v3595 = vsel %vm2158, %v3591, %v3481
        %v3596 = vsel %vm2158, %v3592, %v3484
        %v3597 = vsel %vm2158, %v3593, %v3487
        %v3598 = vsel %vm2158, %v3594, %v3490
        %v3599 = vsel %vm2163, %v3595, %v3505
        %v3600 = vsel %vm2163, %v3596, %v3508
        %v3601 = vsel %vm2163, %v3597, %v3511
        %v3602 = vsel %vm2163, %v3598, %v3514
        %v3603 = vsel %vm2168, %v3599, %v3529
        %v3604 = vsel %vm2168, %v3600, %v3532
        %v3605 = vsel %vm2168, %v3601, %v3535
        %v3606 = vsel %vm2168, %v3602, %v3538
        %v3607 = vsel %vm2173, %v3603, %v3553
        %v3608 = vsel %vm2173, %v3604, %v3556
        %v3609 = vsel %vm2173, %v3605, %v3559
        %v3610 = vsel %vm2173, %v3606, %v3562
        %v3611 = vsel %vm2178, %v3607, %v3577
        %v3612 = vsel %vm2178, %v3608, %v3580
        %v3613 = vsel %vm2178, %v3609, %v3583
        %v3614 = vsel %vm2178, %v3610, %v3586
        %v3615 = vadd.f32 %v3611, %v1739
        %v3616 = vadd.f32 %v3612, %v1740
        %v3617 = vadd.f32 %v3613, %v1741
        %v3618 = vadd.f32 %v3614, %v1742
        %v3619 = vsel %vm1743, %v3615, -inf
        %3620 = vmax.xlane.f32.xlu0 %v3619
        %v3621 = vpop.xlane.xlu0 %3620
        %v3622 = vsel %vm1743, %v3616, -inf
        %3623 = vmax.xlane.f32.xlu0 %v3622
        %v3624 = vpop.xlane.xlu0 %3623
        %v3625 = vsel %vm1743, %v3617, -inf
        %3626 = vmax.xlane.f32.xlu0 %v3625
        %v3627 = vpop.xlane.xlu0 %3626
        %v3628 = vsel %vm1743, %v3618, -inf
        %3629 = vmax.xlane.f32.xlu0 %v3628
        %v3630 = vpop.xlane.xlu0 %3629
        %v3631 = vsub.f32 %v3615, %v3621
        %v3632 = vsub.f32 %v3616, %v3624
        %v3633 = vsub.f32 %v3617, %v3627
        %v3634 = vsub.f32 %v3618, %v3630
        %v3635 = vmul.f32 %v3631, 1.442695
        %v3636 = vpow.pop %v3635
        %v3637 = vmul.f32 %v3632, 1.442695
        %v3638 = vpow.pop %v3637
        %v3639 = vmul.f32 %v3633, 1.442695
        %v3640 = vpow.pop %v3639
        %v3641 = vmul.f32 %v3634, 1.442695
        %v3642 = vpow.pop %v3641
        %v3643 = vsel %vm1743, %v3636, 0.0
        %3644 = vadd.xlane.f32.xlu0 %v3643
        %v3645 = vpop.xlane.xlu0 %3644
        %v3646 = vsel %vm1743, %v3638, 0.0
        %3647 = vadd.xlane.f32.xlu0 %v3646
        %v3648 = vpop.xlane.xlu0 %3647
        %v3649 = vsel %vm1743, %v3640, 0.0
        %3650 = vadd.xlane.f32.xlu0 %v3649
        %v3651 = vpop.xlane.xlu0 %3650
        %v3652 = vsel %vm1743, %v3642, 0.0
        %3653 = vadd.xlane.f32.xlu0 %v3652
        %v3654 = vpop.xlane.xlu0 %3653
        %v3655 = vrcp.pop %v3645
        %v3656 = vrcp.pop %v3648
        %v3657 = vrcp.pop %v3651
        %v3658 = vrcp.pop %v3654
        %v3659 = vmul.f32 %v3636, %v3655
        %v3660 = vmul.f32 %v3638, %v3656
        %v3661 = vmul.f32 %v3640, %v3657
        %v3662 = vmul.f32 %v3642, %v3658
        %v3663 = vsel %vm2235, %v3659, 0.0
        %v3664 = vsel %vm2236, %v3660, 0.0
        %v3665 = vsel %vm2237, %v3661, 0.0
        %v3666 = vsel %vm2238, %v3662, 0.0
        %3668 = vset.pattern.permute.xlu0 0
        %3669 = vperm.xlu0 %3668, %v3663
        %v3670 = vpop.permute.xlu0 %3669
        %3673 = vset.pattern.permute.xlu0 0
        %3674 = vperm.xlu0 %3673, %v3664
        %v3675 = vpop.permute.xlu0 %3674
        %3678 = vset.pattern.permute.xlu0 0
        %3679 = vperm.xlu0 %3678, %v3665
        %v3680 = vpop.permute.xlu0 %3679
        %3683 = vset.pattern.permute.xlu0 0
        %3684 = vperm.xlu0 %3683, %v3666
        %v3685 = vpop.permute.xlu0 %3684
        %v3687 = vmul.f32 %v3670, %v1767
        %v3688 = vmul.f32 %v3675, %v1771
        %v3689 = vmul.f32 %v3680, %v1775
        %v3690 = vmul.f32 %v3685, %v1779
        %3691 = vset.pattern.permute.xlu0 1
        %3692 = vperm.xlu0 %3691, %v3663
        %v3693 = vpop.permute.xlu0 %3692
        %3695 = vset.pattern.permute.xlu0 1
        %3696 = vperm.xlu0 %3695, %v3664
        %v3697 = vpop.permute.xlu0 %3696
        %3699 = vset.pattern.permute.xlu0 1
        %3700 = vperm.xlu0 %3699, %v3665
        %v3701 = vpop.permute.xlu0 %3700
        %3703 = vset.pattern.permute.xlu0 1
        %3704 = vperm.xlu0 %3703, %v3666
        %v3705 = vpop.permute.xlu0 %3704
        %v3707 = vmul.f32 %v3693, %v1815
        %v3708 = vmul.f32 %v3697, %v1819
        %v3709 = vmul.f32 %v3701, %v1823
        %v3710 = vmul.f32 %v3705, %v1827
        %v3711 = vadd.f32 %v3687, %v3707
        %v3712 = vadd.f32 %v3688, %v3708
        %v3713 = vadd.f32 %v3689, %v3709
        %v3714 = vadd.f32 %v3690, %v3710
        %3715 = vset.pattern.permute.xlu0 2
        %3716 = vperm.xlu0 %3715, %v3663
        %v3717 = vpop.permute.xlu0 %3716
        %3719 = vset.pattern.permute.xlu0 2
        %3720 = vperm.xlu0 %3719, %v3664
        %v3721 = vpop.permute.xlu0 %3720
        %3723 = vset.pattern.permute.xlu0 2
        %3724 = vperm.xlu0 %3723, %v3665
        %v3725 = vpop.permute.xlu0 %3724
        %3727 = vset.pattern.permute.xlu0 2
        %3728 = vperm.xlu0 %3727, %v3666
        %v3729 = vpop.permute.xlu0 %3728
        %v3731 = vmul.f32 %v3717, %v1863
        %v3732 = vmul.f32 %v3721, %v1867
        %v3733 = vmul.f32 %v3725, %v1871
        %v3734 = vmul.f32 %v3729, %v1875
        %v3735 = vadd.f32 %v3711, %v3731
        %v3736 = vadd.f32 %v3712, %v3732
        %v3737 = vadd.f32 %v3713, %v3733
        %v3738 = vadd.f32 %v3714, %v3734
        %3739 = vset.pattern.permute.xlu0 3
        %3740 = vperm.xlu0 %3739, %v3663
        %v3741 = vpop.permute.xlu0 %3740
        %3743 = vset.pattern.permute.xlu0 3
        %3744 = vperm.xlu0 %3743, %v3664
        %v3745 = vpop.permute.xlu0 %3744
        %3747 = vset.pattern.permute.xlu0 3
        %3748 = vperm.xlu0 %3747, %v3665
        %v3749 = vpop.permute.xlu0 %3748
        %3751 = vset.pattern.permute.xlu0 3
        %3752 = vperm.xlu0 %3751, %v3666
        %v3753 = vpop.permute.xlu0 %3752
        %v3755 = vmul.f32 %v3741, %v1911
        %v3756 = vmul.f32 %v3745, %v1915
        %v3757 = vmul.f32 %v3749, %v1919
        %v3758 = vmul.f32 %v3753, %v1923
        %v3759 = vadd.f32 %v3735, %v3755
        %v3760 = vadd.f32 %v3736, %v3756
        %v3761 = vadd.f32 %v3737, %v3757
        %v3762 = vadd.f32 %v3738, %v3758
        %3763 = vset.pattern.permute.xlu0 4
        %3764 = vperm.xlu0 %3763, %v3663
        %v3765 = vpop.permute.xlu0 %3764
        %3767 = vset.pattern.permute.xlu0 4
        %3768 = vperm.xlu0 %3767, %v3664
        %v3769 = vpop.permute.xlu0 %3768
        %3771 = vset.pattern.permute.xlu0 4
        %3772 = vperm.xlu0 %3771, %v3665
        %v3773 = vpop.permute.xlu0 %3772
        %3775 = vset.pattern.permute.xlu0 4
        %3776 = vperm.xlu0 %3775, %v3666
        %v3777 = vpop.permute.xlu0 %3776
        %v3779 = vmul.f32 %v3765, %v1959
        %v3780 = vmul.f32 %v3769, %v1963
        %v3781 = vmul.f32 %v3773, %v1967
        %v3782 = vmul.f32 %v3777, %v1971
        %v3783 = vadd.f32 %v3759, %v3779
        %v3784 = vadd.f32 %v3760, %v3780
        %v3785 = vadd.f32 %v3761, %v3781
        %v3786 = vadd.f32 %v3762, %v3782
        %3787 = vset.pattern.permute.xlu0 5
        %3788 = vperm.xlu0 %3787, %v3663
        %v3789 = vpop.permute.xlu0 %3788
        %3791 = vset.pattern.permute.xlu0 5
        %3792 = vperm.xlu0 %3791, %v3664
        %v3793 = vpop.permute.xlu0 %3792
        %3795 = vset.pattern.permute.xlu0 5
        %3796 = vperm.xlu0 %3795, %v3665
        %v3797 = vpop.permute.xlu0 %3796
        %3799 = vset.pattern.permute.xlu0 5
        %3800 = vperm.xlu0 %3799, %v3666
        %v3801 = vpop.permute.xlu0 %3800
        %v3803 = vmul.f32 %v3789, %v2007
        %v3804 = vmul.f32 %v3793, %v2011
        %v3805 = vmul.f32 %v3797, %v2015
        %v3806 = vmul.f32 %v3801, %v2019
        %v3807 = vadd.f32 %v3783, %v3803
        %v3808 = vadd.f32 %v3784, %v3804
        %v3809 = vadd.f32 %v3785, %v3805
        %v3810 = vadd.f32 %v3786, %v3806
        %3811 = vset.pattern.permute.xlu0 6
        %3812 = vperm.xlu0 %3811, %v3663
        %v3813 = vpop.permute.xlu0 %3812
        %3815 = vset.pattern.permute.xlu0 6
        %3816 = vperm.xlu0 %3815, %v3664
        %v3817 = vpop.permute.xlu0 %3816
        %3819 = vset.pattern.permute.xlu0 6
        %3820 = vperm.xlu0 %3819, %v3665
        %v3821 = vpop.permute.xlu0 %3820
        %3823 = vset.pattern.permute.xlu0 6
        %3824 = vperm.xlu0 %3823, %v3666
        %v3825 = vpop.permute.xlu0 %3824
        %v3827 = vmul.f32 %v3813, %v2055
        %v3828 = vmul.f32 %v3817, %v2059
        %v3829 = vmul.f32 %v3821, %v2063
        %v3830 = vmul.f32 %v3825, %v2067
        %v3831 = vadd.f32 %v3807, %v3827
        %v3832 = vadd.f32 %v3808, %v3828
        %v3833 = vadd.f32 %v3809, %v3829
        %v3834 = vadd.f32 %v3810, %v3830
        %3835 = vset.pattern.permute.xlu0 7
        %3836 = vperm.xlu0 %3835, %v3663
        %v3837 = vpop.permute.xlu0 %3836
        %3839 = vset.pattern.permute.xlu0 7
        %3840 = vperm.xlu0 %3839, %v3664
        %v3841 = vpop.permute.xlu0 %3840
        %3843 = vset.pattern.permute.xlu0 7
        %3844 = vperm.xlu0 %3843, %v3665
        %v3845 = vpop.permute.xlu0 %3844
        %3847 = vset.pattern.permute.xlu0 7
        %3848 = vperm.xlu0 %3847, %v3666
        %v3849 = vpop.permute.xlu0 %3848
        %v3851 = vmul.f32 %v3837, %v2103
        %v3852 = vmul.f32 %v3841, %v2107
        %v3853 = vmul.f32 %v3845, %v2111
        %v3854 = vmul.f32 %v3849, %v2115
        %v3855 = vadd.f32 %v3831, %v3851
        %v3856 = vadd.f32 %v3832, %v3852
        %v3857 = vadd.f32 %v3833, %v3853
        %v3858 = vadd.f32 %v3834, %v3854
        %3863 = vrot.lane.b32.xlu0 %v2431, 64
        %v3864 = vpop.permute.xlu0 %3863
        %3865 = vrot.lane.b32.xlu0 %v2432, 64
        %v3866 = vpop.permute.xlu0 %3865
        %3867 = vrot.lane.b32.xlu0 %v2433, 64
        %v3868 = vpop.permute.xlu0 %3867
        %3869 = vrot.lane.b32.xlu0 %v2434, 64
        %v3870 = vpop.permute.xlu0 %3869
        %3879 = vrot.lane.b32.xlu0 %v2927, 64
        %v3880 = vpop.permute.xlu0 %3879
        %3881 = vrot.lane.b32.xlu0 %v2928, 64
        %v3882 = vpop.permute.xlu0 %3881
        %3883 = vrot.lane.b32.xlu0 %v2929, 64
        %v3884 = vpop.permute.xlu0 %3883
        %3885 = vrot.lane.b32.xlu0 %v2930, 64
        %v3886 = vpop.permute.xlu0 %3885
        %3895 = vrot.lane.b32.xlu0 %v3391, 64
        %v3896 = vpop.permute.xlu0 %3895
        %3897 = vrot.lane.b32.xlu0 %v3392, 64
        %v3898 = vpop.permute.xlu0 %3897
        %3899 = vrot.lane.b32.xlu0 %v3393, 64
        %v3900 = vpop.permute.xlu0 %3899
        %3901 = vrot.lane.b32.xlu0 %v3394, 64
        %v3902 = vpop.permute.xlu0 %3901
        %3911 = vrot.lane.b32.xlu0 %v3855, 64
        %v3912 = vpop.permute.xlu0 %3911
        %3913 = vrot.lane.b32.xlu0 %v3856, 64
        %v3914 = vpop.permute.xlu0 %3913
        %3915 = vrot.lane.b32.xlu0 %v3857, 64
        %v3916 = vpop.permute.xlu0 %3915
        %3917 = vrot.lane.b32.xlu0 %v3858, 64
        %v3918 = vpop.permute.xlu0 %3917
        %v3923 = vsel %vm1743, %v3864, %v3880
        %v3924 = vsel %vm1743, %v3866, %v3882
        %v3925 = vsel %vm1743, %v3868, %v3884
        %v3926 = vsel %vm1743, %v3870, %v3886
        %vm3927 = vcmask 130048
        %v3928 = vsel %vm3927, %v3923, %v3896
        %v3929 = vsel %vm3927, %v3924, %v3898
        %v3930 = vsel %vm3927, %v3925, %v3900
        %v3931 = vsel %vm3927, %v3926, %v3902
        %vm3932 = vcmask 195584
        %v3933 = vsel %vm3932, %v3928, %v3912
        %v3934 = vsel %vm3932, %v3929, %v3914
        %v3935 = vsel %vm3932, %v3930, %v3916
        %v3936 = vsel %vm3932, %v3931, %v3918
        %v3937 = vld [vmem:[%s5] sm:$0xff]
        %v3938 = vld [vmem:[%s5 + $0x8] sm:$0xff]
        %v3939 = vld [vmem:[%s5 + $0x10] sm:$0xff]
        %v3940 = vld [vmem:[%s5 + $0x18] sm:$0xff]
        %v3941 = vld [vmem:[%s6] sm:$0x1]
        %v3943 = vlaneseq
        %v3944 = vshrl.u32 %v3943, 7
        %v3945 = vsub.s32 0, %v3944
        %v3946 = vrot.slane %v3941, %v3945
        %v3949 = vsel %vm478, %v3933, 0
        %v3952 = vsel %vm478, %v3934, 0
        %v3955 = vsel %vm478, %v3935, 0
        %v3958 = vsel %vm478, %v3936, 0
        %3960 = vmatprep.subr.mxu0 0.0
        %v3961 = vand.u32 %v3937, 4294901760
        %3962 = vmatpush1.msra.mxu0 %v3961
        %3963 = vmatprep.subr.mxu0 0.0
        %v3964 = vand.u32 %v3938, 4294901760
        %3965 = vmatpush1.msra.mxu0 %v3964
        %3966 = vmatprep.subr.mxu0 0.0
        %v3967 = vand.u32 %v3939, 4294901760
        %3968 = vmatpush1.msra.mxu0 %v3967
        %3969 = vmatprep.subr.mxu0 0.0
        %v3970 = vand.u32 %v3940, 4294901760
        %3971 = vmatpush1.msra.mxu0 %v3970
        %3972 = vmatprep.subr.mxu0 0.0
        %3973 = vmatpush1.msra.mxu0 0.0
        %3974 = vmatprep.subr.mxu0 0.0
        %3975 = vmatpush1.msra.mxu0 0.0
        %3976 = vmatprep.subr.mxu0 0.0
        %3977 = vmatpush1.msra.mxu0 0.0
        %3978 = vmatprep.subr.mxu0 0.0
        %3979 = vmatpush1.msra.mxu0 0.0
        %3980 = vmatprep.subr.mxu0 0.0
        %3981 = vmatpush1.msra.mxu0 0.0
        %3982 = vmatprep.subr.mxu0 0.0
        %3983 = vmatpush1.msra.mxu0 0.0
        %3984 = vmatprep.subr.mxu0 0.0
        %3985 = vmatpush1.msra.mxu0 0.0
        %3986 = vmatprep.subr.mxu0 0.0
        %3987 = vmatpush1.msra.mxu0 0.0
        %3988 = vmatprep.subr.mxu0 0.0
        %3989 = vmatpush1.msra.mxu0 0.0
        %3990 = vmatprep.subr.mxu0 0.0
        %3991 = vmatpush1.msra.mxu0 0.0
        %3992 = vmatprep.subr.mxu0 0.0
        %3993 = vmatpush1.msra.mxu0 0.0
        %3994 = vmatprep.subr.mxu0 0.0
        %3995 = vmatpush1.msra.mxu0 0.0
        %3996 = vmatprep.subr.mxu0 0.0
        %3997 = vmatpush1.msra.mxu0 0.0
        %3998 = vmatprep.subr.mxu0 0.0
        %3999 = vmatpush1.msra.mxu0 0.0
        %4000 = vmatprep.subr.mxu0 0.0
        %4001 = vmatpush1.msra.mxu0 0.0
        %4002 = vmatprep.subr.mxu0 0.0
        %4003 = vmatpush1.msra.mxu0 0.0
        %4004 = vmatprep.subr.mxu0 0.0
        %4005 = vmatpush1.msra.mxu0 0.0
        %4006 = vmatprep.subr.mxu0 0.0
        %4007 = vmatpush1.msra.mxu0 0.0
        %4008 = vmatprep.subr.mxu0 0.0
        %4009 = vmatpush1.msra.mxu0 0.0
        %4010 = vmatprep.subr.mxu0 0.0
        %4011 = vmatpush1.msra.mxu0 0.0
        %4012 = vmatprep.subr.mxu0 0.0
        %4013 = vmatpush1.msra.mxu0 0.0
        %4014 = vmatprep.subr.mxu0 0.0
        %4015 = vmatpush1.msra.mxu0 0.0
        %4016 = vmatprep.subr.mxu0 0.0
        %4017 = vmatpush1.msra.mxu0 0.0
        %4018 = vmatprep.subr.mxu0 0.0
        %4019 = vmatpush1.msra.mxu0 0.0
        %4020 = vmatprep.subr.mxu0 0.0
        %4021 = vmatpush1.msra.mxu0 0.0
        %4022 = vmatprep.subr.mxu0 0.0
        %4023 = vmatpush1.msra.mxu0 0.0
        %4024 = vmatprep.subr.mxu0 0.0
        %4025 = vmatpush1.msra.mxu0 0.0
        %4026 = vmatprep.subr.mxu0 0.0
        %4027 = vmatpush1.msra.mxu0 0.0
        %4028 = vmatprep.mubr.f32.mxu0 0.0
        %v4029 = vand.u32 %v3949, 4294901760
        %v4030 = vsub.f32 %v3949, %v4029
        %v4031 = vand.u32 %v4030, 4294901760
        %v4032 = vsub.f32 %v4030, %v4031
        %v4033 = vand.u32 %v4032, 4294901760
        %4034 = vmatmul.mubr.f32.gmra.mrb[0].mxu0 %v4033
        %v4035 = vpop.f32.mrb[0].mxu0
        %v4036 = vadd.f32 %v3946, %v4035
        %v4037 = vpop.f32.mrb[0].mxu0
        %4038 = vmatprep.mubr.f32.mxu0 0.0
        %v4039 = vand.u32 %v3952, 4294901760
        %v4040 = vsub.f32 %v3952, %v4039
        %v4041 = vand.u32 %v4040, 4294901760
        %v4042 = vsub.f32 %v4040, %v4041
        %v4043 = vand.u32 %v4042, 4294901760
        %4044 = vmatmul.mubr.f32.gmra.mrb[0].mxu0 %v4043
        %v4045 = vpop.f32.mrb[0].mxu0
        %v4046 = vadd.f32 %v3946, %v4045
        %v4047 = vpop.f32.mrb[0].mxu0
        %4048 = vmatprep.mubr.f32.mxu0 0.0
        %v4049 = vand.u32 %v3955, 4294901760
        %v4050 = vsub.f32 %v3955, %v4049
        %v4051 = vand.u32 %v4050, 4294901760
        %v4052 = vsub.f32 %v4050, %v4051
        %v4053 = vand.u32 %v4052, 4294901760
        %4054 = vmatmul.mubr.f32.gmra.mrb[0].mxu0 %v4053
        %v4055 = vpop.f32.mrb[0].mxu0
        %v4056 = vadd.f32 %v3946, %v4055
        %v4057 = vpop.f32.mrb[0].mxu0
        %4058 = vmatprep.mubr.f32.mxu0 0.0
        %v4059 = vand.u32 %v3958, 4294901760
        %v4060 = vsub.f32 %v3958, %v4059
        %v4061 = vand.u32 %v4060, 4294901760
        %v4062 = vsub.f32 %v4060, %v4061
        %v4063 = vand.u32 %v4062, 4294901760
        %4064 = vmatmul.mubr.f32.gmra.mrb[0].mxu0 %v4063
        %v4065 = vpop.f32.mrb[0].mxu0
        %v4066 = vadd.f32 %v3946, %v4065
        %v4067 = vpop.f32.mrb[0].mxu0
        %4068 = vdwg.mxu0
        %4069 = vmatprep.subr.mxu0 0.0
        %v4070 = vand.u32 %v3937, 4294901760
        %v4071 = vsub.f32 %v3937, %v4070
        %v4072 = vand.u32 %v4071, 4294901760
        %v4073 = vsub.f32 %v4071, %v4072
        %v4074 = vand.u32 %v4073, 4294901760
        %4075 = vmatpush1.msra.mxu0 %v4074
        %4076 = vmatprep.subr.mxu0 0.0
        %v4077 = vand.u32 %v3938, 4294901760
        %v4078 = vsub.f32 %v3938, %v4077
        %v4079 = vand.u32 %v4078, 4294901760
        %v4080 = vsub.f32 %v4078, %v4079
        %v4081 = vand.u32 %v4080, 4294901760
        %4082 = vmatpush1.msra.mxu0 %v4081
        %4083 = vmatprep.subr.mxu0 0.0
        %v4084 = vand.u32 %v3939, 4294901760
        %v4085 = vsub.f32 %v3939, %v4084
        %v4086 = vand.u32 %v4085, 4294901760
        %v4087 = vsub.f32 %v4085, %v4086
        %v4088 = vand.u32 %v4087, 4294901760
        %4089 = vmatpush1.msra.mxu0 %v4088
        %4090 = vmatprep.subr.mxu0 0.0
        %v4091 = vand.u32 %v3940, 4294901760
        %v4092 = vsub.f32 %v3940, %v4091
        %v4093 = vand.u32 %v4092, 4294901760
        %v4094 = vsub.f32 %v4092, %v4093
        %v4095 = vand.u32 %v4094, 4294901760
        %4096 = vmatpush1.msra.mxu0 %v4095
        %4097 = vmatprep.subr.mxu0 0.0
        %4098 = vmatpush1.msra.mxu0 0.0
        %4099 = vmatprep.subr.mxu0 0.0
        %4100 = vmatpush1.msra.mxu0 0.0
        %4101 = vmatprep.subr.mxu0 0.0
        %4102 = vmatpush1.msra.mxu0 0.0
        %4103 = vmatprep.subr.mxu0 0.0
        %4104 = vmatpush1.msra.mxu0 0.0
        %4105 = vmatprep.subr.mxu0 0.0
        %4106 = vmatpush1.msra.mxu0 0.0
        %4107 = vmatprep.subr.mxu0 0.0
        %4108 = vmatpush1.msra.mxu0 0.0
        %4109 = vmatprep.subr.mxu0 0.0
        %4110 = vmatpush1.msra.mxu0 0.0
        %4111 = vmatprep.subr.mxu0 0.0
        %4112 = vmatpush1.msra.mxu0 0.0
        %4113 = vmatprep.subr.mxu0 0.0
        %4114 = vmatpush1.msra.mxu0 0.0
        %4115 = vmatprep.subr.mxu0 0.0
        %4116 = vmatpush1.msra.mxu0 0.0
        %4117 = vmatprep.subr.mxu0 0.0
        %4118 = vmatpush1.msra.mxu0 0.0
        %4119 = vmatprep.subr.mxu0 0.0
        %4120 = vmatpush1.msra.mxu0 0.0
        %4121 = vmatprep.subr.mxu0 0.0
        %4122 = vmatpush1.msra.mxu0 0.0
        %4123 = vmatprep.subr.mxu0 0.0
        %4124 = vmatpush1.msra.mxu0 0.0
        %4125 = vmatprep.subr.mxu0 0.0
        %4126 = vmatpush1.msra.mxu0 0.0
        %4127 = vmatprep.subr.mxu0 0.0
        %4128 = vmatpush1.msra.mxu0 0.0
        %4129 = vmatprep.subr.mxu0 0.0
        %4130 = vmatpush1.msra.mxu0 0.0
        %4131 = vmatprep.subr.mxu0 0.0
        %4132 = vmatpush1.msra.mxu0 0.0
        %4133 = vmatprep.subr.mxu0 0.0
        %4134 = vmatpush1.msra.mxu0 0.0
        %4135 = vmatprep.subr.mxu0 0.0
        %4136 = vmatpush1.msra.mxu0 0.0
        %4137 = vmatprep.subr.mxu0 0.0
        %4138 = vmatpush1.msra.mxu0 0.0
        %4139 = vmatprep.subr.mxu0 0.0
        %4140 = vmatpush1.msra.mxu0 0.0
        %4141 = vmatprep.subr.mxu0 0.0
        %4142 = vmatpush1.msra.mxu0 0.0
        %4143 = vmatprep.subr.mxu0 0.0
        %4144 = vmatpush1.msra.mxu0 0.0
        %4145 = vmatprep.subr.mxu0 0.0
        %4146 = vmatpush1.msra.mxu0 0.0
        %4147 = vmatprep.subr.mxu0 0.0
        %4148 = vmatpush1.msra.mxu0 0.0
        %4149 = vmatprep.subr.mxu0 0.0
        %4150 = vmatpush1.msra.mxu0 0.0
        %4151 = vmatprep.subr.mxu0 0.0
        %4152 = vmatpush1.msra.mxu0 0.0
        %4153 = vmatprep.mubr.f32.mxu0 0.0
        %v4154 = vand.u32 %v3949, 4294901760
        %4155 = vmatmul.mubr.f32.gmra.mrb[0].mxu0 %v4154
        %v4156 = vpop.f32.mrb[0].mxu0
        %v4157 = vadd.f32 %v4036, %v4156
        %v4158 = vpop.f32.mrb[0].mxu0
        %4159 = vmatprep.mubr.f32.mxu0 0.0
        %v4160 = vand.u32 %v3952, 4294901760
        %4161 = vmatmul.mubr.f32.gmra.mrb[0].mxu0 %v4160
        %v4162 = vpop.f32.mrb[0].mxu0
        %v4163 = vadd.f32 %v4046, %v4162
        %v4164 = vpop.f32.mrb[0].mxu0
        %4165 = vmatprep.mubr.f32.mxu0 0.0
        %v4166 = vand.u32 %v3955, 4294901760
        %4167 = vmatmul.mubr.f32.gmra.mrb[0].mxu0 %v4166
        %v4168 = vpop.f32.mrb[0].mxu0
        %v4169 = vadd.f32 %v4056, %v4168
        %v4170 = vpop.f32.mrb[0].mxu0
        %4171 = vmatprep.mubr.f32.mxu0 0.0
        %v4172 = vand.u32 %v3958, 4294901760
        %4173 = vmatmul.mubr.f32.gmra.mrb[0].mxu0 %v4172
        %v4174 = vpop.f32.mrb[0].mxu0
        %v4175 = vadd.f32 %v4066, %v4174
        %v4176 = vpop.f32.mrb[0].mxu0
        %4177 = vdwg.mxu0
        %4178 = vmatprep.subr.mxu0 0.0
        %v4179 = vand.u32 %v3937, 4294901760
        %v4180 = vsub.f32 %v3937, %v4179
        %4181 = vmatpush1.msra.mxu0 %v4180
        %4182 = vmatprep.subr.mxu0 0.0
        %v4183 = vand.u32 %v3938, 4294901760
        %v4184 = vsub.f32 %v3938, %v4183
        %4185 = vmatpush1.msra.mxu0 %v4184
        %4186 = vmatprep.subr.mxu0 0.0
        %v4187 = vand.u32 %v3939, 4294901760
        %v4188 = vsub.f32 %v3939, %v4187
        %4189 = vmatpush1.msra.mxu0 %v4188
        %4190 = vmatprep.subr.mxu0 0.0
        %v4191 = vand.u32 %v3940, 4294901760
        %v4192 = vsub.f32 %v3940, %v4191
        %4193 = vmatpush1.msra.mxu0 %v4192
        %4194 = vmatprep.subr.mxu0 0.0
        %4195 = vmatpush1.msra.mxu0 0.0
        %4196 = vmatprep.subr.mxu0 0.0
        %4197 = vmatpush1.msra.mxu0 0.0
        %4198 = vmatprep.subr.mxu0 0.0
        %4199 = vmatpush1.msra.mxu0 0.0
        %4200 = vmatprep.subr.mxu0 0.0
        %4201 = vmatpush1.msra.mxu0 0.0
        %4202 = vmatprep.subr.mxu0 0.0
        %4203 = vmatpush1.msra.mxu0 0.0
        %4204 = vmatprep.subr.mxu0 0.0
        %4205 = vmatpush1.msra.mxu0 0.0
        %4206 = vmatprep.subr.mxu0 0.0
        %4207 = vmatpush1.msra.mxu0 0.0
        %4208 = vmatprep.subr.mxu0 0.0
        %4209 = vmatpush1.msra.mxu0 0.0
        %4210 = vmatprep.subr.mxu0 0.0
        %4211 = vmatpush1.msra.mxu0 0.0
        %4212 = vmatprep.subr.mxu0 0.0
        %4213 = vmatpush1.msra.mxu0 0.0
        %4214 = vmatprep.subr.mxu0 0.0
        %4215 = vmatpush1.msra.mxu0 0.0
        %4216 = vmatprep.subr.mxu0 0.0
        %4217 = vmatpush1.msra.mxu0 0.0
        %4218 = vmatprep.subr.mxu0 0.0
        %4219 = vmatpush1.msra.mxu0 0.0
        %4220 = vmatprep.subr.mxu0 0.0
        %4221 = vmatpush1.msra.mxu0 0.0
        %4222 = vmatprep.subr.mxu0 0.0
        %4223 = vmatpush1.msra.mxu0 0.0
        %4224 = vmatprep.subr.mxu0 0.0
        %4225 = vmatpush1.msra.mxu0 0.0
        %4226 = vmatprep.subr.mxu0 0.0
        %4227 = vmatpush1.msra.mxu0 0.0
        %4228 = vmatprep.subr.mxu0 0.0
        %4229 = vmatpush1.msra.mxu0 0.0
        %4230 = vmatprep.subr.mxu0 0.0
        %4231 = vmatpush1.msra.mxu0 0.0
        %4232 = vmatprep.subr.mxu0 0.0
        %4233 = vmatpush1.msra.mxu0 0.0
        %4234 = vmatprep.subr.mxu0 0.0
        %4235 = vmatpush1.msra.mxu0 0.0
        %4236 = vmatprep.subr.mxu0 0.0
        %4237 = vmatpush1.msra.mxu0 0.0
        %4238 = vmatprep.subr.mxu0 0.0
        %4239 = vmatpush1.msra.mxu0 0.0
        %4240 = vmatprep.subr.mxu0 0.0
        %4241 = vmatpush1.msra.mxu0 0.0
        %4242 = vmatprep.subr.mxu0 0.0
        %4243 = vmatpush1.msra.mxu0 0.0
        %4244 = vmatprep.subr.mxu0 0.0
        %4245 = vmatpush1.msra.mxu0 0.0
        %4246 = vmatprep.subr.mxu0 0.0
        %4247 = vmatpush1.msra.mxu0 0.0
        %4248 = vmatprep.subr.mxu0 0.0
        %4249 = vmatpush1.msra.mxu0 0.0
        %4250 = vmatprep.mubr.f32.mxu0 0.0
        %v4251 = vand.u32 %v3949, 4294901760
        %v4252 = vsub.f32 %v3949, %v4251
        %4253 = vmatmul.mubr.f32.gmra.mrb[0].mxu0 %v4252
        %v4254 = vpop.f32.mrb[0].mxu0
        %v4255 = vadd.f32 %v4157, %v4254
        %v4256 = vpop.f32.mrb[0].mxu0
        %4257 = vmatprep.mubr.f32.mxu0 0.0
        %v4258 = vand.u32 %v3952, 4294901760
        %v4259 = vsub.f32 %v3952, %v4258
        %4260 = vmatmul.mubr.f32.gmra.mrb[0].mxu0 %v4259
        %v4261 = vpop.f32.mrb[0].mxu0
        %v4262 = vadd.f32 %v4163, %v4261
        %v4263 = vpop.f32.mrb[0].mxu0
        %4264 = vmatprep.mubr.f32.mxu0 0.0
        %v4265 = vand.u32 %v3955, 4294901760
        %v4266 = vsub.f32 %v3955, %v4265
        %4267 = vmatmul.mubr.f32.gmra.mrb[0].mxu0 %v4266
        %v4268 = vpop.f32.mrb[0].mxu0
        %v4269 = vadd.f32 %v4169, %v4268
        %v4270 = vpop.f32.mrb[0].mxu0
        %4271 = vmatprep.mubr.f32.mxu0 0.0
        %v4272 = vand.u32 %v3958, 4294901760
        %v4273 = vsub.f32 %v3958, %v4272
        %4274 = vmatmul.mubr.f32.gmra.mrb[0].mxu0 %v4273
        %v4275 = vpop.f32.mrb[0].mxu0
        %v4276 = vadd.f32 %v4175, %v4275
        %v4277 = vpop.f32.mrb[0].mxu0
        %4278 = vdwg.mxu0
        %4279 = vmatprep.subr.mxu0 0.0
        %v4280 = vand.u32 %v3937, 4294901760
        %4281 = vmatpush1.msra.mxu0 %v4280
        %4282 = vmatprep.subr.mxu0 0.0
        %v4283 = vand.u32 %v3938, 4294901760
        %4284 = vmatpush1.msra.mxu0 %v4283
        %4285 = vmatprep.subr.mxu0 0.0
        %v4286 = vand.u32 %v3939, 4294901760
        %4287 = vmatpush1.msra.mxu0 %v4286
        %4288 = vmatprep.subr.mxu0 0.0
        %v4289 = vand.u32 %v3940, 4294901760
        %4290 = vmatpush1.msra.mxu0 %v4289
        %4291 = vmatprep.subr.mxu0 0.0
        %4292 = vmatpush1.msra.mxu0 0.0
        %4293 = vmatprep.subr.mxu0 0.0
        %4294 = vmatpush1.msra.mxu0 0.0
        %4295 = vmatprep.subr.mxu0 0.0
        %4296 = vmatpush1.msra.mxu0 0.0
        %4297 = vmatprep.subr.mxu0 0.0
        %4298 = vmatpush1.msra.mxu0 0.0
        %4299 = vmatprep.subr.mxu0 0.0
        %4300 = vmatpush1.msra.mxu0 0.0
        %4301 = vmatprep.subr.mxu0 0.0
        %4302 = vmatpush1.msra.mxu0 0.0
        %4303 = vmatprep.subr.mxu0 0.0
        %4304 = vmatpush1.msra.mxu0 0.0
        %4305 = vmatprep.subr.mxu0 0.0
        %4306 = vmatpush1.msra.mxu0 0.0
        %4307 = vmatprep.subr.mxu0 0.0
        %4308 = vmatpush1.msra.mxu0 0.0
        %4309 = vmatprep.subr.mxu0 0.0
        %4310 = vmatpush1.msra.mxu0 0.0
        %4311 = vmatprep.subr.mxu0 0.0
        %4312 = vmatpush1.msra.mxu0 0.0
        %4313 = vmatprep.subr.mxu0 0.0
        %4314 = vmatpush1.msra.mxu0 0.0
        %4315 = vmatprep.subr.mxu0 0.0
        %4316 = vmatpush1.msra.mxu0 0.0
        %4317 = vmatprep.subr.mxu0 0.0
        %4318 = vmatpush1.msra.mxu0 0.0
        %4319 = vmatprep.subr.mxu0 0.0
        %4320 = vmatpush1.msra.mxu0 0.0
        %4321 = vmatprep.subr.mxu0 0.0
        %4322 = vmatpush1.msra.mxu0 0.0
        %4323 = vmatprep.subr.mxu0 0.0
        %4324 = vmatpush1.msra.mxu0 0.0
        %4325 = vmatprep.subr.mxu0 0.0
        %4326 = vmatpush1.msra.mxu0 0.0
        %4327 = vmatprep.subr.mxu0 0.0
        %4328 = vmatpush1.msra.mxu0 0.0
        %4329 = vmatprep.subr.mxu0 0.0
        %4330 = vmatpush1.msra.mxu0 0.0
        %4331 = vmatprep.subr.mxu0 0.0
        %4332 = vmatpush1.msra.mxu0 0.0
        %4333 = vmatprep.subr.mxu0 0.0
        %4334 = vmatpush1.msra.mxu0 0.0
        %4335 = vmatprep.subr.mxu0 0.0
        %4336 = vmatpush1.msra.mxu0 0.0
        %4337 = vmatprep.subr.mxu0 0.0
        %4338 = vmatpush1.msra.mxu0 0.0
        %4339 = vmatprep.subr.mxu0 0.0
        %4340 = vmatpush1.msra.mxu0 0.0
        %4341 = vmatprep.subr.mxu0 0.0
        %4342 = vmatpush1.msra.mxu0 0.0
        %4343 = vmatprep.subr.mxu0 0.0
        %4344 = vmatpush1.msra.mxu0 0.0
        %4345 = vmatprep.subr.mxu0 0.0
        %4346 = vmatpush1.msra.mxu0 0.0
        %4347 = vmatprep.mubr.f32.mxu0 0.0
        %v4348 = vand.u32 %v3949, 4294901760
        %v4349 = vsub.f32 %v3949, %v4348
        %v4350 = vand.u32 %v4349, 4294901760
        %4351 = vmatmul.mubr.f32.gmra.mrb[0].mxu0 %v4350
        %v4352 = vpop.f32.mrb[0].mxu0
        %v4353 = vadd.f32 %v4255, %v4352
        %v4354 = vpop.f32.mrb[0].mxu0
        %4355 = vmatprep.mubr.f32.mxu0 0.0
        %v4356 = vand.u32 %v3952, 4294901760
        %v4357 = vsub.f32 %v3952, %v4356
        %v4358 = vand.u32 %v4357, 4294901760
        %4359 = vmatmul.mubr.f32.gmra.mrb[0].mxu0 %v4358
        %v4360 = vpop.f32.mrb[0].mxu0
        %v4361 = vadd.f32 %v4262, %v4360
        %v4362 = vpop.f32.mrb[0].mxu0
        %4363 = vmatprep.mubr.f32.mxu0 0.0
        %v4364 = vand.u32 %v3955, 4294901760
        %v4365 = vsub.f32 %v3955, %v4364
        %v4366 = vand.u32 %v4365, 4294901760
        %4367 = vmatmul.mubr.f32.gmra.mrb[0].mxu0 %v4366
        %v4368 = vpop.f32.mrb[0].mxu0
        %v4369 = vadd.f32 %v4269, %v4368
        %v4370 = vpop.f32.mrb[0].mxu0
        %4371 = vmatprep.mubr.f32.mxu0 0.0
        %v4372 = vand.u32 %v3958, 4294901760
        %v4373 = vsub.f32 %v3958, %v4372
        %v4374 = vand.u32 %v4373, 4294901760
        %4375 = vmatmul.mubr.f32.gmra.mrb[0].mxu0 %v4374
        %v4376 = vpop.f32.mrb[0].mxu0
        %v4377 = vadd.f32 %v4276, %v4376
        %v4378 = vpop.f32.mrb[0].mxu0
        %4379 = vdwg.mxu0
        %4380 = vmatprep.subr.mxu0 0.0
        %v4381 = vand.u32 %v3937, 4294901760
        %v4382 = vsub.f32 %v3937, %v4381
        %v4383 = vand.u32 %v4382, 4294901760
        %4384 = vmatpush1.msra.mxu0 %v4383
        %4385 = vmatprep.subr.mxu0 0.0
        %v4386 = vand.u32 %v3938, 4294901760
        %v4387 = vsub.f32 %v3938, %v4386
        %v4388 = vand.u32 %v4387, 4294901760
        %4389 = vmatpush1.msra.mxu0 %v4388
        %4390 = vmatprep.subr.mxu0 0.0
        %v4391 = vand.u32 %v3939, 4294901760
        %v4392 = vsub.f32 %v3939, %v4391
        %v4393 = vand.u32 %v4392, 4294901760
        %4394 = vmatpush1.msra.mxu0 %v4393
        %4395 = vmatprep.subr.mxu0 0.0
        %v4396 = vand.u32 %v3940, 4294901760
        %v4397 = vsub.f32 %v3940, %v4396
        %v4398 = vand.u32 %v4397, 4294901760
        %4399 = vmatpush1.msra.mxu0 %v4398
        %4400 = vmatprep.subr.mxu0 0.0
        %4401 = vmatpush1.msra.mxu0 0.0
        %4402 = vmatprep.subr.mxu0 0.0
        %4403 = vmatpush1.msra.mxu0 0.0
        %4404 = vmatprep.subr.mxu0 0.0
        %4405 = vmatpush1.msra.mxu0 0.0
        %4406 = vmatprep.subr.mxu0 0.0
        %4407 = vmatpush1.msra.mxu0 0.0
        %4408 = vmatprep.subr.mxu0 0.0
        %4409 = vmatpush1.msra.mxu0 0.0
        %4410 = vmatprep.subr.mxu0 0.0
        %4411 = vmatpush1.msra.mxu0 0.0
        %4412 = vmatprep.subr.mxu0 0.0
        %4413 = vmatpush1.msra.mxu0 0.0
        %4414 = vmatprep.subr.mxu0 0.0
        %4415 = vmatpush1.msra.mxu0 0.0
        %4416 = vmatprep.subr.mxu0 0.0
        %4417 = vmatpush1.msra.mxu0 0.0
        %4418 = vmatprep.subr.mxu0 0.0
        %4419 = vmatpush1.msra.mxu0 0.0
        %4420 = vmatprep.subr.mxu0 0.0
        %4421 = vmatpush1.msra.mxu0 0.0
        %4422 = vmatprep.subr.mxu0 0.0
        %4423 = vmatpush1.msra.mxu0 0.0
        %4424 = vmatprep.subr.mxu0 0.0
        %4425 = vmatpush1.msra.mxu0 0.0
        %4426 = vmatprep.subr.mxu0 0.0
        %4427 = vmatpush1.msra.mxu0 0.0
        %4428 = vmatprep.subr.mxu0 0.0
        %4429 = vmatpush1.msra.mxu0 0.0
        %4430 = vmatprep.subr.mxu0 0.0
        %4431 = vmatpush1.msra.mxu0 0.0
        %4432 = vmatprep.subr.mxu0 0.0
        %4433 = vmatpush1.msra.mxu0 0.0
        %4434 = vmatprep.subr.mxu0 0.0
        %4435 = vmatpush1.msra.mxu0 0.0
        %4436 = vmatprep.subr.mxu0 0.0
        %4437 = vmatpush1.msra.mxu0 0.0
        %4438 = vmatprep.subr.mxu0 0.0
        %4439 = vmatpush1.msra.mxu0 0.0
        %4440 = vmatprep.subr.mxu0 0.0
        %4441 = vmatpush1.msra.mxu0 0.0
        %4442 = vmatprep.subr.mxu0 0.0
        %4443 = vmatpush1.msra.mxu0 0.0
        %4444 = vmatprep.subr.mxu0 0.0
        %4445 = vmatpush1.msra.mxu0 0.0
        %4446 = vmatprep.subr.mxu0 0.0
        %4447 = vmatpush1.msra.mxu0 0.0
        %4448 = vmatprep.subr.mxu0 0.0
        %4449 = vmatpush1.msra.mxu0 0.0
        %4450 = vmatprep.subr.mxu0 0.0
        %4451 = vmatpush1.msra.mxu0 0.0
        %4452 = vmatprep.subr.mxu0 0.0
        %4453 = vmatpush1.msra.mxu0 0.0
        %4454 = vmatprep.subr.mxu0 0.0
        %4455 = vmatpush1.msra.mxu0 0.0
        %4456 = vmatprep.mubr.f32.mxu0 0.0
        %v4457 = vand.u32 %v3949, 4294901760
        %4458 = vmatmul.mubr.f32.gmra.mrb[0].mxu0 %v4457
        %v4459 = vpop.f32.mrb[0].mxu0
        %v4460 = vadd.f32 %v4353, %v4459
        %v4461 = vpop.f32.mrb[0].mxu0
        %4462 = vmatprep.mubr.f32.mxu0 0.0
        %v4463 = vand.u32 %v3952, 4294901760
        %4464 = vmatmul.mubr.f32.gmra.mrb[0].mxu0 %v4463
        %v4465 = vpop.f32.mrb[0].mxu0
        %v4466 = vadd.f32 %v4361, %v4465
        %v4467 = vpop.f32.mrb[0].mxu0
        %4468 = vmatprep.mubr.f32.mxu0 0.0
        %v4469 = vand.u32 %v3955, 4294901760
        %4470 = vmatmul.mubr.f32.gmra.mrb[0].mxu0 %v4469
        %v4471 = vpop.f32.mrb[0].mxu0
        %v4472 = vadd.f32 %v4369, %v4471
        %v4473 = vpop.f32.mrb[0].mxu0
        %4474 = vmatprep.mubr.f32.mxu0 0.0
        %v4475 = vand.u32 %v3958, 4294901760
        %4476 = vmatmul.mubr.f32.gmra.mrb[0].mxu0 %v4475
        %v4477 = vpop.f32.mrb[0].mxu0
        %v4478 = vadd.f32 %v4377, %v4477
        %v4479 = vpop.f32.mrb[0].mxu0
        %4480 = vdwg.mxu0
        %4481 = vmatprep.subr.mxu0 0.0
        %v4482 = vand.u32 %v3937, 4294901760
        %4483 = vmatpush1.msra.mxu0 %v4482
        %4484 = vmatprep.subr.mxu0 0.0
        %v4485 = vand.u32 %v3938, 4294901760
        %4486 = vmatpush1.msra.mxu0 %v4485
        %4487 = vmatprep.subr.mxu0 0.0
        %v4488 = vand.u32 %v3939, 4294901760
        %4489 = vmatpush1.msra.mxu0 %v4488
        %4490 = vmatprep.subr.mxu0 0.0
        %v4491 = vand.u32 %v3940, 4294901760
        %4492 = vmatpush1.msra.mxu0 %v4491
        %4493 = vmatprep.subr.mxu0 0.0
        %4494 = vmatpush1.msra.mxu0 0.0
        %4495 = vmatprep.subr.mxu0 0.0
        %4496 = vmatpush1.msra.mxu0 0.0
        %4497 = vmatprep.subr.mxu0 0.0
        %4498 = vmatpush1.msra.mxu0 0.0
        %4499 = vmatprep.subr.mxu0 0.0
        %4500 = vmatpush1.msra.mxu0 0.0
        %4501 = vmatprep.subr.mxu0 0.0
        %4502 = vmatpush1.msra.mxu0 0.0
        %4503 = vmatprep.subr.mxu0 0.0
        %4504 = vmatpush1.msra.mxu0 0.0
        %4505 = vmatprep.subr.mxu0 0.0
        %4506 = vmatpush1.msra.mxu0 0.0
        %4507 = vmatprep.subr.mxu0 0.0
        %4508 = vmatpush1.msra.mxu0 0.0
        %4509 = vmatprep.subr.mxu0 0.0
        %4510 = vmatpush1.msra.mxu0 0.0
        %4511 = vmatprep.subr.mxu0 0.0
        %4512 = vmatpush1.msra.mxu0 0.0
        %4513 = vmatprep.subr.mxu0 0.0
        %4514 = vmatpush1.msra.mxu0 0.0
        %4515 = vmatprep.subr.mxu0 0.0
        %4516 = vmatpush1.msra.mxu0 0.0
        %4517 = vmatprep.subr.mxu0 0.0
        %4518 = vmatpush1.msra.mxu0 0.0
        %4519 = vmatprep.subr.mxu0 0.0
        %4520 = vmatpush1.msra.mxu0 0.0
        %4521 = vmatprep.subr.mxu0 0.0
        %4522 = vmatpush1.msra.mxu0 0.0
        %4523 = vmatprep.subr.mxu0 0.0
        %4524 = vmatpush1.msra.mxu0 0.0
        %4525 = vmatprep.subr.mxu0 0.0
        %4526 = vmatpush1.msra.mxu0 0.0
        %4527 = vmatprep.subr.mxu0 0.0
        %4528 = vmatpush1.msra.mxu0 0.0
        %4529 = vmatprep.subr.mxu0 0.0
        %4530 = vmatpush1.msra.mxu0 0.0
        %4531 = vmatprep.subr.mxu0 0.0
        %4532 = vmatpush1.msra.mxu0 0.0
        %4533 = vmatprep.subr.mxu0 0.0
        %4534 = vmatpush1.msra.mxu0 0.0
        %4535 = vmatprep.subr.mxu0 0.0
        %4536 = vmatpush1.msra.mxu0 0.0
        %4537 = vmatprep.subr.mxu0 0.0
        %4538 = vmatpush1.msra.mxu0 0.0
        %4539 = vmatprep.subr.mxu0 0.0
        %4540 = vmatpush1.msra.mxu0 0.0
        %4541 = vmatprep.subr.mxu0 0.0
        %4542 = vmatpush1.msra.mxu0 0.0
        %4543 = vmatprep.subr.mxu0 0.0
        %4544 = vmatpush1.msra.mxu0 0.0
        %4545 = vmatprep.subr.mxu0 0.0
        %4546 = vmatpush1.msra.mxu0 0.0
        %4547 = vmatprep.subr.mxu0 0.0
        %4548 = vmatpush1.msra.mxu0 0.0
        %4549 = vmatprep.mubr.f32.mxu0 0.0
        %v4550 = vand.u32 %v3949, 4294901760
        %4551 = vmatmul.mubr.f32.gmra.mrb[0].mxu0 %v4550
        %v4552 = vpop.f32.mrb[0].mxu0
        %v4553 = vadd.f32 %v4460, %v4552
        %v4554 = vpop.f32.mrb[0].mxu0
        %4555 = vmatprep.mubr.f32.mxu0 0.0
        %v4556 = vand.u32 %v3952, 4294901760
        %4557 = vmatmul.mubr.f32.gmra.mrb[0].mxu0 %v4556
        %v4558 = vpop.f32.mrb[0].mxu0
        %v4559 = vadd.f32 %v4466, %v4558
        %v4560 = vpop.f32.mrb[0].mxu0
        %4561 = vmatprep.mubr.f32.mxu0 0.0
        %v4562 = vand.u32 %v3955, 4294901760
        %4563 = vmatmul.mubr.f32.gmra.mrb[0].mxu0 %v4562
        %v4564 = vpop.f32.mrb[0].mxu0
        %v4565 = vadd.f32 %v4472, %v4564
        %v4566 = vpop.f32.mrb[0].mxu0
        %4567 = vmatprep.mubr.f32.mxu0 0.0
        %v4568 = vand.u32 %v3958, 4294901760
        %4569 = vmatmul.mubr.f32.gmra.mrb[0].mxu0 %v4568
        %v4570 = vpop.f32.mrb[0].mxu0
        %v4571 = vadd.f32 %v4478, %v4570
        %v4572 = vpop.f32.mrb[0].mxu0
        %4573 = vdwg.mxu0
        %v4574 = vmax.f32 %v4553, 0.0
        %v4575 = vmax.f32 %v4559, 0.0
        %v4576 = vmax.f32 %v4565, 0.0
        %v4577 = vmax.f32 %v4571, 0.0
        %v4578 = vsel %vm1760, 1, 0
        %v4579 = vsel %vm1761, 1, 0
        %v4580 = vsel %vm1762, 1, 0
        %v4581 = vsel %vm1763, 1, 0
        %vm4582 = vcmp.eq.s32.totalorder %v4578, 1
        %vm4583 = vcmp.eq.s32.totalorder %v4579, 1
        %vm4584 = vcmp.eq.s32.totalorder %v4580, 1
        %vm4585 = vcmp.eq.s32.totalorder %v4581, 1
        %v4586 = vsel %vm4582, %v4574, 0.0
        %v4587 = vsel %vm4583, %v4575, 0.0
        %v4588 = vsel %vm4584, %v4576, 0.0
        %v4589 = vsel %vm4585, %v4577, 0.0
        %4590 = vst.msk [vmem:[%s453] sm:$0xff] %vm478, %v4586
        %4591 = vst.msk [vmem:[%s453 + $0x8] sm:$0xff] %vm478, %v4587
        %4592 = vst.msk [vmem:[%s453 + $0x10] sm:$0xff] %vm478, %v4588
        %4593 = vst.msk [vmem:[%s453 + $0x18] sm:$0xff] %vm478, %v4589
        %v4594 = vld [vmem:[%s7] sm:$0xff]
        %v4595 = vld [vmem:[%s7 + $0x8] sm:$0xff]
        %v4596 = vld [vmem:[%s7 + $0x10] sm:$0xff]
        %v4597 = vld [vmem:[%s7 + $0x18] sm:$0xff]
        %v4598 = vld [vmem:[%s8] sm:$0x1]
        %v4600 = vlaneseq
        %v4601 = vshrl.u32 %v4600, 7
        %v4602 = vsub.s32 0, %v4601
        %v4603 = vrot.slane %v4598, %v4602
        %v4606 = vsel %vm478, %v4586, 0
        %v4609 = vsel %vm478, %v4587, 0
        %v4612 = vsel %vm478, %v4588, 0
        %v4615 = vsel %vm478, %v4589, 0
        %4617 = vmatprep.subr.mxu0 0.0
        %v4618 = vand.u32 %v4594, 4294901760
        %4619 = vmatpush1.msra.mxu0 %v4618
        %4620 = vmatprep.subr.mxu0 0.0
        %v4621 = vand.u32 %v4595, 4294901760
        %4622 = vmatpush1.msra.mxu0 %v4621
        %4623 = vmatprep.subr.mxu0 0.0
        %v4624 = vand.u32 %v4596, 4294901760
        %4625 = vmatpush1.msra.mxu0 %v4624
        %4626 = vmatprep.subr.mxu0 0.0
        %v4627 = vand.u32 %v4597, 4294901760
        %4628 = vmatpush1.msra.mxu0 %v4627
        %4629 = vmatprep.subr.mxu0 0.0
        %4630 = vmatpush1.msra.mxu0 0.0
        %4631 = vmatprep.subr.mxu0 0.0
        %4632 = vmatpush1.msra.mxu0 0.0
        %4633 = vmatprep.subr.mxu0 0.0
        %4634 = vmatpush1.msra.mxu0 0.0
        %4635 = vmatprep.subr.mxu0 0.0
        %4636 = vmatpush1.msra.mxu0 0.0
        %4637 = vmatprep.subr.mxu0 0.0
        %4638 = vmatpush1.msra.mxu0 0.0
        %4639 = vmatprep.subr.mxu0 0.0
        %4640 = vmatpush1.msra.mxu0 0.0
        %4641 = vmatprep.subr.mxu0 0.0
        %4642 = vmatpush1.msra.mxu0 0.0
        %4643 = vmatprep.subr.mxu0 0.0
        %4644 = vmatpush1.msra.mxu0 0.0
        %4645 = vmatprep.subr.mxu0 0.0
        %4646 = vmatpush1.msra.mxu0 0.0
        %4647 = vmatprep.subr.mxu0 0.0
        %4648 = vmatpush1.msra.mxu0 0.0
        %4649 = vmatprep.subr.mxu0 0.0
        %4650 = vmatpush1.msra.mxu0 0.0
        %4651 = vmatprep.subr.mxu0 0.0
        %4652 = vmatpush1.msra.mxu0 0.0
        %4653 = vmatprep.subr.mxu0 0.0
        %4654 = vmatpush1.msra.mxu0 0.0
        %4655 = vmatprep.subr.mxu0 0.0
        %4656 = vmatpush1.msra.mxu0 0.0
        %4657 = vmatprep.subr.mxu0 0.0
        %4658 = vmatpush1.msra.mxu0 0.0
        %4659 = vmatprep.subr.mxu0 0.0
        %4660 = vmatpush1.msra.mxu0 0.0
        %4661 = vmatprep.subr.mxu0 0.0
        %4662 = vmatpush1.msra.mxu0 0.0
        %4663 = vmatprep.subr.mxu0 0.0
        %4664 = vmatpush1.msra.mxu0 0.0
        %4665 = vmatprep.subr.mxu0 0.0
        %4666 = vmatpush1.msra.mxu0 0.0
        %4667 = vmatprep.subr.mxu0 0.0
        %4668 = vmatpush1.msra.mxu0 0.0
        %4669 = vmatprep.subr.mxu0 0.0
        %4670 = vmatpush1.msra.mxu0 0.0
        %4671 = vmatprep.subr.mxu0 0.0
        %4672 = vmatpush1.msra.mxu0 0.0
        %4673 = vmatprep.subr.mxu0 0.0
        %4674 = vmatpush1.msra.mxu0 0.0
        %4675 = vmatprep.subr.mxu0 0.0
        %4676 = vmatpush1.msra.mxu0 0.0
        %4677 = vmatprep.subr.mxu0 0.0
        %4678 = vmatpush1.msra.mxu0 0.0
        %4679 = vmatprep.subr.mxu0 0.0
        %4680 = vmatpush1.msra.mxu0 0.0
        %4681 = vmatprep.subr.mxu0 0.0
        %4682 = vmatpush1.msra.mxu0 0.0
        %4683 = vmatprep.subr.mxu0 0.0
        %4684 = vmatpush1.msra.mxu0 0.0
        %4685 = vmatprep.mubr.f32.mxu0 0.0
        %v4686 = vand.u32 %v4606, 4294901760
        %v4687 = vsub.f32 %v4606, %v4686
        %v4688 = vand.u32 %v4687, 4294901760
        %v4689 = vsub.f32 %v4687, %v4688
        %v4690 = vand.u32 %v4689, 4294901760
        %4691 = vmatmul.mubr.f32.gmra.mrb[0].mxu0 %v4690
        %v4692 = vpop.f32.mrb[0].mxu0
        %v4693 = vadd.f32 %v4603, %v4692
        %v4694 = vpop.f32.mrb[0].mxu0
        %4695 = vmatprep.mubr.f32.mxu0 0.0
        %v4696 = vand.u32 %v4609, 4294901760
        %v4697 = vsub.f32 %v4609, %v4696
        %v4698 = vand.u32 %v4697, 4294901760
        %v4699 = vsub.f32 %v4697, %v4698
        %v4700 = vand.u32 %v4699, 4294901760
        %4701 = vmatmul.mubr.f32.gmra.mrb[0].mxu0 %v4700
        %v4702 = vpop.f32.mrb[0].mxu0
        %v4703 = vadd.f32 %v4603, %v4702
        %v4704 = vpop.f32.mrb[0].mxu0
        %4705 = vmatprep.mubr.f32.mxu0 0.0
        %v4706 = vand.u32 %v4612, 4294901760
        %v4707 = vsub.f32 %v4612, %v4706
        %v4708 = vand.u32 %v4707, 4294901760
        %v4709 = vsub.f32 %v4707, %v4708
        %v4710 = vand.u32 %v4709, 4294901760
        %4711 = vmatmul.mubr.f32.gmra.mrb[0].mxu0 %v4710
        %v4712 = vpop.f32.mrb[0].mxu0
        %v4713 = vadd.f32 %v4603, %v4712
        %v4714 = vpop.f32.mrb[0].mxu0
        %4715 = vmatprep.mubr.f32.mxu0 0.0
        %v4716 = vand.u32 %v4615, 4294901760
        %v4717 = vsub.f32 %v4615, %v4716
        %v4718 = vand.u32 %v4717, 4294901760
        %v4719 = vsub.f32 %v4717, %v4718
        %v4720 = vand.u32 %v4719, 4294901760
        %4721 = vmatmul.mubr.f32.gmra.mrb[0].mxu0 %v4720
        %v4722 = vpop.f32.mrb[0].mxu0
        %v4723 = vadd.f32 %v4603, %v4722
        %v4724 = vpop.f32.mrb[0].mxu0
        %4725 = vdwg.mxu0
        %4726 = vmatprep.subr.mxu0 0.0
        %v4727 = vand.u32 %v4594, 4294901760
        %v4728 = vsub.f32 %v4594, %v4727
        %v4729 = vand.u32 %v4728, 4294901760
        %v4730 = vsub.f32 %v4728, %v4729
        %v4731 = vand.u32 %v4730, 4294901760
        %4732 = vmatpush1.msra.mxu0 %v4731
        %4733 = vmatprep.subr.mxu0 0.0
        %v4734 = vand.u32 %v4595, 4294901760
        %v4735 = vsub.f32 %v4595, %v4734
        %v4736 = vand.u32 %v4735, 4294901760
        %v4737 = vsub.f32 %v4735, %v4736
        %v4738 = vand.u32 %v4737, 4294901760
        %4739 = vmatpush1.msra.mxu0 %v4738
        %4740 = vmatprep.subr.mxu0 0.0
        %v4741 = vand.u32 %v4596, 4294901760
        %v4742 = vsub.f32 %v4596, %v4741
        %v4743 = vand.u32 %v4742, 4294901760
        %v4744 = vsub.f32 %v4742, %v4743
        %v4745 = vand.u32 %v4744, 4294901760
        %4746 = vmatpush1.msra.mxu0 %v4745
        %4747 = vmatprep.subr.mxu0 0.0
        %v4748 = vand.u32 %v4597, 4294901760
        %v4749 = vsub.f32 %v4597, %v4748
        %v4750 = vand.u32 %v4749, 4294901760
        %v4751 = vsub.f32 %v4749, %v4750
        %v4752 = vand.u32 %v4751, 4294901760
        %4753 = vmatpush1.msra.mxu0 %v4752
        %4754 = vmatprep.subr.mxu0 0.0
        %4755 = vmatpush1.msra.mxu0 0.0
        %4756 = vmatprep.subr.mxu0 0.0
        %4757 = vmatpush1.msra.mxu0 0.0
        %4758 = vmatprep.subr.mxu0 0.0
        %4759 = vmatpush1.msra.mxu0 0.0
        %4760 = vmatprep.subr.mxu0 0.0
        %4761 = vmatpush1.msra.mxu0 0.0
        %4762 = vmatprep.subr.mxu0 0.0
        %4763 = vmatpush1.msra.mxu0 0.0
        %4764 = vmatprep.subr.mxu0 0.0
        %4765 = vmatpush1.msra.mxu0 0.0
        %4766 = vmatprep.subr.mxu0 0.0
        %4767 = vmatpush1.msra.mxu0 0.0
        %4768 = vmatprep.subr.mxu0 0.0
        %4769 = vmatpush1.msra.mxu0 0.0
        %4770 = vmatprep.subr.mxu0 0.0
        %4771 = vmatpush1.msra.mxu0 0.0
        %4772 = vmatprep.subr.mxu0 0.0
        %4773 = vmatpush1.msra.mxu0 0.0
        %4774 = vmatprep.subr.mxu0 0.0
        %4775 = vmatpush1.msra.mxu0 0.0
        %4776 = vmatprep.subr.mxu0 0.0
        %4777 = vmatpush1.msra.mxu0 0.0
        %4778 = vmatprep.subr.mxu0 0.0
        %4779 = vmatpush1.msra.mxu0 0.0
        %4780 = vmatprep.subr.mxu0 0.0
        %4781 = vmatpush1.msra.mxu0 0.0
        %4782 = vmatprep.subr.mxu0 0.0
        %4783 = vmatpush1.msra.mxu0 0.0
        %4784 = vmatprep.subr.mxu0 0.0
        %4785 = vmatpush1.msra.mxu0 0.0
        %4786 = vmatprep.subr.mxu0 0.0
        %4787 = vmatpush1.msra.mxu0 0.0
        %4788 = vmatprep.subr.mxu0 0.0
        %4789 = vmatpush1.msra.mxu0 0.0
        %4790 = vmatprep.subr.mxu0 0.0
        %4791 = vmatpush1.msra.mxu0 0.0
        %4792 = vmatprep.subr.mxu0 0.0
        %4793 = vmatpush1.msra.mxu0 0.0
        %4794 = vmatprep.subr.mxu0 0.0
        %4795 = vmatpush1.msra.mxu0 0.0
        %4796 = vmatprep.subr.mxu0 0.0
        %4797 = vmatpush1.msra.mxu0 0.0
        %4798 = vmatprep.subr.mxu0 0.0
        %4799 = vmatpush1.msra.mxu0 0.0
        %4800 = vmatprep.subr.mxu0 0.0
        %4801 = vmatpush1.msra.mxu0 0.0
        %4802 = vmatprep.subr.mxu0 0.0
        %4803 = vmatpush1.msra.mxu0 0.0
        %4804 = vmatprep.subr.mxu0 0.0
        %4805 = vmatpush1.msra.mxu0 0.0
        %4806 = vmatprep.subr.mxu0 0.0
        %4807 = vmatpush1.msra.mxu0 0.0
        %4808 = vmatprep.subr.mxu0 0.0
        %4809 = vmatpush1.msra.mxu0 0.0
        %4810 = vmatprep.mubr.f32.mxu0 0.0
        %v4811 = vand.u32 %v4606, 4294901760
        %4812 = vmatmul.mubr.f32.gmra.mrb[0].mxu0 %v4811
        %v4813 = vpop.f32.mrb[0].mxu0
        %v4814 = vadd.f32 %v4693, %v4813
        %v4815 = vpop.f32.mrb[0].mxu0
        %4816 = vmatprep.mubr.f32.mxu0 0.0
        %v4817 = vand.u32 %v4609, 4294901760
        %4818 = vmatmul.mubr.f32.gmra.mrb[0].mxu0 %v4817
        %v4819 = vpop.f32.mrb[0].mxu0
        %v4820 = vadd.f32 %v4703, %v4819
        %v4821 = vpop.f32.mrb[0].mxu0
        %4822 = vmatprep.mubr.f32.mxu0 0.0
        %v4823 = vand.u32 %v4612, 4294901760
        %4824 = vmatmul.mubr.f32.gmra.mrb[0].mxu0 %v4823
        %v4825 = vpop.f32.mrb[0].mxu0
        %v4826 = vadd.f32 %v4713, %v4825
        %v4827 = vpop.f32.mrb[0].mxu0
        %4828 = vmatprep.mubr.f32.mxu0 0.0
        %v4829 = vand.u32 %v4615, 4294901760
        %4830 = vmatmul.mubr.f32.gmra.mrb[0].mxu0 %v4829
        %v4831 = vpop.f32.mrb[0].mxu0
        %v4832 = vadd.f32 %v4723, %v4831
        %v4833 = vpop.f32.mrb[0].mxu0
        %4834 = vdwg.mxu0
        %4835 = vmatprep.subr.mxu0 0.0
        %v4836 = vand.u32 %v4594, 4294901760
        %v4837 = vsub.f32 %v4594, %v4836
        %4838 = vmatpush1.msra.mxu0 %v4837
        %4839 = vmatprep.subr.mxu0 0.0
        %v4840 = vand.u32 %v4595, 4294901760
        %v4841 = vsub.f32 %v4595, %v4840
        %4842 = vmatpush1.msra.mxu0 %v4841
        %4843 = vmatprep.subr.mxu0 0.0
        %v4844 = vand.u32 %v4596, 4294901760
        %v4845 = vsub.f32 %v4596, %v4844
        %4846 = vmatpush1.msra.mxu0 %v4845
        %4847 = vmatprep.subr.mxu0 0.0
        %v4848 = vand.u32 %v4597, 4294901760
        %v4849 = vsub.f32 %v4597, %v4848
        %4850 = vmatpush1.msra.mxu0 %v4849
        %4851 = vmatprep.subr.mxu0 0.0
        %4852 = vmatpush1.msra.mxu0 0.0
        %4853 = vmatprep.subr.mxu0 0.0
        %4854 = vmatpush1.msra.mxu0 0.0
        %4855 = vmatprep.subr.mxu0 0.0
        %4856 = vmatpush1.msra.mxu0 0.0
        %4857 = vmatprep.subr.mxu0 0.0
        %4858 = vmatpush1.msra.mxu0 0.0
        %4859 = vmatprep.subr.mxu0 0.0
        %4860 = vmatpush1.msra.mxu0 0.0
        %4861 = vmatprep.subr.mxu0 0.0
        %4862 = vmatpush1.msra.mxu0 0.0
        %4863 = vmatprep.subr.mxu0 0.0
        %4864 = vmatpush1.msra.mxu0 0.0
        %4865 = vmatprep.subr.mxu0 0.0
        %4866 = vmatpush1.msra.mxu0 0.0
        %4867 = vmatprep.subr.mxu0 0.0
        %4868 = vmatpush1.msra.mxu0 0.0
        %4869 = vmatprep.subr.mxu0 0.0
        %4870 = vmatpush1.msra.mxu0 0.0
        %4871 = vmatprep.subr.mxu0 0.0
        %4872 = vmatpush1.msra.mxu0 0.0
        %4873 = vmatprep.subr.mxu0 0.0
        %4874 = vmatpush1.msra.mxu0 0.0
        %4875 = vmatprep.subr.mxu0 0.0
        %4876 = vmatpush1.msra.mxu0 0.0
        %4877 = vmatprep.subr.mxu0 0.0
        %4878 = vmatpush1.msra.mxu0 0.0
        %4879 = vmatprep.subr.mxu0 0.0
        %4880 = vmatpush1.msra.mxu0 0.0
        %4881 = vmatprep.subr.mxu0 0.0
        %4882 = vmatpush1.msra.mxu0 0.0
        %4883 = vmatprep.subr.mxu0 0.0
        %4884 = vmatpush1.msra.mxu0 0.0
        %4885 = vmatprep.subr.mxu0 0.0
        %4886 = vmatpush1.msra.mxu0 0.0
        %4887 = vmatprep.subr.mxu0 0.0
        %4888 = vmatpush1.msra.mxu0 0.0
        %4889 = vmatprep.subr.mxu0 0.0
        %4890 = vmatpush1.msra.mxu0 0.0
        %4891 = vmatprep.subr.mxu0 0.0
        %4892 = vmatpush1.msra.mxu0 0.0
        %4893 = vmatprep.subr.mxu0 0.0
        %4894 = vmatpush1.msra.mxu0 0.0
        %4895 = vmatprep.subr.mxu0 0.0
        %4896 = vmatpush1.msra.mxu0 0.0
        %4897 = vmatprep.subr.mxu0 0.0
        %4898 = vmatpush1.msra.mxu0 0.0
        %4899 = vmatprep.subr.mxu0 0.0
        %4900 = vmatpush1.msra.mxu0 0.0
        %4901 = vmatprep.subr.mxu0 0.0
        %4902 = vmatpush1.msra.mxu0 0.0
        %4903 = vmatprep.subr.mxu0 0.0
        %4904 = vmatpush1.msra.mxu0 0.0
        %4905 = vmatprep.subr.mxu0 0.0
        %4906 = vmatpush1.msra.mxu0 0.0
        %4907 = vmatprep.mubr.f32.mxu0 0.0
        %v4908 = vand.u32 %v4606, 4294901760
        %v4909 = vsub.f32 %v4606, %v4908
        %4910 = vmatmul.mubr.f32.gmra.mrb[0].mxu0 %v4909
        %v4911 = vpop.f32.mrb[0].mxu0
        %v4912 = vadd.f32 %v4814, %v4911
        %v4913 = vpop.f32.mrb[0].mxu0
        %4914 = vmatprep.mubr.f32.mxu0 0.0
        %v4915 = vand.u32 %v4609, 4294901760
        %v4916 = vsub.f32 %v4609, %v4915
        %4917 = vmatmul.mubr.f32.gmra.mrb[0].mxu0 %v4916
        %v4918 = vpop.f32.mrb[0].mxu0
        %v4919 = vadd.f32 %v4820, %v4918
        %v4920 = vpop.f32.mrb[0].mxu0
        %4921 = vmatprep.mubr.f32.mxu0 0.0
        %v4922 = vand.u32 %v4612, 4294901760
        %v4923 = vsub.f32 %v4612, %v4922
        %4924 = vmatmul.mubr.f32.gmra.mrb[0].mxu0 %v4923
        %v4925 = vpop.f32.mrb[0].mxu0
        %v4926 = vadd.f32 %v4826, %v4925
        %v4927 = vpop.f32.mrb[0].mxu0
        %4928 = vmatprep.mubr.f32.mxu0 0.0
        %v4929 = vand.u32 %v4615, 4294901760
        %v4930 = vsub.f32 %v4615, %v4929
        %4931 = vmatmul.mubr.f32.gmra.mrb[0].mxu0 %v4930
        %v4932 = vpop.f32.mrb[0].mxu0
        %v4933 = vadd.f32 %v4832, %v4932
        %v4934 = vpop.f32.mrb[0].mxu0
        %4935 = vdwg.mxu0
        %4936 = vmatprep.subr.mxu0 0.0
        %v4937 = vand.u32 %v4594, 4294901760
        %4938 = vmatpush1.msra.mxu0 %v4937
        %4939 = vmatprep.subr.mxu0 0.0
        %v4940 = vand.u32 %v4595, 4294901760
        %4941 = vmatpush1.msra.mxu0 %v4940
        %4942 = vmatprep.subr.mxu0 0.0
        %v4943 = vand.u32 %v4596, 4294901760
        %4944 = vmatpush1.msra.mxu0 %v4943
        %4945 = vmatprep.subr.mxu0 0.0
        %v4946 = vand.u32 %v4597, 4294901760
        %4947 = vmatpush1.msra.mxu0 %v4946
        %4948 = vmatprep.subr.mxu0 0.0
        %4949 = vmatpush1.msra.mxu0 0.0
        %4950 = vmatprep.subr.mxu0 0.0
        %4951 = vmatpush1.msra.mxu0 0.0
        %4952 = vmatprep.subr.mxu0 0.0
        %4953 = vmatpush1.msra.mxu0 0.0
        %4954 = vmatprep.subr.mxu0 0.0
        %4955 = vmatpush1.msra.mxu0 0.0
        %4956 = vmatprep.subr.mxu0 0.0
        %4957 = vmatpush1.msra.mxu0 0.0
        %4958 = vmatprep.subr.mxu0 0.0
        %4959 = vmatpush1.msra.mxu0 0.0
        %4960 = vmatprep.subr.mxu0 0.0
        %4961 = vmatpush1.msra.mxu0 0.0
        %4962 = vmatprep.subr.mxu0 0.0
        %4963 = vmatpush1.msra.mxu0 0.0
        %4964 = vmatprep.subr.mxu0 0.0
        %4965 = vmatpush1.msra.mxu0 0.0
        %4966 = vmatprep.subr.mxu0 0.0
        %4967 = vmatpush1.msra.mxu0 0.0
        %4968 = vmatprep.subr.mxu0 0.0
        %4969 = vmatpush1.msra.mxu0 0.0
        %4970 = vmatprep.subr.mxu0 0.0
        %4971 = vmatpush1.msra.mxu0 0.0
        %4972 = vmatprep.subr.mxu0 0.0
        %4973 = vmatpush1.msra.mxu0 0.0
        %4974 = vmatprep.subr.mxu0 0.0
        %4975 = vmatpush1.msra.mxu0 0.0
        %4976 = vmatprep.subr.mxu0 0.0
        %4977 = vmatpush1.msra.mxu0 0.0
        %4978 = vmatprep.subr.mxu0 0.0
        %4979 = vmatpush1.msra.mxu0 0.0
        %4980 = vmatprep.subr.mxu0 0.0
        %4981 = vmatpush1.msra.mxu0 0.0
        %4982 = vmatprep.subr.mxu0 0.0
        %4983 = vmatpush1.msra.mxu0 0.0
        %4984 = vmatprep.subr.mxu0 0.0
        %4985 = vmatpush1.msra.mxu0 0.0
        %4986 = vmatprep.subr.mxu0 0.0
        %4987 = vmatpush1.msra.mxu0 0.0
        %4988 = vmatprep.subr.mxu0 0.0
        %4989 = vmatpush1.msra.mxu0 0.0
        %4990 = vmatprep.subr.mxu0 0.0
        %4991 = vmatpush1.msra.mxu0 0.0
        %4992 = vmatprep.subr.mxu0 0.0
        %4993 = vmatpush1.msra.mxu0 0.0
        %4994 = vmatprep.subr.mxu0 0.0
        %4995 = vmatpush1.msra.mxu0 0.0
        %4996 = vmatprep.subr.mxu0 0.0
        %4997 = vmatpush1.msra.mxu0 0.0
        %4998 = vmatprep.subr.mxu0 0.0
        %4999 = vmatpush1.msra.mxu0 0.0
        %5000 = vmatprep.subr.mxu0 0.0
        %5001 = vmatpush1.msra.mxu0 0.0
        %5002 = vmatprep.subr.mxu0 0.0
        %5003 = vmatpush1.msra.mxu0 0.0
        %5004 = vmatprep.mubr.f32.mxu0 0.0
        %v5005 = vand.u32 %v4606, 4294901760
        %v5006 = vsub.f32 %v4606, %v5005
        %v5007 = vand.u32 %v5006, 4294901760
        %5008 = vmatmul.mubr.f32.gmra.mrb[0].mxu0 %v5007
        %v5009 = vpop.f32.mrb[0].mxu0
        %v5010 = vadd.f32 %v4912, %v5009
        %v5011 = vpop.f32.mrb[0].mxu0
        %5012 = vmatprep.mubr.f32.mxu0 0.0
        %v5013 = vand.u32 %v4609, 4294901760
        %v5014 = vsub.f32 %v4609, %v5013
        %v5015 = vand.u32 %v5014, 4294901760
        %5016 = vmatmul.mubr.f32.gmra.mrb[0].mxu0 %v5015
        %v5017 = vpop.f32.mrb[0].mxu0
        %v5018 = vadd.f32 %v4919, %v5017
        %v5019 = vpop.f32.mrb[0].mxu0
        %5020 = vmatprep.mubr.f32.mxu0 0.0
        %v5021 = vand.u32 %v4612, 4294901760
        %v5022 = vsub.f32 %v4612, %v5021
        %v5023 = vand.u32 %v5022, 4294901760
        %5024 = vmatmul.mubr.f32.gmra.mrb[0].mxu0 %v5023
        %v5025 = vpop.f32.mrb[0].mxu0
        %v5026 = vadd.f32 %v4926, %v5025
        %v5027 = vpop.f32.mrb[0].mxu0
        %5028 = vmatprep.mubr.f32.mxu0 0.0
        %v5029 = vand.u32 %v4615, 4294901760
        %v5030 = vsub.f32 %v4615, %v5029
        %v5031 = vand.u32 %v5030, 4294901760
        %5032 = vmatmul.mubr.f32.gmra.mrb[0].mxu0 %v5031
        %v5033 = vpop.f32.mrb[0].mxu0
        %v5034 = vadd.f32 %v4933, %v5033
        %v5035 = vpop.f32.mrb[0].mxu0
        %5036 = vdwg.mxu0
        %5037 = vmatprep.subr.mxu0 0.0
        %v5038 = vand.u32 %v4594, 4294901760
        %v5039 = vsub.f32 %v4594, %v5038
        %v5040 = vand.u32 %v5039, 4294901760
        %5041 = vmatpush1.msra.mxu0 %v5040
        %5042 = vmatprep.subr.mxu0 0.0
        %v5043 = vand.u32 %v4595, 4294901760
        %v5044 = vsub.f32 %v4595, %v5043
        %v5045 = vand.u32 %v5044, 4294901760
        %5046 = vmatpush1.msra.mxu0 %v5045
        %5047 = vmatprep.subr.mxu0 0.0
        %v5048 = vand.u32 %v4596, 4294901760
        %v5049 = vsub.f32 %v4596, %v5048
        %v5050 = vand.u32 %v5049, 4294901760
        %5051 = vmatpush1.msra.mxu0 %v5050
        %5052 = vmatprep.subr.mxu0 0.0
        %v5053 = vand.u32 %v4597, 4294901760
        %v5054 = vsub.f32 %v4597, %v5053
        %v5055 = vand.u32 %v5054, 4294901760
        %5056 = vmatpush1.msra.mxu0 %v5055
        %5057 = vmatprep.subr.mxu0 0.0
        %5058 = vmatpush1.msra.mxu0 0.0
        %5059 = vmatprep.subr.mxu0 0.0
        %5060 = vmatpush1.msra.mxu0 0.0
        %5061 = vmatprep.subr.mxu0 0.0
        %5062 = vmatpush1.msra.mxu0 0.0
        %5063 = vmatprep.subr.mxu0 0.0
        %5064 = vmatpush1.msra.mxu0 0.0
        %5065 = vmatprep.subr.mxu0 0.0
        %5066 = vmatpush1.msra.mxu0 0.0
        %5067 = vmatprep.subr.mxu0 0.0
        %5068 = vmatpush1.msra.mxu0 0.0
        %5069 = vmatprep.subr.mxu0 0.0
        %5070 = vmatpush1.msra.mxu0 0.0
        %5071 = vmatprep.subr.mxu0 0.0
        %5072 = vmatpush1.msra.mxu0 0.0
        %5073 = vmatprep.subr.mxu0 0.0
        %5074 = vmatpush1.msra.mxu0 0.0
        %5075 = vmatprep.subr.mxu0 0.0
        %5076 = vmatpush1.msra.mxu0 0.0
        %5077 = vmatprep.subr.mxu0 0.0
        %5078 = vmatpush1.msra.mxu0 0.0
        %5079 = vmatprep.subr.mxu0 0.0
        %5080 = vmatpush1.msra.mxu0 0.0
        %5081 = vmatprep.subr.mxu0 0.0
        %5082 = vmatpush1.msra.mxu0 0.0
        %5083 = vmatprep.subr.mxu0 0.0
        %5084 = vmatpush1.msra.mxu0 0.0
        %5085 = vmatprep.subr.mxu0 0.0
        %5086 = vmatpush1.msra.mxu0 0.0
        %5087 = vmatprep.subr.mxu0 0.0
        %5088 = vmatpush1.msra.mxu0 0.0
        %5089 = vmatprep.subr.mxu0 0.0
        %5090 = vmatpush1.msra.mxu0 0.0
        %5091 = vmatprep.subr.mxu0 0.0
        %5092 = vmatpush1.msra.mxu0 0.0
        %5093 = vmatprep.subr.mxu0 0.0
        %5094 = vmatpush1.msra.mxu0 0.0
        %5095 = vmatprep.subr.mxu0 0.0
        %5096 = vmatpush1.msra.mxu0 0.0
        %5097 = vmatprep.subr.mxu0 0.0
        %5098 = vmatpush1.msra.mxu0 0.0
        %5099 = vmatprep.subr.mxu0 0.0
        %5100 = vmatpush1.msra.mxu0 0.0
        %5101 = vmatprep.subr.mxu0 0.0
        %5102 = vmatpush1.msra.mxu0 0.0
        %5103 = vmatprep.subr.mxu0 0.0
        %5104 = vmatpush1.msra.mxu0 0.0
        %5105 = vmatprep.subr.mxu0 0.0
        %5106 = vmatpush1.msra.mxu0 0.0
        %5107 = vmatprep.subr.mxu0 0.0
        %5108 = vmatpush1.msra.mxu0 0.0
        %5109 = vmatprep.subr.mxu0 0.0
        %5110 = vmatpush1.msra.mxu0 0.0
        %5111 = vmatprep.subr.mxu0 0.0
        %5112 = vmatpush1.msra.mxu0 0.0
        %5113 = vmatprep.mubr.f32.mxu0 0.0
        %v5114 = vand.u32 %v4606, 4294901760
        %5115 = vmatmul.mubr.f32.gmra.mrb[0].mxu0 %v5114
        %v5116 = vpop.f32.mrb[0].mxu0
        %v5117 = vadd.f32 %v5010, %v5116
        %v5118 = vpop.f32.mrb[0].mxu0
        %5119 = vmatprep.mubr.f32.mxu0 0.0
        %v5120 = vand.u32 %v4609, 4294901760
        %5121 = vmatmul.mubr.f32.gmra.mrb[0].mxu0 %v5120
        %v5122 = vpop.f32.mrb[0].mxu0
        %v5123 = vadd.f32 %v5018, %v5122
        %v5124 = vpop.f32.mrb[0].mxu0
        %5125 = vmatprep.mubr.f32.mxu0 0.0
        %v5126 = vand.u32 %v4612, 4294901760
        %5127 = vmatmul.mubr.f32.gmra.mrb[0].mxu0 %v5126
        %v5128 = vpop.f32.mrb[0].mxu0
        %v5129 = vadd.f32 %v5026, %v5128
        %v5130 = vpop.f32.mrb[0].mxu0
        %5131 = vmatprep.mubr.f32.mxu0 0.0
        %v5132 = vand.u32 %v4615, 4294901760
        %5133 = vmatmul.mubr.f32.gmra.mrb[0].mxu0 %v5132
        %v5134 = vpop.f32.mrb[0].mxu0
        %v5135 = vadd.f32 %v5034, %v5134
        %v5136 = vpop.f32.mrb[0].mxu0
        %5137 = vdwg.mxu0
        %5138 = vmatprep.subr.mxu0 0.0
        %v5139 = vand.u32 %v4594, 4294901760
        %5140 = vmatpush1.msra.mxu0 %v5139
        %5141 = vmatprep.subr.mxu0 0.0
        %v5142 = vand.u32 %v4595, 4294901760
        %5143 = vmatpush1.msra.mxu0 %v5142
        %5144 = vmatprep.subr.mxu0 0.0
        %v5145 = vand.u32 %v4596, 4294901760
        %5146 = vmatpush1.msra.mxu0 %v5145
        %5147 = vmatprep.subr.mxu0 0.0
        %v5148 = vand.u32 %v4597, 4294901760
        %5149 = vmatpush1.msra.mxu0 %v5148
        %5150 = vmatprep.subr.mxu0 0.0
        %5151 = vmatpush1.msra.mxu0 0.0
        %5152 = vmatprep.subr.mxu0 0.0
        %5153 = vmatpush1.msra.mxu0 0.0
        %5154 = vmatprep.subr.mxu0 0.0
        %5155 = vmatpush1.msra.mxu0 0.0
        %5156 = vmatprep.subr.mxu0 0.0
        %5157 = vmatpush1.msra.mxu0 0.0
        %5158 = vmatprep.subr.mxu0 0.0
        %5159 = vmatpush1.msra.mxu0 0.0
        %5160 = vmatprep.subr.mxu0 0.0
        %5161 = vmatpush1.msra.mxu0 0.0
        %5162 = vmatprep.subr.mxu0 0.0
        %5163 = vmatpush1.msra.mxu0 0.0
        %5164 = vmatprep.subr.mxu0 0.0
        %5165 = vmatpush1.msra.mxu0 0.0
        %5166 = vmatprep.subr.mxu0 0.0
        %5167 = vmatpush1.msra.mxu0 0.0
        %5168 = vmatprep.subr.mxu0 0.0
        %5169 = vmatpush1.msra.mxu0 0.0
        %5170 = vmatprep.subr.mxu0 0.0
        %5171 = vmatpush1.msra.mxu0 0.0
        %5172 = vmatprep.subr.mxu0 0.0
        %5173 = vmatpush1.msra.mxu0 0.0
        %5174 = vmatprep.subr.mxu0 0.0
        %5175 = vmatpush1.msra.mxu0 0.0
        %5176 = vmatprep.subr.mxu0 0.0
        %5177 = vmatpush1.msra.mxu0 0.0
        %5178 = vmatprep.subr.mxu0 0.0
        %5179 = vmatpush1.msra.mxu0 0.0
        %5180 = vmatprep.subr.mxu0 0.0
        %5181 = vmatpush1.msra.mxu0 0.0
        %5182 = vmatprep.subr.mxu0 0.0
        %5183 = vmatpush1.msra.mxu0 0.0
        %5184 = vmatprep.subr.mxu0 0.0
        %5185 = vmatpush1.msra.mxu0 0.0
        %5186 = vmatprep.subr.mxu0 0.0
        %5187 = vmatpush1.msra.mxu0 0.0
        %5188 = vmatprep.subr.mxu0 0.0
        %5189 = vmatpush1.msra.mxu0 0.0
        %5190 = vmatprep.subr.mxu0 0.0
        %5191 = vmatpush1.msra.mxu0 0.0
        %5192 = vmatprep.subr.mxu0 0.0
        %5193 = vmatpush1.msra.mxu0 0.0
        %5194 = vmatprep.subr.mxu0 0.0
        %5195 = vmatpush1.msra.mxu0 0.0
        %5196 = vmatprep.subr.mxu0 0.0
        %5197 = vmatpush1.msra.mxu0 0.0
        %5198 = vmatprep.subr.mxu0 0.0
        %5199 = vmatpush1.msra.mxu0 0.0
        %5200 = vmatprep.subr.mxu0 0.0
        %5201 = vmatpush1.msra.mxu0 0.0
        %5202 = vmatprep.subr.mxu0 0.0
        %5203 = vmatpush1.msra.mxu0 0.0
        %5204 = vmatprep.subr.mxu0 0.0
        %5205 = vmatpush1.msra.mxu0 0.0
        %5206 = vmatprep.mubr.f32.mxu0 0.0
        %v5207 = vand.u32 %v4606, 4294901760
        %5208 = vmatmul.mubr.f32.gmra.mrb[0].mxu0 %v5207
        %v5209 = vpop.f32.mrb[0].mxu0
        %v5210 = vadd.f32 %v5117, %v5209
        %v5211 = vpop.f32.mrb[0].mxu0
        %5212 = vmatprep.mubr.f32.mxu0 0.0
        %v5213 = vand.u32 %v4609, 4294901760
        %5214 = vmatmul.mubr.f32.gmra.mrb[0].mxu0 %v5213
        %v5215 = vpop.f32.mrb[0].mxu0
        %v5216 = vadd.f32 %v5123, %v5215
        %v5217 = vpop.f32.mrb[0].mxu0
        %5218 = vmatprep.mubr.f32.mxu0 0.0
        %v5219 = vand.u32 %v4612, 4294901760
        %5220 = vmatmul.mubr.f32.gmra.mrb[0].mxu0 %v5219
        %v5221 = vpop.f32.mrb[0].mxu0
        %v5222 = vadd.f32 %v5129, %v5221
        %v5223 = vpop.f32.mrb[0].mxu0
        %5224 = vmatprep.mubr.f32.mxu0 0.0
        %v5225 = vand.u32 %v4615, 4294901760
        %5226 = vmatmul.mubr.f32.gmra.mrb[0].mxu0 %v5225
        %v5227 = vpop.f32.mrb[0].mxu0
        %v5228 = vadd.f32 %v5135, %v5227
        %v5229 = vpop.f32.mrb[0].mxu0
        %5230 = vdwg.mxu0
        %v5231 = vsel %vm4582, %v5210, 0.0
        %v5232 = vsel %vm4583, %v5216, 0.0
        %v5233 = vsel %vm4584, %v5222, 0.0
        %v5234 = vsel %vm4585, %v5228, 0.0
        %5235 = vst.msk [vmem:[%s446] sm:$0xff] %vm3927, %v5231
        %5236 = vst.msk [vmem:[%s446 + $0x8] sm:$0xff] %vm3927, %v5232
        %5237 = vst.msk [vmem:[%s446 + $0x10] sm:$0xff] %vm3927, %v5233
        %5238 = vst.msk [vmem:[%s446 + $0x18] sm:$0xff] %vm3927, %v5234
        %s5239 = sand.u32 %s255, 1
        %s5240 = scalar_lea.sflag [#allocation4], %s5239
        %s5241 = sand.u32 %s255, 1
        %s5242 = smul.addr %s5241, 32
        %s5243 = scalar_lea.vmem [#allocation8], %s5242
        %s5244 = sand.u32 %s283, 1
        %s5245 = scalar_lea.sflag [#allocation10], %s5244
        %s5246 = sand.u32 %s283, 1
        %s5247 = smul.addr %s5246, 32
        %s5248 = scalar_lea.vmem [#allocation9], %s5247
        // Predicated region
        $region69: #{tpu_custom_call.1} parent=55 // pred_check
          %p5249 = pneg %p265
        $region70: #{tpu_custom_call.1} parent=55 // pred_check_branch
          %5251 = sbr.rel (%p5249) target = $region72
        $region71: #{tpu_custom_call.1} parent=55 // pred_region
          %s5252 = smul.u32 4, %s36
          %s5254 = ssub.s32 512, 512
          %5255 = vsyncadd %s5240, %s5254
          %s5256 = smul.addr %s37, 4
          %s5257 = sadd.s32 %s5252, %s5256
          %s5258 = smul.addr %s5257, 128
          %s5259 = scalar_lea.hbm %s9, %s5258
          %s5260 = sshll.u32 %s5243, 4
          %s5261 = int_to_ptr.vmem [resolvable:$true] %s5260
          %5266 = dma.vmem_to_hbm [thread:$0]  %s5261, 512, %s5259, %s5240, 128, 128, 8
        $region72: #{tpu_custom_call.1} parent=55 // pred_fallthru
          _
        // Predicated region
        $region73: #{tpu_custom_call.1} parent=55 // pred_check
          %p5267 = pneg %p293
        $region74: #{tpu_custom_call.1} parent=55 // pred_check_branch
          %5269 = sbr.rel (%p5267) target = $region76
        $region75: #{tpu_custom_call.1} parent=55 // pred_region
          %s5270 = smul.u32 4, %s36
          %s5272 = ssub.s32 512, 512
          %5273 = vsyncadd %s5245, %s5272
          %s5274 = smul.addr %s37, 4
          %s5275 = sadd.s32 %s5270, %s5274
          %s5276 = smul.addr %s5275, 128
          %s5277 = scalar_lea.hbm %s10, %s5276
          %s5278 = sshll.u32 %s5248, 4
          %s5279 = int_to_ptr.vmem [resolvable:$true] %s5278
          %5284 = dma.vmem_to_hbm [thread:$0]  %s5279, 512, %s5277, %s5245, 128, 128, 8
        $region76: #{tpu_custom_call.1} parent=55 // pred_fallthru
          _
      $region56: #{tpu_custom_call.1} parent=5 // pred_fallthru
        _
      %p5285 = scmp.le.s32.totalorder 2, %s27
      // Predicated region
      $region77: #{tpu_custom_call.1} parent=5 // pred_check
        %p5286 = pneg %p5285
      $region78: #{tpu_custom_call.1} parent=5 // pred_check_branch
        %5288 = sbr.rel (%p5286) target = $region80
      $region79: #{tpu_custom_call.1} parent=5 // pred_region
        %s5289 = ssub.s32 %s27, 2
        // Predicated region
        $region81: #{tpu_custom_call.1} parent=79 // pred_check
          %p5290 = pneg %p271
        $region82: #{tpu_custom_call.1} parent=79 // pred_check_branch
          %5292 = sbr.rel (%p5290) target = $region84
        $region83: #{tpu_custom_call.1} parent=79 // pred_region
          %s5293 = sand.u32 %s256, 1
          %s5294 = scalar_lea.sflag [#allocation4], %s5293
          %s5295 = sand.u32 %s256, 1
          %s5296 = smul.addr %s5295, 32
          %s5297 = scalar_lea.vmem [#allocation8], %s5296
          %5298 = dma.done %s5294, 512
        $region84: #{tpu_custom_call.1} parent=79 // pred_fallthru
          _
        // Predicated region
        $region85: #{tpu_custom_call.1} parent=79 // pred_check
          %p5299 = pneg %p299
        $region86: #{tpu_custom_call.1} parent=79 // pred_check_branch
          %5301 = sbr.rel (%p5299) target = $region88
        $region87: #{tpu_custom_call.1} parent=79 // pred_region
          %s5302 = sand.u32 %s284, 1
          %s5303 = scalar_lea.sflag [#allocation10], %s5302
          %s5304 = sand.u32 %s284, 1
          %s5305 = smul.addr %s5304, 32
          %s5306 = scalar_lea.vmem [#allocation9], %s5305
          %5307 = dma.done %s5303, 512
        $region88: #{tpu_custom_call.1} parent=79 // pred_fallthru
          _
      $region80: #{tpu_custom_call.1} parent=5 // pred_fallthru
        _
    $region6: #{tpu_custom_call.1} parent=1 // loop_footer
      %s31 = sadd.s32 1, %s27
    $region7: #{tpu_custom_call.1} parent=1 // loop_footer_branch
      %26 = sbr.rel target = $region3
    $region8: #{tpu_custom_call.1} parent=1 // loop_exit
      _
    %5308 = vsyncpa [#allocation3], 1
    %s5309 = scalar_lea.sflag [#allocation3], 1
    %5310 = vsyncpa %s5309, 1
    %5311 = vsyncpa [#allocation6], 1
    %5312 = vsyncpa [#allocation4], 1
    %s5313 = scalar_lea.sflag [#allocation4], 1
    %5314 = vsyncpa %s5313, 1
    %5315 = vsyncpa [#allocation10], 1
    %s5316 = scalar_lea.sflag [#allocation10], 1
    %5317 = vsyncpa %s5316, 1

</llo_original>
